<compile_context>
chip_gen: v6e
topology: v6e:2x2x1
jax: 0.10.0
libtpu: 0.0.40
codegen_flags: <defaults>
</compile_context>

<pallas_src>
import jax
import jax.numpy as jnp
from jax.experimental import pallas as pl
from jax.experimental.pallas import tpu as pltpu


def _round_up(n: int, m: int) -> int:
    return (n + m - 1) // m * m


def _make_rnn_fc_kernel(num_layers: int, seq_len: int, tb: int):
    """Multi-layer tanh-RNN (hoisted input projection) followed by a Linear.

    Per grid step the kernel sees one batch tile laid out as a flat
    (T*tb, D/H) slab, rows ordered time-major (row = t*tb + b).
    """
    unroll = True if seq_len <= 16 else 4
    interleave = (tb % 16 == 0) and (tb >= 16)   # two independent chains
    tb2 = tb // 2

    def kernel(*refs):
        # refs: [x, (wih, whh, b) * L, wfc, bfc, out, xw_scratch, buf_scratch]
        x_ref = refs[0]                                  # (T*tb, D_pad)  bf16
        layer_refs = refs[1 : 1 + 3 * num_layers]
        wfc_ref = refs[1 + 3 * num_layers]               # (H_pad, H_pad) bf16
        bfc_ref = refs[2 + 3 * num_layers]               # (1, H_pad)     f32
        out_ref = refs[3 + 3 * num_layers]               # (T*tb, H_pad)  f32
        xw_ref = refs[4 + 3 * num_layers]                # (T*tb, H_pad)  f32
        buf_ref = refs[5 + 3 * num_layers]               # (T*tb, H_pad)  bf16

        h_pad = out_ref.shape[-1]

        for layer in range(num_layers):
            wih_ref = layer_refs[3 * layer + 0]          # (D_l, H_pad) bf16
            whh_ref = layer_refs[3 * layer + 1]          # (H_pad, H_pad) bf16
            b_ref = layer_refs[3 * layer + 2]            # (1, H_pad) f32 = b_ih + b_hh

            cur = x_ref[...] if layer == 0 else buf_ref[...]      # bf16 LHS

            # Hoisted input projection + folded bias: ONE big MXU matmul / layer.
            xw_ref[...] = (
                jnp.dot(cur, wih_ref[...], preferred_element_type=jnp.float32)
                + b_ref[...]
            )

            whh = whh_ref[...]   # bf16; hoist the weight load out of the time loop

            if interleave:
                # Two independent (tb/2, H) hidden-state chains per step:
                # matmul(A), matmul(B) on the MXU overlap tanh(B), tanh(A) on the EUP.
                def step(t, carry, whh=whh):
                    h_a, h_b = carry
                    row_a = pl.multiple_of(t * tb, 8)
                    row_b = pl.multiple_of(t * tb + tb2, 8)
                    pre_a = xw_ref[pl.ds(row_a, tb2), :] + jnp.dot(
                        h_a.astype(jnp.bfloat16), whh,
                        preferred_element_type=jnp.float32)
                    pre_b = xw_ref[pl.ds(row_b, tb2), :] + jnp.dot(
                        h_b.astype(jnp.bfloat16), whh,
                        preferred_element_type=jnp.float32)
                    h_a = jnp.tanh(pre_a)
                    h_b = jnp.tanh(pre_b)
                    buf_ref[pl.ds(row_a, tb2), :] = h_a.astype(jnp.bfloat16)
                    buf_ref[pl.ds(row_b, tb2), :] = h_b.astype(jnp.bfloat16)
                    return h_a, h_b

                h0 = jnp.zeros((tb2, h_pad), jnp.float32)   # h_0 = 0 (PyTorch default)
                jax.lax.fori_loop(0, seq_len, step, (h0, h0), unroll=unroll)
            else:
                def step(t, h, whh=whh):
                    row = pl.multiple_of(t * tb, 8)
                    pre = xw_ref[pl.ds(row, tb), :] + jnp.dot(
                        h.astype(jnp.bfloat16), whh,
                        preferred_element_type=jnp.float32)
                    h_new = jnp.tanh(pre)
                    buf_ref[pl.ds(row, tb), :] = h_new.astype(jnp.bfloat16)
                    return h_new

                jax.lax.fori_loop(
                    0, seq_len, step,
                    jnp.zeros((tb, h_pad), jnp.float32),
                    unroll=unroll,
                )

        # Final Linear on every timestep: single 2-D lane-dense matmul + store.
        out_ref[...] = (
            jnp.dot(buf_ref[...], wfc_ref[...], preferred_element_type=jnp.float32)
            + bfc_ref[...]
        )

    return kernel


def net_forward(x, params, *, batch_tile=None):
    """x: (B, T, input_dim) float32.  Returns (B, T, hidden_dim) float32."""
    B, T, D_in = x.shape
    layer_params = params["rnn"]          # list of (wih (D_l,H), whh (H,H), b (1,H))
    wfc, bfc = params["fc"]               # (H, H), (1, H)
    H = wfc.shape[0]
    num_layers = len(layer_params)

    # (8,128)-aligned padded sizes.
    H_pad = _round_up(H, 128)
    D_pad = _round_up(D_in, 128)

    if batch_tile is None:
        # Prefer >=2 grid tiles (v7x has 2 TensorCores sharing the "parallel"
        # axis); keep per-tile M <= 256 to amortize MXU/loop overhead on v6e/v7x.
        batch_tile = min(_round_up(max((B + 1) // 2, 16), 16), 256)
    # Validate / round up: the time-major row blocks assume tb % 8 == 0.
    tb = _round_up(max(int(batch_tile), 8), 8)
    B_pad = _round_up(B, tb)
    n_tiles = B_pad // tb

    # Zero padding is exactly neutral: padded D/H columns stay zero through the
    # tanh-RNN and the Linear; padded batch rows never mix with real rows.
    x_p = jnp.pad(x.astype(jnp.float32),
                  ((0, B_pad - B), (0, 0), (0, D_pad - D_in)))
    # Tile-contiguous, time-major-within-tile layout: row = t*tb + b.
    x_tiles = (
        x_p.reshape(n_tiles, tb, T, D_pad)
           .transpose(0, 2, 1, 3)
           .reshape(n_tiles, T * tb, D_pad)
           .astype(jnp.bfloat16)                     # bf16 LHS (f32 accumulation)
    )

    flat_inputs = [x_tiles]
    in_specs = [pl.BlockSpec((None, T * tb, D_pad), lambda i: (i, 0, 0))]

    weight_bytes = 0
    for layer, (wih, whh, b) in enumerate(layer_params):
        d_in_l = wih.shape[0]
        d_in_pad = D_pad if layer == 0 else H_pad
        wih_p = jnp.pad(wih, ((0, d_in_pad - d_in_l), (0, H_pad - H))).astype(jnp.bfloat16)
        whh_p = jnp.pad(whh, ((0, H_pad - H), (0, H_pad - H))).astype(jnp.bfloat16)
        b_p = jnp.pad(b, ((0, 0), (0, H_pad - H))).astype(jnp.float32)
        flat_inputs += [wih_p, whh_p, b_p]
        in_specs += [
            pl.BlockSpec((d_in_pad, H_pad), lambda i: (0, 0)),   # weights stay resident
            pl.BlockSpec((H_pad, H_pad), lambda i: (0, 0)),
            pl.BlockSpec((1, H_pad), lambda i: (0, 0)),
        ]
        weight_bytes += d_in_pad * H_pad * 2 + H_pad * H_pad * 2 + H_pad * 4

    wfc_p = jnp.pad(wfc, ((0, H_pad - H), (0, H_pad - H))).astype(jnp.bfloat16)
    bfc_p = jnp.pad(bfc, ((0, 0), (0, H_pad - H))).astype(jnp.float32)
    flat_inputs += [wfc_p, bfc_p]
    in_specs += [
        pl.BlockSpec((H_pad, H_pad), lambda i: (0, 0)),
        pl.BlockSpec((1, H_pad), lambda i: (0, 0)),
    ]
    weight_bytes += H_pad * H_pad * 2 + H_pad * 4

    # VMEM footprint: double-buffered I/O, 2x resident weights, two scratches.
    footprint = (
        2 * T * tb * D_pad * 2          # input blocks (bf16, double-buffered)
        + 2 * T * tb * H_pad * 4        # output blocks (f32, double-buffered)
        + 2 * weight_bytes              # weights are double-buffered by BlockSpec
        + T * tb * H_pad * 4            # xw scratch (f32)
        + T * tb * H_pad * 2            # buf scratch (bf16)
    )
    vmem_limit = int(min(max(footprint * 1.25, 32 * 2**20), 64 * 2**20))

    kernel = _make_rnn_fc_kernel(num_layers, T, tb)

    out_tiles = pl.pallas_call(
        kernel,
        out_shape=jax.ShapeDtypeStruct((n_tiles, T * tb, H_pad), jnp.float32),
        grid=(n_tiles,),                            # batch tiles: embarrassingly parallel
        in_specs=in_specs,
        out_specs=pl.BlockSpec((None, T * tb, H_pad), lambda i: (i, 0, 0)),
        scratch_shapes=[
            pltpu.VMEM((T * tb, H_pad), jnp.float32),    # hoisted input projection
            pltpu.VMEM((T * tb, H_pad), jnp.bfloat16),   # per-layer output buffer
        ],
        compiler_params=pltpu.CompilerParams(
            dimension_semantics=("parallel",),           # megacore sharding on v7x
            vmem_limit_bytes=vmem_limit,
        ),
    )(*flat_inputs)

    out = (
        out_tiles.reshape(n_tiles, T, tb, H_pad)
                 .transpose(0, 2, 1, 3)
                 .reshape(B_pad, T, H_pad)
    )
    return out[:B, :, :H]                                # drop padding


def net_forward_ref(x, params):
    """Pure-JAX f32 reference implementing nn.RNN(tanh, batch_first) + nn.Linear."""
    layer_params = params["rnn"]
    wfc, bfc = params["fc"]
    B, T, _ = x.shape
    H = wfc.shape[0]
    inp = x
    for (wih, whh, b) in layer_params:
        h = jnp.zeros((B, H), jnp.float32)
        outs = []
        for t in range(T):
            h = jnp.tanh(inp[:, t, :] @ wih + h @ whh + b)
            outs.append(h)
        inp = jnp.stack(outs, axis=1)
    return inp @ wfc + bfc


def init_params(key, input_dim, hidden_dim, num_layers):
    """Deterministic synthetic parameters matching nn.RNN / nn.Linear shapes.

    PyTorch stores weight_ih_l{k}: (H, D_k) and weight_hh_l{k}: (H, H); we keep
    the transposed (in, out) layout, and fold b_ih + b_hh into one bias.
    """
    params = {"rnn": [], "fc": None}
    for layer in range(num_layers):
        d_in = input_dim if layer == 0 else hidden_dim
        key, k1, k2, k3, k4 = jax.random.split(key, 5)
        wih = 0.1 * jax.random.normal(k1, (d_in, hidden_dim), jnp.float32)
        whh = 0.1 * jax.random.normal(k2, (hidden_dim, hidden_dim), jnp.float32)
        b_ih = 0.1 * jax.random.normal(k3, (hidden_dim,), jnp.float32)
        b_hh = 0.1 * jax.random.normal(k4, (hidden_dim,), jnp.float32)
        params["rnn"].append((wih, whh, (b_ih + b_hh).reshape(1, hidden_dim)))
    key, k5, k6 = jax.random.split(key, 3)
    wfc = 0.1 * jax.random.normal(k5, (hidden_dim, hidden_dim), jnp.float32)
    bfc = 0.1 * jax.random.normal(k6, (hidden_dim,), jnp.float32).reshape(1, hidden_dim)
    params["fc"] = (wfc, bfc)
    return params


if __name__ == "__main__":
    B, T, INPUT_DIM, HIDDEN_DIM, LAYERS = 2, 8, 16, 32, 2

    key = jax.random.PRNGKey(0)
    key, kx = jax.random.split(key)
    x = jax.random.normal(kx, (B, T, INPUT_DIM), jnp.float32)
    params = init_params(key, INPUT_DIM, HIDDEN_DIM, LAYERS)

    out = jax.block_until_ready(net_forward(x, params))
    ref = jax.block_until_ready(net_forward_ref(x, params))

    assert out.shape == (B, T, HIDDEN_DIM)
    # bf16 matmul operands with f32 accumulation: relaxed vs the f32 reference.
    assert jnp.allclose(out, ref, atol=2e-2, rtol=2e-2), float(
        jnp.max(jnp.abs(out - ref)))
    print("KERNEL_OK")
</pallas_src>

<mosaic_0001>
module attributes {stable_mosaic.version = 11 : i64} {
  func.func @kernel(%arg0: i32, %arg1: memref<1x128x128xbf16, #tpu.memory_space<vmem>>, %arg2: memref<128x128xbf16, #tpu.memory_space<vmem>>, %arg3: memref<128x128xbf16, #tpu.memory_space<vmem>>, %arg4: memref<1x128xf32, #tpu.memory_space<vmem>>, %arg5: memref<128x128xbf16, #tpu.memory_space<vmem>>, %arg6: memref<128x128xbf16, #tpu.memory_space<vmem>>, %arg7: memref<1x128xf32, #tpu.memory_space<vmem>>, %arg8: memref<128x128xbf16, #tpu.memory_space<vmem>>, %arg9: memref<1x128xf32, #tpu.memory_space<vmem>>, %arg10: memref<1x128x128xf32, #tpu.memory_space<vmem>>, %arg11: memref<128x128xf32, #tpu.memory_space<vmem>>, %arg12: memref<128x128xbf16, #tpu.memory_space<vmem>>) attributes {dimension_semantics = [#tpu.dimension_semantics<parallel>], iteration_bounds = array<i64: 1>, scalar_prefetch = 0 : i64, scratch_operands = 2 : i64, tpu.core_type = #tpu.core_type<tc>, window_params = [{transform_indices = @transform_0, window_bounds = array<i64: 1, 128, 128>}, {pipeline_mode = #tpu.pipeline_mode<synchronous>, transform_indices = @transform_1, window_bounds = array<i64: 128, 128>}, {pipeline_mode = #tpu.pipeline_mode<synchronous>, transform_indices = @transform_2, window_bounds = array<i64: 128, 128>}, {pipeline_mode = #tpu.pipeline_mode<synchronous>, transform_indices = @transform_3, window_bounds = array<i64: 1, 128>}, {pipeline_mode = #tpu.pipeline_mode<synchronous>, transform_indices = @transform_4, window_bounds = array<i64: 128, 128>}, {pipeline_mode = #tpu.pipeline_mode<synchronous>, transform_indices = @transform_5, window_bounds = array<i64: 128, 128>}, {pipeline_mode = #tpu.pipeline_mode<synchronous>, transform_indices = @transform_6, window_bounds = array<i64: 1, 128>}, {pipeline_mode = #tpu.pipeline_mode<synchronous>, transform_indices = @transform_7, window_bounds = array<i64: 128, 128>}, {pipeline_mode = #tpu.pipeline_mode<synchronous>, transform_indices = @transform_8, window_bounds = array<i64: 1, 128>}, {transform_indices = @transform_9, window_bounds = array<i64: 1, 128, 128>}]} {
    %c0 = arith.constant 0 : index
    %c0_0 = arith.constant 0 : index
    %c0_1 = arith.constant 0 : index
    %0 = vector.load %arg1[%c0, %c0_0, %c0_1] : memref<1x128x128xbf16, #tpu.memory_space<vmem>>, vector<1x128x128xbf16>
    %1 = vector.shape_cast %0 : vector<1x128x128xbf16> to vector<128x128xbf16>
    %c0_2 = arith.constant 0 : index
    %c0_3 = arith.constant 0 : index
    %2 = vector.load %arg2[%c0_2, %c0_3] : memref<128x128xbf16, #tpu.memory_space<vmem>>, vector<128x128xbf16>
    %cst = arith.constant dense<0.000000e+00> : vector<128x128xf32>
    %3 = tpu.matmul %1, %2, %cst {dimension_numbers = #tpu.dot_dimension_numbers<[1], [0], [0], [1], [0, 0, 1, 1], [], []>} : vector<128x128xbf16>, vector<128x128xbf16>, vector<128x128xf32> -> vector<128x128xf32>
    %c0_4 = arith.constant 0 : index
    %c0_5 = arith.constant 0 : index
    %4 = vector.load %arg4[%c0_4, %c0_5] : memref<1x128xf32, #tpu.memory_space<vmem>>, vector<1x128xf32>
    %5 = vector.broadcast %4 : vector<1x128xf32> to vector<128x128xf32>
    %6 = arith.addf %3, %5 : vector<128x128xf32>
    %c0_6 = arith.constant 0 : index
    %c0_7 = arith.constant 0 : index
    %7 = vector.load %arg11[%c0_6, %c0_7] : memref<128x128xf32, #tpu.memory_space<vmem>>, vector<128x128xf32>
    tpu.vector_store %arg11[%c0_6, %c0_7], %6 {strides = array<i32>} : memref<128x128xf32, #tpu.memory_space<vmem>>, vector<128x128xf32>,
    %c0_8 = arith.constant 0 : index
    %c0_9 = arith.constant 0 : index
    %8 = vector.load %arg3[%c0_8, %c0_9] : memref<128x128xbf16, #tpu.memory_space<vmem>>, vector<128x128xbf16>
    %cst_10 = arith.constant 0.000000e+00 : f32
    %9 = vector.broadcast %cst_10 : f32 to vector<8x128xf32>
    %c0_i32 = arith.constant 0 : i32
    %c16_i32 = arith.constant 16 : i32
    %10 = arith.muli %c0_i32, %c16_i32 : i32
    %11 = tpu.assume_multiple %10, 8 : i32
    %c16_i32_11 = arith.constant 16 : i32
    %12 = arith.muli %c0_i32, %c16_i32_11 : i32
    %c8_i32 = arith.constant 8 : i32
    %13 = arith.addi %12, %c8_i32 : i32
    %14 = tpu.assume_multiple %13, 8 : i32
    %15 = arith.index_cast %11 : i32 to index
    %c0_12 = arith.constant 0 : index
    %16 = vector.load %arg11[%15, %c0_12] : memref<128x128xf32, #tpu.memory_space<vmem>>, vector<8x128xf32>
    %17 = arith.truncf %9 : vector<8x128xf32> to vector<8x128xbf16>
    %cst_13 = arith.constant dense<0.000000e+00> : vector<8x128xf32>
    %18 = tpu.matmul %17, %8, %cst_13 {dimension_numbers = #tpu.dot_dimension_numbers<[1], [0], [0], [1], [0, 0, 1, 1], [], []>} : vector<8x128xbf16>, vector<128x128xbf16>, vector<8x128xf32> -> vector<8x128xf32>
    %19 = arith.addf %16, %18 : vector<8x128xf32>
    %20 = arith.index_cast %14 : i32 to index
    %c0_14 = arith.constant 0 : index
    %21 = vector.load %arg11[%20, %c0_14] : memref<128x128xf32, #tpu.memory_space<vmem>>, vector<8x128xf32>
    %22 = arith.truncf %9 : vector<8x128xf32> to vector<8x128xbf16>
    %cst_15 = arith.constant dense<0.000000e+00> : vector<8x128xf32>
    %23 = tpu.matmul %22, %8, %cst_15 {dimension_numbers = #tpu.dot_dimension_numbers<[1], [0], [0], [1], [0, 0, 1, 1], [], []>} : vector<8x128xbf16>, vector<128x128xbf16>, vector<8x128xf32> -> vector<8x128xf32>
    %24 = arith.addf %21, %23 : vector<8x128xf32>
    %25 = math.tanh %19 : vector<8x128xf32>
    %26 = math.tanh %24 : vector<8x128xf32>
    %27 = arith.truncf %25 : vector<8x128xf32> to vector<8x128xbf16>
    %28 = arith.index_cast %11 : i32 to index
    %c0_16 = arith.constant 0 : index
    %29 = vector.load %arg12[%28, %c0_16] : memref<128x128xbf16, #tpu.memory_space<vmem>>, vector<8x128xbf16>
    tpu.vector_store %arg12[%28, %c0_16], %27 {strides = array<i32>} : memref<128x128xbf16, #tpu.memory_space<vmem>>, vector<8x128xbf16>,
    %30 = arith.truncf %26 : vector<8x128xf32> to vector<8x128xbf16>
    %31 = arith.index_cast %14 : i32 to index
    %c0_17 = arith.constant 0 : index
    %32 = vector.load %arg12[%31, %c0_17] : memref<128x128xbf16, #tpu.memory_space<vmem>>, vector<8x128xbf16>
    tpu.vector_store %arg12[%31, %c0_17], %30 {strides = array<i32>} : memref<128x128xbf16, #tpu.memory_space<vmem>>, vector<8x128xbf16>,
    %c1_i32 = arith.constant 1 : i32
    %c16_i32_18 = arith.constant 16 : i32
    %33 = arith.muli %c1_i32, %c16_i32_18 : i32
    %34 = tpu.assume_multiple %33, 8 : i32
    %c16_i32_19 = arith.constant 16 : i32
    %35 = arith.muli %c1_i32, %c16_i32_19 : i32
    %c8_i32_20 = arith.constant 8 : i32
    %36 = arith.addi %35, %c8_i32_20 : i32
    %37 = tpu.assume_multiple %36, 8 : i32
    %38 = arith.index_cast %34 : i32 to index
    %c0_21 = arith.constant 0 : index
    %39 = vector.load %arg11[%38, %c0_21] : memref<128x128xf32, #tpu.memory_space<vmem>>, vector<8x128xf32>
    %40 = arith.truncf %25 : vector<8x128xf32> to vector<8x128xbf16>
    %cst_22 = arith.constant dense<0.000000e+00> : vector<8x128xf32>
    %41 = tpu.matmul %40, %8, %cst_22 {dimension_numbers = #tpu.dot_dimension_numbers<[1], [0], [0], [1], [0, 0, 1, 1], [], []>} : vector<8x128xbf16>, vector<128x128xbf16>, vector<8x128xf32> -> vector<8x128xf32>
    %42 = arith.addf %39, %41 : vector<8x128xf32>
    %43 = arith.index_cast %37 : i32 to index
    %c0_23 = arith.constant 0 : index
    %44 = vector.load %arg11[%43, %c0_23] : memref<128x128xf32, #tpu.memory_space<vmem>>, vector<8x128xf32>
    %45 = arith.truncf %26 : vector<8x128xf32> to vector<8x128xbf16>
    %cst_24 = arith.constant dense<0.000000e+00> : vector<8x128xf32>
    %46 = tpu.matmul %45, %8, %cst_24 {dimension_numbers = #tpu.dot_dimension_numbers<[1], [0], [0], [1], [0, 0, 1, 1], [], []>} : vector<8x128xbf16>, vector<128x128xbf16>, vector<8x128xf32> -> vector<8x128xf32>
    %47 = arith.addf %44, %46 : vector<8x128xf32>
    %48 = math.tanh %42 : vector<8x128xf32>
    %49 = math.tanh %47 : vector<8x128xf32>
    %50 = arith.truncf %48 : vector<8x128xf32> to vector<8x128xbf16>
    %51 = arith.index_cast %34 : i32 to index
    %c0_25 = arith.constant 0 : index
    %52 = vector.load %arg12[%51, %c0_25] : memref<128x128xbf16, #tpu.memory_space<vmem>>, vector<8x128xbf16>
    tpu.vector_store %arg12[%51, %c0_25], %50 {strides = array<i32>} : memref<128x128xbf16, #tpu.memory_space<vmem>>, vector<8x128xbf16>,
    %53 = arith.truncf %49 : vector<8x128xf32> to vector<8x128xbf16>
    %54 = arith.index_cast %37 : i32 to index
    %c0_26 = arith.constant 0 : index
    %55 = vector.load %arg12[%54, %c0_26] : memref<128x128xbf16, #tpu.memory_space<vmem>>, vector<8x128xbf16>
    tpu.vector_store %arg12[%54, %c0_26], %53 {strides = array<i32>} : memref<128x128xbf16, #tpu.memory_space<vmem>>, vector<8x128xbf16>,
    %c2_i32 = arith.constant 2 : i32
    %c16_i32_27 = arith.constant 16 : i32
    %56 = arith.muli %c2_i32, %c16_i32_27 : i32
    %57 = tpu.assume_multiple %56, 8 : i32
    %c16_i32_28 = arith.constant 16 : i32
    %58 = arith.muli %c2_i32, %c16_i32_28 : i32
    %c8_i32_29 = arith.constant 8 : i32
    %59 = arith.addi %58, %c8_i32_29 : i32
    %60 = tpu.assume_multiple %59, 8 : i32
    %61 = arith.index_cast %57 : i32 to index
    %c0_30 = arith.constant 0 : index
    %62 = vector.load %arg11[%61, %c0_30] : memref<128x128xf32, #tpu.memory_space<vmem>>, vector<8x128xf32>
    %63 = arith.truncf %48 : vector<8x128xf32> to vector<8x128xbf16>
    %cst_31 = arith.constant dense<0.000000e+00> : vector<8x128xf32>
    %64 = tpu.matmul %63, %8, %cst_31 {dimension_numbers = #tpu.dot_dimension_numbers<[1], [0], [0], [1], [0, 0, 1, 1], [], []>} : vector<8x128xbf16>, vector<128x128xbf16>, vector<8x128xf32> -> vector<8x128xf32>
    %65 = arith.addf %62, %64 : vector<8x128xf32>
    %66 = arith.index_cast %60 : i32 to index
    %c0_32 = arith.constant 0 : index
    %67 = vector.load %arg11[%66, %c0_32] : memref<128x128xf32, #tpu.memory_space<vmem>>, vector<8x128xf32>
    %68 = arith.truncf %49 : vector<8x128xf32> to vector<8x128xbf16>
    %cst_33 = arith.constant dense<0.000000e+00> : vector<8x128xf32>
    %69 = tpu.matmul %68, %8, %cst_33 {dimension_numbers = #tpu.dot_dimension_numbers<[1], [0], [0], [1], [0, 0, 1, 1], [], []>} : vector<8x128xbf16>, vector<128x128xbf16>, vector<8x128xf32> -> vector<8x128xf32>
    %70 = arith.addf %67, %69 : vector<8x128xf32>
    %71 = math.tanh %65 : vector<8x128xf32>
    %72 = math.tanh %70 : vector<8x128xf32>
    %73 = arith.truncf %71 : vector<8x128xf32> to vector<8x128xbf16>
    %74 = arith.index_cast %57 : i32 to index
    %c0_34 = arith.constant 0 : index
    %75 = vector.load %arg12[%74, %c0_34] : memref<128x128xbf16, #tpu.memory_space<vmem>>, vector<8x128xbf16>
    tpu.vector_store %arg12[%74, %c0_34], %73 {strides = array<i32>} : memref<128x128xbf16, #tpu.memory_space<vmem>>, vector<8x128xbf16>,
    %76 = arith.truncf %72 : vector<8x128xf32> to vector<8x128xbf16>
    %77 = arith.index_cast %60 : i32 to index
    %c0_35 = arith.constant 0 : index
    %78 = vector.load %arg12[%77, %c0_35] : memref<128x128xbf16, #tpu.memory_space<vmem>>, vector<8x128xbf16>
    tpu.vector_store %arg12[%77, %c0_35], %76 {strides = array<i32>} : memref<128x128xbf16, #tpu.memory_space<vmem>>, vector<8x128xbf16>,
    %c3_i32 = arith.constant 3 : i32
    %c16_i32_36 = arith.constant 16 : i32
    %79 = arith.muli %c3_i32, %c16_i32_36 : i32
    %80 = tpu.assume_multiple %79, 8 : i32
    %c16_i32_37 = arith.constant 16 : i32
    %81 = arith.muli %c3_i32, %c16_i32_37 : i32
    %c8_i32_38 = arith.constant 8 : i32
    %82 = arith.addi %81, %c8_i32_38 : i32
    %83 = tpu.assume_multiple %82, 8 : i32
    %84 = arith.index_cast %80 : i32 to index
    %c0_39 = arith.constant 0 : index
    %85 = vector.load %arg11[%84, %c0_39] : memref<128x128xf32, #tpu.memory_space<vmem>>, vector<8x128xf32>
    %86 = arith.truncf %71 : vector<8x128xf32> to vector<8x128xbf16>
    %cst_40 = arith.constant dense<0.000000e+00> : vector<8x128xf32>
    %87 = tpu.matmul %86, %8, %cst_40 {dimension_numbers = #tpu.dot_dimension_numbers<[1], [0], [0], [1], [0, 0, 1, 1], [], []>} : vector<8x128xbf16>, vector<128x128xbf16>, vector<8x128xf32> -> vector<8x128xf32>
    %88 = arith.addf %85, %87 : vector<8x128xf32>
    %89 = arith.index_cast %83 : i32 to index
    %c0_41 = arith.constant 0 : index
    %90 = vector.load %arg11[%89, %c0_41] : memref<128x128xf32, #tpu.memory_space<vmem>>, vector<8x128xf32>
    %91 = arith.truncf %72 : vector<8x128xf32> to vector<8x128xbf16>
    %cst_42 = arith.constant dense<0.000000e+00> : vector<8x128xf32>
    %92 = tpu.matmul %91, %8, %cst_42 {dimension_numbers = #tpu.dot_dimension_numbers<[1], [0], [0], [1], [0, 0, 1, 1], [], []>} : vector<8x128xbf16>, vector<128x128xbf16>, vector<8x128xf32> -> vector<8x128xf32>
    %93 = arith.addf %90, %92 : vector<8x128xf32>
    %94 = math.tanh %88 : vector<8x128xf32>
    %95 = math.tanh %93 : vector<8x128xf32>
    %96 = arith.truncf %94 : vector<8x128xf32> to vector<8x128xbf16>
    %97 = arith.index_cast %80 : i32 to index
    %c0_43 = arith.constant 0 : index
    %98 = vector.load %arg12[%97, %c0_43] : memref<128x128xbf16, #tpu.memory_space<vmem>>, vector<8x128xbf16>
    tpu.vector_store %arg12[%97, %c0_43], %96 {strides = array<i32>} : memref<128x128xbf16, #tpu.memory_space<vmem>>, vector<8x128xbf16>,
    %99 = arith.truncf %95 : vector<8x128xf32> to vector<8x128xbf16>
    %100 = arith.index_cast %83 : i32 to index
    %c0_44 = arith.constant 0 : index
    %101 = vector.load %arg12[%100, %c0_44] : memref<128x128xbf16, #tpu.memory_space<vmem>>, vector<8x128xbf16>
    tpu.vector_store %arg12[%100, %c0_44], %99 {strides = array<i32>} : memref<128x128xbf16, #tpu.memory_space<vmem>>, vector<8x128xbf16>,
    %c4_i32 = arith.constant 4 : i32
    %c16_i32_45 = arith.constant 16 : i32
    %102 = arith.muli %c4_i32, %c16_i32_45 : i32
    %103 = tpu.assume_multiple %102, 8 : i32
    %c16_i32_46 = arith.constant 16 : i32
    %104 = arith.muli %c4_i32, %c16_i32_46 : i32
    %c8_i32_47 = arith.constant 8 : i32
    %105 = arith.addi %104, %c8_i32_47 : i32
    %106 = tpu.assume_multiple %105, 8 : i32
    %107 = arith.index_cast %103 : i32 to index
    %c0_48 = arith.constant 0 : index
    %108 = vector.load %arg11[%107, %c0_48] : memref<128x128xf32, #tpu.memory_space<vmem>>, vector<8x128xf32>
    %109 = arith.truncf %94 : vector<8x128xf32> to vector<8x128xbf16>
    %cst_49 = arith.constant dense<0.000000e+00> : vector<8x128xf32>
    %110 = tpu.matmul %109, %8, %cst_49 {dimension_numbers = #tpu.dot_dimension_numbers<[1], [0], [0], [1], [0, 0, 1, 1], [], []>} : vector<8x128xbf16>, vector<128x128xbf16>, vector<8x128xf32> -> vector<8x128xf32>
    %111 = arith.addf %108, %110 : vector<8x128xf32>
    %112 = arith.index_cast %106 : i32 to index
    %c0_50 = arith.constant 0 : index
    %113 = vector.load %arg11[%112, %c0_50] : memref<128x128xf32, #tpu.memory_space<vmem>>, vector<8x128xf32>
    %114 = arith.truncf %95 : vector<8x128xf32> to vector<8x128xbf16>
    %cst_51 = arith.constant dense<0.000000e+00> : vector<8x128xf32>
    %115 = tpu.matmul %114, %8, %cst_51 {dimension_numbers = #tpu.dot_dimension_numbers<[1], [0], [0], [1], [0, 0, 1, 1], [], []>} : vector<8x128xbf16>, vector<128x128xbf16>, vector<8x128xf32> -> vector<8x128xf32>
    %116 = arith.addf %113, %115 : vector<8x128xf32>
    %117 = math.tanh %111 : vector<8x128xf32>
    %118 = math.tanh %116 : vector<8x128xf32>
    %119 = arith.truncf %117 : vector<8x128xf32> to vector<8x128xbf16>
    %120 = arith.index_cast %103 : i32 to index
    %c0_52 = arith.constant 0 : index
    %121 = vector.load %arg12[%120, %c0_52] : memref<128x128xbf16, #tpu.memory_space<vmem>>, vector<8x128xbf16>
    tpu.vector_store %arg12[%120, %c0_52], %119 {strides = array<i32>} : memref<128x128xbf16, #tpu.memory_space<vmem>>, vector<8x128xbf16>,
    %122 = arith.truncf %118 : vector<8x128xf32> to vector<8x128xbf16>
    %123 = arith.index_cast %106 : i32 to index
    %c0_53 = arith.constant 0 : index
    %124 = vector.load %arg12[%123, %c0_53] : memref<128x128xbf16, #tpu.memory_space<vmem>>, vector<8x128xbf16>
    tpu.vector_store %arg12[%123, %c0_53], %122 {strides = array<i32>} : memref<128x128xbf16, #tpu.memory_space<vmem>>, vector<8x128xbf16>,
    %c5_i32 = arith.constant 5 : i32
    %c16_i32_54 = arith.constant 16 : i32
    %125 = arith.muli %c5_i32, %c16_i32_54 : i32
    %126 = tpu.assume_multiple %125, 8 : i32
    %c16_i32_55 = arith.constant 16 : i32
    %127 = arith.muli %c5_i32, %c16_i32_55 : i32
    %c8_i32_56 = arith.constant 8 : i32
    %128 = arith.addi %127, %c8_i32_56 : i32
    %129 = tpu.assume_multiple %128, 8 : i32
    %130 = arith.index_cast %126 : i32 to index
    %c0_57 = arith.constant 0 : index
    %131 = vector.load %arg11[%130, %c0_57] : memref<128x128xf32, #tpu.memory_space<vmem>>, vector<8x128xf32>
    %132 = arith.truncf %117 : vector<8x128xf32> to vector<8x128xbf16>
    %cst_58 = arith.constant dense<0.000000e+00> : vector<8x128xf32>
    %133 = tpu.matmul %132, %8, %cst_58 {dimension_numbers = #tpu.dot_dimension_numbers<[1], [0], [0], [1], [0, 0, 1, 1], [], []>} : vector<8x128xbf16>, vector<128x128xbf16>, vector<8x128xf32> -> vector<8x128xf32>
    %134 = arith.addf %131, %133 : vector<8x128xf32>
    %135 = arith.index_cast %129 : i32 to index
    %c0_59 = arith.constant 0 : index
    %136 = vector.load %arg11[%135, %c0_59] : memref<128x128xf32, #tpu.memory_space<vmem>>, vector<8x128xf32>
    %137 = arith.truncf %118 : vector<8x128xf32> to vector<8x128xbf16>
    %cst_60 = arith.constant dense<0.000000e+00> : vector<8x128xf32>
    %138 = tpu.matmul %137, %8, %cst_60 {dimension_numbers = #tpu.dot_dimension_numbers<[1], [0], [0], [1], [0, 0, 1, 1], [], []>} : vector<8x128xbf16>, vector<128x128xbf16>, vector<8x128xf32> -> vector<8x128xf32>
    %139 = arith.addf %136, %138 : vector<8x128xf32>
    %140 = math.tanh %134 : vector<8x128xf32>
    %141 = math.tanh %139 : vector<8x128xf32>
    %142 = arith.truncf %140 : vector<8x128xf32> to vector<8x128xbf16>
    %143 = arith.index_cast %126 : i32 to index
    %c0_61 = arith.constant 0 : index
    %144 = vector.load %arg12[%143, %c0_61] : memref<128x128xbf16, #tpu.memory_space<vmem>>, vector<8x128xbf16>
    tpu.vector_store %arg12[%143, %c0_61], %142 {strides = array<i32>} : memref<128x128xbf16, #tpu.memory_space<vmem>>, vector<8x128xbf16>,
    %145 = arith.truncf %141 : vector<8x128xf32> to vector<8x128xbf16>
    %146 = arith.index_cast %129 : i32 to index
    %c0_62 = arith.constant 0 : index
    %147 = vector.load %arg12[%146, %c0_62] : memref<128x128xbf16, #tpu.memory_space<vmem>>, vector<8x128xbf16>
    tpu.vector_store %arg12[%146, %c0_62], %145 {strides = array<i32>} : memref<128x128xbf16, #tpu.memory_space<vmem>>, vector<8x128xbf16>,
    %c6_i32 = arith.constant 6 : i32
    %c16_i32_63 = arith.constant 16 : i32
    %148 = arith.muli %c6_i32, %c16_i32_63 : i32
    %149 = tpu.assume_multiple %148, 8 : i32
    %c16_i32_64 = arith.constant 16 : i32
    %150 = arith.muli %c6_i32, %c16_i32_64 : i32
    %c8_i32_65 = arith.constant 8 : i32
    %151 = arith.addi %150, %c8_i32_65 : i32
    %152 = tpu.assume_multiple %151, 8 : i32
    %153 = arith.index_cast %149 : i32 to index
    %c0_66 = arith.constant 0 : index
    %154 = vector.load %arg11[%153, %c0_66] : memref<128x128xf32, #tpu.memory_space<vmem>>, vector<8x128xf32>
    %155 = arith.truncf %140 : vector<8x128xf32> to vector<8x128xbf16>
    %cst_67 = arith.constant dense<0.000000e+00> : vector<8x128xf32>
    %156 = tpu.matmul %155, %8, %cst_67 {dimension_numbers = #tpu.dot_dimension_numbers<[1], [0], [0], [1], [0, 0, 1, 1], [], []>} : vector<8x128xbf16>, vector<128x128xbf16>, vector<8x128xf32> -> vector<8x128xf32>
    %157 = arith.addf %154, %156 : vector<8x128xf32>
    %158 = arith.index_cast %152 : i32 to index
    %c0_68 = arith.constant 0 : index
    %159 = vector.load %arg11[%158, %c0_68] : memref<128x128xf32, #tpu.memory_space<vmem>>, vector<8x128xf32>
    %160 = arith.truncf %141 : vector<8x128xf32> to vector<8x128xbf16>
    %cst_69 = arith.constant dense<0.000000e+00> : vector<8x128xf32>
    %161 = tpu.matmul %160, %8, %cst_69 {dimension_numbers = #tpu.dot_dimension_numbers<[1], [0], [0], [1], [0, 0, 1, 1], [], []>} : vector<8x128xbf16>, vector<128x128xbf16>, vector<8x128xf32> -> vector<8x128xf32>
    %162 = arith.addf %159, %161 : vector<8x128xf32>
    %163 = math.tanh %157 : vector<8x128xf32>
    %164 = math.tanh %162 : vector<8x128xf32>
    %165 = arith.truncf %163 : vector<8x128xf32> to vector<8x128xbf16>
    %166 = arith.index_cast %149 : i32 to index
    %c0_70 = arith.constant 0 : index
    %167 = vector.load %arg12[%166, %c0_70] : memref<128x128xbf16, #tpu.memory_space<vmem>>, vector<8x128xbf16>
    tpu.vector_store %arg12[%166, %c0_70], %165 {strides = array<i32>} : memref<128x128xbf16, #tpu.memory_space<vmem>>, vector<8x128xbf16>,
    %168 = arith.truncf %164 : vector<8x128xf32> to vector<8x128xbf16>
    %169 = arith.index_cast %152 : i32 to index
    %c0_71 = arith.constant 0 : index
    %170 = vector.load %arg12[%169, %c0_71] : memref<128x128xbf16, #tpu.memory_space<vmem>>, vector<8x128xbf16>
    tpu.vector_store %arg12[%169, %c0_71], %168 {strides = array<i32>} : memref<128x128xbf16, #tpu.memory_space<vmem>>, vector<8x128xbf16>,
    %c7_i32 = arith.constant 7 : i32
    %c16_i32_72 = arith.constant 16 : i32
    %171 = arith.muli %c7_i32, %c16_i32_72 : i32
    %172 = tpu.assume_multiple %171, 8 : i32
    %c16_i32_73 = arith.constant 16 : i32
    %173 = arith.muli %c7_i32, %c16_i32_73 : i32
    %c8_i32_74 = arith.constant 8 : i32
    %174 = arith.addi %173, %c8_i32_74 : i32
    %175 = tpu.assume_multiple %174, 8 : i32
    %176 = arith.index_cast %172 : i32 to index
    %c0_75 = arith.constant 0 : index
    %177 = vector.load %arg11[%176, %c0_75] : memref<128x128xf32, #tpu.memory_space<vmem>>, vector<8x128xf32>
    %178 = arith.truncf %163 : vector<8x128xf32> to vector<8x128xbf16>
    %cst_76 = arith.constant dense<0.000000e+00> : vector<8x128xf32>
    %179 = tpu.matmul %178, %8, %cst_76 {dimension_numbers = #tpu.dot_dimension_numbers<[1], [0], [0], [1], [0, 0, 1, 1], [], []>} : vector<8x128xbf16>, vector<128x128xbf16>, vector<8x128xf32> -> vector<8x128xf32>
    %180 = arith.addf %177, %179 : vector<8x128xf32>
    %181 = arith.index_cast %175 : i32 to index
    %c0_77 = arith.constant 0 : index
    %182 = vector.load %arg11[%181, %c0_77] : memref<128x128xf32, #tpu.memory_space<vmem>>, vector<8x128xf32>
    %183 = arith.truncf %164 : vector<8x128xf32> to vector<8x128xbf16>
    %cst_78 = arith.constant dense<0.000000e+00> : vector<8x128xf32>
    %184 = tpu.matmul %183, %8, %cst_78 {dimension_numbers = #tpu.dot_dimension_numbers<[1], [0], [0], [1], [0, 0, 1, 1], [], []>} : vector<8x128xbf16>, vector<128x128xbf16>, vector<8x128xf32> -> vector<8x128xf32>
    %185 = arith.addf %182, %184 : vector<8x128xf32>
    %186 = math.tanh %180 : vector<8x128xf32>
    %187 = math.tanh %185 : vector<8x128xf32>
    %188 = arith.truncf %186 : vector<8x128xf32> to vector<8x128xbf16>
    %189 = arith.index_cast %172 : i32 to index
    %c0_79 = arith.constant 0 : index
    %190 = vector.load %arg12[%189, %c0_79] : memref<128x128xbf16, #tpu.memory_space<vmem>>, vector<8x128xbf16>
    tpu.vector_store %arg12[%189, %c0_79], %188 {strides = array<i32>} : memref<128x128xbf16, #tpu.memory_space<vmem>>, vector<8x128xbf16>,
    %191 = arith.truncf %187 : vector<8x128xf32> to vector<8x128xbf16>
    %192 = arith.index_cast %175 : i32 to index
    %c0_80 = arith.constant 0 : index
    %193 = vector.load %arg12[%192, %c0_80] : memref<128x128xbf16, #tpu.memory_space<vmem>>, vector<8x128xbf16>
    tpu.vector_store %arg12[%192, %c0_80], %191 {strides = array<i32>} : memref<128x128xbf16, #tpu.memory_space<vmem>>, vector<8x128xbf16>,
    %c8_i32_81 = arith.constant 8 : i32
    %c0_82 = arith.constant 0 : index
    %c0_83 = arith.constant 0 : index
    %194 = vector.load %arg12[%c0_82, %c0_83] : memref<128x128xbf16, #tpu.memory_space<vmem>>, vector<128x128xbf16>
    %c0_84 = arith.constant 0 : index
    %c0_85 = arith.constant 0 : index
    %195 = vector.load %arg5[%c0_84, %c0_85] : memref<128x128xbf16, #tpu.memory_space<vmem>>, vector<128x128xbf16>
    %cst_86 = arith.constant dense<0.000000e+00> : vector<128x128xf32>
    %196 = tpu.matmul %194, %195, %cst_86 {dimension_numbers = #tpu.dot_dimension_numbers<[1], [0], [0], [1], [0, 0, 1, 1], [], []>} : vector<128x128xbf16>, vector<128x128xbf16>, vector<128x128xf32> -> vector<128x128xf32>
    %c0_87 = arith.constant 0 : index
    %c0_88 = arith.constant 0 : index
    %197 = vector.load %arg7[%c0_87, %c0_88] : memref<1x128xf32, #tpu.memory_space<vmem>>, vector<1x128xf32>
    %198 = vector.broadcast %197 : vector<1x128xf32> to vector<128x128xf32>
    %199 = arith.addf %196, %198 : vector<128x128xf32>
    %c0_89 = arith.constant 0 : index
    %c0_90 = arith.constant 0 : index
    %200 = vector.load %arg11[%c0_89, %c0_90] : memref<128x128xf32, #tpu.memory_space<vmem>>, vector<128x128xf32>
    tpu.vector_store %arg11[%c0_89, %c0_90], %199 {strides = array<i32>} : memref<128x128xf32, #tpu.memory_space<vmem>>, vector<128x128xf32>,
    %c0_91 = arith.constant 0 : index
    %c0_92 = arith.constant 0 : index
    %201 = vector.load %arg6[%c0_91, %c0_92] : memref<128x128xbf16, #tpu.memory_space<vmem>>, vector<128x128xbf16>
    %cst_93 = arith.constant 0.000000e+00 : f32
    %202 = vector.broadcast %cst_93 : f32 to vector<8x128xf32>
    %c0_i32_94 = arith.constant 0 : i32
    %c16_i32_95 = arith.constant 16 : i32
    %203 = arith.muli %c0_i32_94, %c16_i32_95 : i32
    %204 = tpu.assume_multiple %203, 8 : i32
    %c16_i32_96 = arith.constant 16 : i32
    %205 = arith.muli %c0_i32_94, %c16_i32_96 : i32
    %c8_i32_97 = arith.constant 8 : i32
    %206 = arith.addi %205, %c8_i32_97 : i32
    %207 = tpu.assume_multiple %206, 8 : i32
    %208 = arith.index_cast %204 : i32 to index
    %c0_98 = arith.constant 0 : index
    %209 = vector.load %arg11[%208, %c0_98] : memref<128x128xf32, #tpu.memory_space<vmem>>, vector<8x128xf32>
    %210 = arith.truncf %202 : vector<8x128xf32> to vector<8x128xbf16>
    %cst_99 = arith.constant dense<0.000000e+00> : vector<8x128xf32>
    %211 = tpu.matmul %210, %201, %cst_99 {dimension_numbers = #tpu.dot_dimension_numbers<[1], [0], [0], [1], [0, 0, 1, 1], [], []>} : vector<8x128xbf16>, vector<128x128xbf16>, vector<8x128xf32> -> vector<8x128xf32>
    %212 = arith.addf %209, %211 : vector<8x128xf32>
    %213 = arith.index_cast %207 : i32 to index
    %c0_100 = arith.constant 0 : index
    %214 = vector.load %arg11[%213, %c0_100] : memref<128x128xf32, #tpu.memory_space<vmem>>, vector<8x128xf32>
    %215 = arith.truncf %202 : vector<8x128xf32> to vector<8x128xbf16>
    %cst_101 = arith.constant dense<0.000000e+00> : vector<8x128xf32>
    %216 = tpu.matmul %215, %201, %cst_101 {dimension_numbers = #tpu.dot_dimension_numbers<[1], [0], [0], [1], [0, 0, 1, 1], [], []>} : vector<8x128xbf16>, vector<128x128xbf16>, vector<8x128xf32> -> vector<8x128xf32>
    %217 = arith.addf %214, %216 : vector<8x128xf32>
    %218 = math.tanh %212 : vector<8x128xf32>
    %219 = math.tanh %217 : vector<8x128xf32>
    %220 = arith.truncf %218 : vector<8x128xf32> to vector<8x128xbf16>
    %221 = arith.index_cast %204 : i32 to index
    %c0_102 = arith.constant 0 : index
    %222 = vector.load %arg12[%221, %c0_102] : memref<128x128xbf16, #tpu.memory_space<vmem>>, vector<8x128xbf16>
    tpu.vector_store %arg12[%221, %c0_102], %220 {strides = array<i32>} : memref<128x128xbf16, #tpu.memory_space<vmem>>, vector<8x128xbf16>,
    %223 = arith.truncf %219 : vector<8x128xf32> to vector<8x128xbf16>
    %224 = arith.index_cast %207 : i32 to index
    %c0_103 = arith.constant 0 : index
    %225 = vector.load %arg12[%224, %c0_103] : memref<128x128xbf16, #tpu.memory_space<vmem>>, vector<8x128xbf16>
    tpu.vector_store %arg12[%224, %c0_103], %223 {strides = array<i32>} : memref<128x128xbf16, #tpu.memory_space<vmem>>, vector<8x128xbf16>,
    %c1_i32_104 = arith.constant 1 : i32
    %c16_i32_105 = arith.constant 16 : i32
    %226 = arith.muli %c1_i32_104, %c16_i32_105 : i32
    %227 = tpu.assume_multiple %226, 8 : i32
    %c16_i32_106 = arith.constant 16 : i32
    %228 = arith.muli %c1_i32_104, %c16_i32_106 : i32
    %c8_i32_107 = arith.constant 8 : i32
    %229 = arith.addi %228, %c8_i32_107 : i32
    %230 = tpu.assume_multiple %229, 8 : i32
    %231 = arith.index_cast %227 : i32 to index
    %c0_108 = arith.constant 0 : index
    %232 = vector.load %arg11[%231, %c0_108] : memref<128x128xf32, #tpu.memory_space<vmem>>, vector<8x128xf32>
    %233 = arith.truncf %218 : vector<8x128xf32> to vector<8x128xbf16>
    %cst_109 = arith.constant dense<0.000000e+00> : vector<8x128xf32>
    %234 = tpu.matmul %233, %201, %cst_109 {dimension_numbers = #tpu.dot_dimension_numbers<[1], [0], [0], [1], [0, 0, 1, 1], [], []>} : vector<8x128xbf16>, vector<128x128xbf16>, vector<8x128xf32> -> vector<8x128xf32>
    %235 = arith.addf %232, %234 : vector<8x128xf32>
    %236 = arith.index_cast %230 : i32 to index
    %c0_110 = arith.constant 0 : index
    %237 = vector.load %arg11[%236, %c0_110] : memref<128x128xf32, #tpu.memory_space<vmem>>, vector<8x128xf32>
    %238 = arith.truncf %219 : vector<8x128xf32> to vector<8x128xbf16>
    %cst_111 = arith.constant dense<0.000000e+00> : vector<8x128xf32>
    %239 = tpu.matmul %238, %201, %cst_111 {dimension_numbers = #tpu.dot_dimension_numbers<[1], [0], [0], [1], [0, 0, 1, 1], [], []>} : vector<8x128xbf16>, vector<128x128xbf16>, vector<8x128xf32> -> vector<8x128xf32>
    %240 = arith.addf %237, %239 : vector<8x128xf32>
    %241 = math.tanh %235 : vector<8x128xf32>
    %242 = math.tanh %240 : vector<8x128xf32>
    %243 = arith.truncf %241 : vector<8x128xf32> to vector<8x128xbf16>
    %244 = arith.index_cast %227 : i32 to index
    %c0_112 = arith.constant 0 : index
    %245 = vector.load %arg12[%244, %c0_112] : memref<128x128xbf16, #tpu.memory_space<vmem>>, vector<8x128xbf16>
    tpu.vector_store %arg12[%244, %c0_112], %243 {strides = array<i32>} : memref<128x128xbf16, #tpu.memory_space<vmem>>, vector<8x128xbf16>,
    %246 = arith.truncf %242 : vector<8x128xf32> to vector<8x128xbf16>
    %247 = arith.index_cast %230 : i32 to index
    %c0_113 = arith.constant 0 : index
    %248 = vector.load %arg12[%247, %c0_113] : memref<128x128xbf16, #tpu.memory_space<vmem>>, vector<8x128xbf16>
    tpu.vector_store %arg12[%247, %c0_113], %246 {strides = array<i32>} : memref<128x128xbf16, #tpu.memory_space<vmem>>, vector<8x128xbf16>,
    %c2_i32_114 = arith.constant 2 : i32
    %c16_i32_115 = arith.constant 16 : i32
    %249 = arith.muli %c2_i32_114, %c16_i32_115 : i32
    %250 = tpu.assume_multiple %249, 8 : i32
    %c16_i32_116 = arith.constant 16 : i32
    %251 = arith.muli %c2_i32_114, %c16_i32_116 : i32
    %c8_i32_117 = arith.constant 8 : i32
    %252 = arith.addi %251, %c8_i32_117 : i32
    %253 = tpu.assume_multiple %252, 8 : i32
    %254 = arith.index_cast %250 : i32 to index
    %c0_118 = arith.constant 0 : index
    %255 = vector.load %arg11[%254, %c0_118] : memref<128x128xf32, #tpu.memory_space<vmem>>, vector<8x128xf32>
    %256 = arith.truncf %241 : vector<8x128xf32> to vector<8x128xbf16>
    %cst_119 = arith.constant dense<0.000000e+00> : vector<8x128xf32>
    %257 = tpu.matmul %256, %201, %cst_119 {dimension_numbers = #tpu.dot_dimension_numbers<[1], [0], [0], [1], [0, 0, 1, 1], [], []>} : vector<8x128xbf16>, vector<128x128xbf16>, vector<8x128xf32> -> vector<8x128xf32>
    %258 = arith.addf %255, %257 : vector<8x128xf32>
    %259 = arith.index_cast %253 : i32 to index
    %c0_120 = arith.constant 0 : index
    %260 = vector.load %arg11[%259, %c0_120] : memref<128x128xf32, #tpu.memory_space<vmem>>, vector<8x128xf32>
    %261 = arith.truncf %242 : vector<8x128xf32> to vector<8x128xbf16>
    %cst_121 = arith.constant dense<0.000000e+00> : vector<8x128xf32>
    %262 = tpu.matmul %261, %201, %cst_121 {dimension_numbers = #tpu.dot_dimension_numbers<[1], [0], [0], [1], [0, 0, 1, 1], [], []>} : vector<8x128xbf16>, vector<128x128xbf16>, vector<8x128xf32> -> vector<8x128xf32>
    %263 = arith.addf %260, %262 : vector<8x128xf32>
    %264 = math.tanh %258 : vector<8x128xf32>
    %265 = math.tanh %263 : vector<8x128xf32>
    %266 = arith.truncf %264 : vector<8x128xf32> to vector<8x128xbf16>
    %267 = arith.index_cast %250 : i32 to index
    %c0_122 = arith.constant 0 : index
    %268 = vector.load %arg12[%267, %c0_122] : memref<128x128xbf16, #tpu.memory_space<vmem>>, vector<8x128xbf16>
    tpu.vector_store %arg12[%267, %c0_122], %266 {strides = array<i32>} : memref<128x128xbf16, #tpu.memory_space<vmem>>, vector<8x128xbf16>,
    %269 = arith.truncf %265 : vector<8x128xf32> to vector<8x128xbf16>
    %270 = arith.index_cast %253 : i32 to index
    %c0_123 = arith.constant 0 : index
    %271 = vector.load %arg12[%270, %c0_123] : memref<128x128xbf16, #tpu.memory_space<vmem>>, vector<8x128xbf16>
    tpu.vector_store %arg12[%270, %c0_123], %269 {strides = array<i32>} : memref<128x128xbf16, #tpu.memory_space<vmem>>, vector<8x128xbf16>,
    %c3_i32_124 = arith.constant 3 : i32
    %c16_i32_125 = arith.constant 16 : i32
    %272 = arith.muli %c3_i32_124, %c16_i32_125 : i32
    %273 = tpu.assume_multiple %272, 8 : i32
    %c16_i32_126 = arith.constant 16 : i32
    %274 = arith.muli %c3_i32_124, %c16_i32_126 : i32
    %c8_i32_127 = arith.constant 8 : i32
    %275 = arith.addi %274, %c8_i32_127 : i32
    %276 = tpu.assume_multiple %275, 8 : i32
    %277 = arith.index_cast %273 : i32 to index
    %c0_128 = arith.constant 0 : index
    %278 = vector.load %arg11[%277, %c0_128] : memref<128x128xf32, #tpu.memory_space<vmem>>, vector<8x128xf32>
    %279 = arith.truncf %264 : vector<8x128xf32> to vector<8x128xbf16>
    %cst_129 = arith.constant dense<0.000000e+00> : vector<8x128xf32>
    %280 = tpu.matmul %279, %201, %cst_129 {dimension_numbers = #tpu.dot_dimension_numbers<[1], [0], [0], [1], [0, 0, 1, 1], [], []>} : vector<8x128xbf16>, vector<128x128xbf16>, vector<8x128xf32> -> vector<8x128xf32>
    %281 = arith.addf %278, %280 : vector<8x128xf32>
    %282 = arith.index_cast %276 : i32 to index
    %c0_130 = arith.constant 0 : index
    %283 = vector.load %arg11[%282, %c0_130] : memref<128x128xf32, #tpu.memory_space<vmem>>, vector<8x128xf32>
    %284 = arith.truncf %265 : vector<8x128xf32> to vector<8x128xbf16>
    %cst_131 = arith.constant dense<0.000000e+00> : vector<8x128xf32>
    %285 = tpu.matmul %284, %201, %cst_131 {dimension_numbers = #tpu.dot_dimension_numbers<[1], [0], [0], [1], [0, 0, 1, 1], [], []>} : vector<8x128xbf16>, vector<128x128xbf16>, vector<8x128xf32> -> vector<8x128xf32>
    %286 = arith.addf %283, %285 : vector<8x128xf32>
    %287 = math.tanh %281 : vector<8x128xf32>
    %288 = math.tanh %286 : vector<8x128xf32>
    %289 = arith.truncf %287 : vector<8x128xf32> to vector<8x128xbf16>
    %290 = arith.index_cast %273 : i32 to index
    %c0_132 = arith.constant 0 : index
    %291 = vector.load %arg12[%290, %c0_132] : memref<128x128xbf16, #tpu.memory_space<vmem>>, vector<8x128xbf16>
    tpu.vector_store %arg12[%290, %c0_132], %289 {strides = array<i32>} : memref<128x128xbf16, #tpu.memory_space<vmem>>, vector<8x128xbf16>,
    %292 = arith.truncf %288 : vector<8x128xf32> to vector<8x128xbf16>
    %293 = arith.index_cast %276 : i32 to index
    %c0_133 = arith.constant 0 : index
    %294 = vector.load %arg12[%293, %c0_133] : memref<128x128xbf16, #tpu.memory_space<vmem>>, vector<8x128xbf16>
    tpu.vector_store %arg12[%293, %c0_133], %292 {strides = array<i32>} : memref<128x128xbf16, #tpu.memory_space<vmem>>, vector<8x128xbf16>,
    %c4_i32_134 = arith.constant 4 : i32
    %c16_i32_135 = arith.constant 16 : i32
    %295 = arith.muli %c4_i32_134, %c16_i32_135 : i32
    %296 = tpu.assume_multiple %295, 8 : i32
    %c16_i32_136 = arith.constant 16 : i32
    %297 = arith.muli %c4_i32_134, %c16_i32_136 : i32
    %c8_i32_137 = arith.constant 8 : i32
    %298 = arith.addi %297, %c8_i32_137 : i32
    %299 = tpu.assume_multiple %298, 8 : i32
    %300 = arith.index_cast %296 : i32 to index
    %c0_138 = arith.constant 0 : index
    %301 = vector.load %arg11[%300, %c0_138] : memref<128x128xf32, #tpu.memory_space<vmem>>, vector<8x128xf32>
    %302 = arith.truncf %287 : vector<8x128xf32> to vector<8x128xbf16>
    %cst_139 = arith.constant dense<0.000000e+00> : vector<8x128xf32>
    %303 = tpu.matmul %302, %201, %cst_139 {dimension_numbers = #tpu.dot_dimension_numbers<[1], [0], [0], [1], [0, 0, 1, 1], [], []>} : vector<8x128xbf16>, vector<128x128xbf16>, vector<8x128xf32> -> vector<8x128xf32>
    %304 = arith.addf %301, %303 : vector<8x128xf32>
    %305 = arith.index_cast %299 : i32 to index
    %c0_140 = arith.constant 0 : index
    %306 = vector.load %arg11[%305, %c0_140] : memref<128x128xf32, #tpu.memory_space<vmem>>, vector<8x128xf32>
    %307 = arith.truncf %288 : vector<8x128xf32> to vector<8x128xbf16>
    %cst_141 = arith.constant dense<0.000000e+00> : vector<8x128xf32>
    %308 = tpu.matmul %307, %201, %cst_141 {dimension_numbers = #tpu.dot_dimension_numbers<[1], [0], [0], [1], [0, 0, 1, 1], [], []>} : vector<8x128xbf16>, vector<128x128xbf16>, vector<8x128xf32> -> vector<8x128xf32>
    %309 = arith.addf %306, %308 : vector<8x128xf32>
    %310 = math.tanh %304 : vector<8x128xf32>
    %311 = math.tanh %309 : vector<8x128xf32>
    %312 = arith.truncf %310 : vector<8x128xf32> to vector<8x128xbf16>
    %313 = arith.index_cast %296 : i32 to index
    %c0_142 = arith.constant 0 : index
    %314 = vector.load %arg12[%313, %c0_142] : memref<128x128xbf16, #tpu.memory_space<vmem>>, vector<8x128xbf16>
    tpu.vector_store %arg12[%313, %c0_142], %312 {strides = array<i32>} : memref<128x128xbf16, #tpu.memory_space<vmem>>, vector<8x128xbf16>,
    %315 = arith.truncf %311 : vector<8x128xf32> to vector<8x128xbf16>
    %316 = arith.index_cast %299 : i32 to index
    %c0_143 = arith.constant 0 : index
    %317 = vector.load %arg12[%316, %c0_143] : memref<128x128xbf16, #tpu.memory_space<vmem>>, vector<8x128xbf16>
    tpu.vector_store %arg12[%316, %c0_143], %315 {strides = array<i32>} : memref<128x128xbf16, #tpu.memory_space<vmem>>, vector<8x128xbf16>,
    %c5_i32_144 = arith.constant 5 : i32
    %c16_i32_145 = arith.constant 16 : i32
    %318 = arith.muli %c5_i32_144, %c16_i32_145 : i32
    %319 = tpu.assume_multiple %318, 8 : i32
    %c16_i32_146 = arith.constant 16 : i32
    %320 = arith.muli %c5_i32_144, %c16_i32_146 : i32
    %c8_i32_147 = arith.constant 8 : i32
    %321 = arith.addi %320, %c8_i32_147 : i32
    %322 = tpu.assume_multiple %321, 8 : i32
    %323 = arith.index_cast %319 : i32 to index
    %c0_148 = arith.constant 0 : index
    %324 = vector.load %arg11[%323, %c0_148] : memref<128x128xf32, #tpu.memory_space<vmem>>, vector<8x128xf32>
    %325 = arith.truncf %310 : vector<8x128xf32> to vector<8x128xbf16>
    %cst_149 = arith.constant dense<0.000000e+00> : vector<8x128xf32>
    %326 = tpu.matmul %325, %201, %cst_149 {dimension_numbers = #tpu.dot_dimension_numbers<[1], [0], [0], [1], [0, 0, 1, 1], [], []>} : vector<8x128xbf16>, vector<128x128xbf16>, vector<8x128xf32> -> vector<8x128xf32>
    %327 = arith.addf %324, %326 : vector<8x128xf32>
    %328 = arith.index_cast %322 : i32 to index
    %c0_150 = arith.constant 0 : index
    %329 = vector.load %arg11[%328, %c0_150] : memref<128x128xf32, #tpu.memory_space<vmem>>, vector<8x128xf32>
    %330 = arith.truncf %311 : vector<8x128xf32> to vector<8x128xbf16>
    %cst_151 = arith.constant dense<0.000000e+00> : vector<8x128xf32>
    %331 = tpu.matmul %330, %201, %cst_151 {dimension_numbers = #tpu.dot_dimension_numbers<[1], [0], [0], [1], [0, 0, 1, 1], [], []>} : vector<8x128xbf16>, vector<128x128xbf16>, vector<8x128xf32> -> vector<8x128xf32>
    %332 = arith.addf %329, %331 : vector<8x128xf32>
    %333 = math.tanh %327 : vector<8x128xf32>
    %334 = math.tanh %332 : vector<8x128xf32>
    %335 = arith.truncf %333 : vector<8x128xf32> to vector<8x128xbf16>
    %336 = arith.index_cast %319 : i32 to index
    %c0_152 = arith.constant 0 : index
    %337 = vector.load %arg12[%336, %c0_152] : memref<128x128xbf16, #tpu.memory_space<vmem>>, vector<8x128xbf16>
    tpu.vector_store %arg12[%336, %c0_152], %335 {strides = array<i32>} : memref<128x128xbf16, #tpu.memory_space<vmem>>, vector<8x128xbf16>,
    %338 = arith.truncf %334 : vector<8x128xf32> to vector<8x128xbf16>
    %339 = arith.index_cast %322 : i32 to index
    %c0_153 = arith.constant 0 : index
    %340 = vector.load %arg12[%339, %c0_153] : memref<128x128xbf16, #tpu.memory_space<vmem>>, vector<8x128xbf16>
    tpu.vector_store %arg12[%339, %c0_153], %338 {strides = array<i32>} : memref<128x128xbf16, #tpu.memory_space<vmem>>, vector<8x128xbf16>,
    %c6_i32_154 = arith.constant 6 : i32
    %c16_i32_155 = arith.constant 16 : i32
    %341 = arith.muli %c6_i32_154, %c16_i32_155 : i32
    %342 = tpu.assume_multiple %341, 8 : i32
    %c16_i32_156 = arith.constant 16 : i32
    %343 = arith.muli %c6_i32_154, %c16_i32_156 : i32
    %c8_i32_157 = arith.constant 8 : i32
    %344 = arith.addi %343, %c8_i32_157 : i32
    %345 = tpu.assume_multiple %344, 8 : i32
    %346 = arith.index_cast %342 : i32 to index
    %c0_158 = arith.constant 0 : index
    %347 = vector.load %arg11[%346, %c0_158] : memref<128x128xf32, #tpu.memory_space<vmem>>, vector<8x128xf32>
    %348 = arith.truncf %333 : vector<8x128xf32> to vector<8x128xbf16>
    %cst_159 = arith.constant dense<0.000000e+00> : vector<8x128xf32>
    %349 = tpu.matmul %348, %201, %cst_159 {dimension_numbers = #tpu.dot_dimension_numbers<[1], [0], [0], [1], [0, 0, 1, 1], [], []>} : vector<8x128xbf16>, vector<128x128xbf16>, vector<8x128xf32> -> vector<8x128xf32>
    %350 = arith.addf %347, %349 : vector<8x128xf32>
    %351 = arith.index_cast %345 : i32 to index
    %c0_160 = arith.constant 0 : index
    %352 = vector.load %arg11[%351, %c0_160] : memref<128x128xf32, #tpu.memory_space<vmem>>, vector<8x128xf32>
    %353 = arith.truncf %334 : vector<8x128xf32> to vector<8x128xbf16>
    %cst_161 = arith.constant dense<0.000000e+00> : vector<8x128xf32>
    %354 = tpu.matmul %353, %201, %cst_161 {dimension_numbers = #tpu.dot_dimension_numbers<[1], [0], [0], [1], [0, 0, 1, 1], [], []>} : vector<8x128xbf16>, vector<128x128xbf16>, vector<8x128xf32> -> vector<8x128xf32>
    %355 = arith.addf %352, %354 : vector<8x128xf32>
    %356 = math.tanh %350 : vector<8x128xf32>
    %357 = math.tanh %355 : vector<8x128xf32>
    %358 = arith.truncf %356 : vector<8x128xf32> to vector<8x128xbf16>
    %359 = arith.index_cast %342 : i32 to index
    %c0_162 = arith.constant 0 : index
    %360 = vector.load %arg12[%359, %c0_162] : memref<128x128xbf16, #tpu.memory_space<vmem>>, vector<8x128xbf16>
    tpu.vector_store %arg12[%359, %c0_162], %358 {strides = array<i32>} : memref<128x128xbf16, #tpu.memory_space<vmem>>, vector<8x128xbf16>,
    %361 = arith.truncf %357 : vector<8x128xf32> to vector<8x128xbf16>
    %362 = arith.index_cast %345 : i32 to index
    %c0_163 = arith.constant 0 : index
    %363 = vector.load %arg12[%362, %c0_163] : memref<128x128xbf16, #tpu.memory_space<vmem>>, vector<8x128xbf16>
    tpu.vector_store %arg12[%362, %c0_163], %361 {strides = array<i32>} : memref<128x128xbf16, #tpu.memory_space<vmem>>, vector<8x128xbf16>,
    %c7_i32_164 = arith.constant 7 : i32
    %c16_i32_165 = arith.constant 16 : i32
    %364 = arith.muli %c7_i32_164, %c16_i32_165 : i32
    %365 = tpu.assume_multiple %364, 8 : i32
    %c16_i32_166 = arith.constant 16 : i32
    %366 = arith.muli %c7_i32_164, %c16_i32_166 : i32
    %c8_i32_167 = arith.constant 8 : i32
    %367 = arith.addi %366, %c8_i32_167 : i32
    %368 = tpu.assume_multiple %367, 8 : i32
    %369 = arith.index_cast %365 : i32 to index
    %c0_168 = arith.constant 0 : index
    %370 = vector.load %arg11[%369, %c0_168] : memref<128x128xf32, #tpu.memory_space<vmem>>, vector<8x128xf32>
    %371 = arith.truncf %356 : vector<8x128xf32> to vector<8x128xbf16>
    %cst_169 = arith.constant dense<0.000000e+00> : vector<8x128xf32>
    %372 = tpu.matmul %371, %201, %cst_169 {dimension_numbers = #tpu.dot_dimension_numbers<[1], [0], [0], [1], [0, 0, 1, 1], [], []>} : vector<8x128xbf16>, vector<128x128xbf16>, vector<8x128xf32> -> vector<8x128xf32>
    %373 = arith.addf %370, %372 : vector<8x128xf32>
    %374 = arith.index_cast %368 : i32 to index
    %c0_170 = arith.constant 0 : index
    %375 = vector.load %arg11[%374, %c0_170] : memref<128x128xf32, #tpu.memory_space<vmem>>, vector<8x128xf32>
    %376 = arith.truncf %357 : vector<8x128xf32> to vector<8x128xbf16>
    %cst_171 = arith.constant dense<0.000000e+00> : vector<8x128xf32>
    %377 = tpu.matmul %376, %201, %cst_171 {dimension_numbers = #tpu.dot_dimension_numbers<[1], [0], [0], [1], [0, 0, 1, 1], [], []>} : vector<8x128xbf16>, vector<128x128xbf16>, vector<8x128xf32> -> vector<8x128xf32>
    %378 = arith.addf %375, %377 : vector<8x128xf32>
    %379 = math.tanh %373 : vector<8x128xf32>
    %380 = math.tanh %378 : vector<8x128xf32>
    %381 = arith.truncf %379 : vector<8x128xf32> to vector<8x128xbf16>
    %382 = arith.index_cast %365 : i32 to index
    %c0_172 = arith.constant 0 : index
    %383 = vector.load %arg12[%382, %c0_172] : memref<128x128xbf16, #tpu.memory_space<vmem>>, vector<8x128xbf16>
    tpu.vector_store %arg12[%382, %c0_172], %381 {strides = array<i32>} : memref<128x128xbf16, #tpu.memory_space<vmem>>, vector<8x128xbf16>,
    %384 = arith.truncf %380 : vector<8x128xf32> to vector<8x128xbf16>
    %385 = arith.index_cast %368 : i32 to index
    %c0_173 = arith.constant 0 : index
    %386 = vector.load %arg12[%385, %c0_173] : memref<128x128xbf16, #tpu.memory_space<vmem>>, vector<8x128xbf16>
    tpu.vector_store %arg12[%385, %c0_173], %384 {strides = array<i32>} : memref<128x128xbf16, #tpu.memory_space<vmem>>, vector<8x128xbf16>,
    %c8_i32_174 = arith.constant 8 : i32
    %c0_175 = arith.constant 0 : index
    %c0_176 = arith.constant 0 : index
    %387 = vector.load %arg12[%c0_175, %c0_176] : memref<128x128xbf16, #tpu.memory_space<vmem>>, vector<128x128xbf16>
    %c0_177 = arith.constant 0 : index
    %c0_178 = arith.constant 0 : index
    %388 = vector.load %arg8[%c0_177, %c0_178] : memref<128x128xbf16, #tpu.memory_space<vmem>>, vector<128x128xbf16>
    %cst_179 = arith.constant dense<0.000000e+00> : vector<128x128xf32>
    %389 = tpu.matmul %387, %388, %cst_179 {dimension_numbers = #tpu.dot_dimension_numbers<[1], [0], [0], [1], [0, 0, 1, 1], [], []>} : vector<128x128xbf16>, vector<128x128xbf16>, vector<128x128xf32> -> vector<128x128xf32>
    %c0_180 = arith.constant 0 : index
    %c0_181 = arith.constant 0 : index
    %390 = vector.load %arg9[%c0_180, %c0_181] : memref<1x128xf32, #tpu.memory_space<vmem>>, vector<1x128xf32>
    %391 = vector.broadcast %390 : vector<1x128xf32> to vector<128x128xf32>
    %392 = arith.addf %389, %391 : vector<128x128xf32>
    %c0_182 = arith.constant 0 : index
    %c0_183 = arith.constant 0 : index
    %c0_184 = arith.constant 0 : index
    %393 = vector.load %arg10[%c0_182, %c0_183, %c0_184] : memref<1x128x128xf32, #tpu.memory_space<vmem>>, vector<1x128x128xf32>
    %394 = vector.shape_cast %393 : vector<1x128x128xf32> to vector<128x128xf32>
    %395 = vector.shape_cast %392 : vector<128x128xf32> to vector<1x128x128xf32>
    tpu.vector_store %arg10[%c0_182, %c0_183, %c0_184], %395 {strides = array<i32>} : memref<1x128x128xf32, #tpu.memory_space<vmem>>, vector<1x128x128xf32>,
    return
  }
  func.func @transform_0(%arg0: i32) -> (i32, i32, i32) {
    %c0_i32 = arith.constant 0 : i32
    %c0_i32_0 = arith.constant 0 : i32
    %c0_i32_1 = arith.constant 0 : i32
    return %arg0, %c0_i32, %c0_i32_0 : i32, i32, i32
  }
  func.func @transform_1(%arg0: i32) -> (i32, i32) {
    %c0_i32 = arith.constant 0 : i32
    %c0_i32_0 = arith.constant 0 : i32
    %c0_i32_1 = arith.constant 0 : i32
    return %c0_i32, %c0_i32_0 : i32, i32
  }
  func.func @transform_2(%arg0: i32) -> (i32, i32) {
    %c0_i32 = arith.constant 0 : i32
    %c0_i32_0 = arith.constant 0 : i32
    %c0_i32_1 = arith.constant 0 : i32
    return %c0_i32, %c0_i32_0 : i32, i32
  }
  func.func @transform_3(%arg0: i32) -> (i32, i32) {
    %c0_i32 = arith.constant 0 : i32
    %c0_i32_0 = arith.constant 0 : i32
    %c0_i32_1 = arith.constant 0 : i32
    return %c0_i32, %c0_i32_0 : i32, i32
  }
  func.func @transform_4(%arg0: i32) -> (i32, i32) {
    %c0_i32 = arith.constant 0 : i32
    %c0_i32_0 = arith.constant 0 : i32
    %c0_i32_1 = arith.constant 0 : i32
    return %c0_i32, %c0_i32_0 : i32, i32
  }
  func.func @transform_5(%arg0: i32) -> (i32, i32) {
    %c0_i32 = arith.constant 0 : i32
    %c0_i32_0 = arith.constant 0 : i32
    %c0_i32_1 = arith.constant 0 : i32
    return %c0_i32, %c0_i32_0 : i32, i32
  }
  func.func @transform_6(%arg0: i32) -> (i32, i32) {
    %c0_i32 = arith.constant 0 : i32
    %c0_i32_0 = arith.constant 0 : i32
    %c0_i32_1 = arith.constant 0 : i32
    return %c0_i32, %c0_i32_0 : i32, i32
  }
  func.func @transform_7(%arg0: i32) -> (i32, i32) {
    %c0_i32 = arith.constant 0 : i32
    %c0_i32_0 = arith.constant 0 : i32
    %c0_i32_1 = arith.constant 0 : i32
    return %c0_i32, %c0_i32_0 : i32, i32
  }
  func.func @transform_8(%arg0: i32) -> (i32, i32) {
    %c0_i32 = arith.constant 0 : i32
    %c0_i32_0 = arith.constant 0 : i32
    %c0_i32_1 = arith.constant 0 : i32
    return %c0_i32, %c0_i32_0 : i32, i32
  }
  func.func @transform_9(%arg0: i32) -> (i32, i32, i32) {
    %c0_i32 = arith.constant 0 : i32
    %c0_i32_0 = arith.constant 0 : i32
    %c0_i32_1 = arith.constant 0 : i32
    return %arg0, %c0_i32, %c0_i32_0 : i32, i32, i32
  }
}

</mosaic_0001>

<llo_original>
// kernel: tpu_custom_call.1
$region0: #{tpu_custom_call.1}
  #allocation0 [shape = 'u32[]', space=smem, size = 0x4, offset = 0x4, fixed_abs, tag = 'smem constant byte address 0x4 - core index']
  #allocation1 [shape = 'u32[144,128]{1,0:T(1,128)}', space=vmem, size = 0x12000, scoped, tag = 'internal scratch']
  #allocation2 [shape = 'f32[128,128]{1,0:T(8,128)}', space=vmem, size = 0x10000, scoped, tag = 'scratch operand']
  #allocation3 [shape = 'bf16[128,128]{1,0:T(8,128)(2,1)}', space=vmem, size = 0x8000, scoped, tag = 'scratch operand']
  %s0 = inlined_call_operand.hbm [shape: bf16[1,128,128], index: 0, kind: input, shape index: {}]
  %s1 = inlined_call_operand.hbm [shape: bf16[128,128], index: 1, kind: input, shape index: {}]
  %s2 = inlined_call_operand.hbm [shape: bf16[128,128], index: 2, kind: input, shape index: {}]
  %s3 = inlined_call_operand.vmem [shape: f32[1,128], index: 3, kind: input, shape index: {}]
  %s4 = inlined_call_operand.hbm [shape: bf16[128,128], index: 4, kind: input, shape index: {}]
  %s5 = inlined_call_operand.hbm [shape: bf16[128,128], index: 5, kind: input, shape index: {}]
  %s6 = inlined_call_operand.vmem [shape: f32[1,128], index: 6, kind: input, shape index: {}]
  %s7 = inlined_call_operand.hbm [shape: bf16[128,128], index: 7, kind: input, shape index: {}]
  %s8 = inlined_call_operand.vmem [shape: f32[1,128], index: 8, kind: input, shape index: {}]
  %s9 = inlined_call_operand.hbm [shape: f32[1,128,128], index: 9, kind: output, shape index: {}]
  %s10 = sld [smem:[#allocation0]]
  $region70: #{tpu_custom_call.1} parent=0
    _
  %s12 = ssub.s32 1, %s10
  %s13 = scalar_select 0, %s12, %s10
  $region1: #{tpu_custom_call.1} parent=0
    #allocation4 [shape = 'u8[32768]{0}', space=vmem, size = 0x8000, scoped, tag = 'input window, operand 0, single buffered']
    #allocation5 [shape = 's32[1]{0}', space=sflag, size = 0x4, scoped, tag = 'scoped memory for tpu_custom_call.1']
    #allocation6 [shape = 's32[1]{0}', space=sflag, size = 0x4, scoped, tag = 'scoped memory for tpu_custom_call.1']
    #allocation7 [shape = 'u8[32768]{0}', space=vmem, size = 0x8000, scoped, tag = 'input window, operand 1, single buffered']
    #allocation8 [shape = 's32[1]{0}', space=sflag, size = 0x4, scoped, tag = 'scoped memory for tpu_custom_call.1']
    #allocation9 [shape = 'u8[32768]{0}', space=vmem, size = 0x8000, scoped, tag = 'input window, operand 2, single buffered']
    #allocation10 [shape = 'u8[32768]{0}', space=vmem, size = 0x8000, scoped, tag = 'input window, operand 4, single buffered']
    #allocation11 [shape = 's32[1]{0}', space=sflag, size = 0x4, scoped, tag = 'scoped memory for tpu_custom_call.1']
    #allocation12 [shape = 'u8[32768]{0}', space=vmem, size = 0x8000, scoped, tag = 'input window, operand 5, single buffered']
    #allocation13 [shape = 'u8[32768]{0}', space=vmem, size = 0x8000, scoped, tag = 'input window, operand 7, single buffered']
    #allocation14 [shape = 's32[1]{0}', space=sflag, size = 0x4, scoped, tag = 'scoped memory for tpu_custom_call.1']
    #allocation15 [shape = 'u8[65536]{0}', space=vmem, size = 0x10000, scoped, tag = 'output window, operand 0, single buffered']
    %14 = vsyncpa [#allocation5], 0
    %15 = vsyncpa [#allocation8], 0
    %16 = vsyncpa [#allocation11], 0
    %17 = vsyncpa [#allocation14], 0
    %18 = vsyncpa [#allocation6], 0
    // Predicated region
    $region2: #{tpu_custom_call.1} parent=1 // pred_check
      _
    $region3: #{tpu_custom_call.1} parent=1 // pred_check_branch
      %20 = sbr.rel (0) target = $region5
    $region4: #{tpu_custom_call.1} parent=1 // pred_region
      %s22 = ssub.s32 1024, 1024
      %23 = vsyncadd [#allocation5], %s22
      %s24 = sshll.u32 [#allocation4], 4
      %s25 = int_to_ptr.vmem [resolvable:$true] %s24
      %30 = dma.hbm_to_vmem [thread:$0]  %s0, 1024, %s25, [#allocation5], 64, 64, 4
    $region5: #{tpu_custom_call.1} parent=1 // pred_fallthru
      _
    // Predicated region
    $region6: #{tpu_custom_call.1} parent=1 // pred_check
      _
    $region7: #{tpu_custom_call.1} parent=1 // pred_check_branch
      %32 = sbr.rel (0) target = $region9
    $region8: #{tpu_custom_call.1} parent=1 // pred_region
      %s34 = ssub.s32 1024, 1024
      %35 = vsyncadd [#allocation8], %s34
      %s36 = sshll.u32 [#allocation7], 4
      %s37 = int_to_ptr.vmem [resolvable:$true] %s36
      %42 = dma.hbm_to_vmem [thread:$0]  %s1, 1024, %s37, [#allocation8], 64, 64, 4
    $region9: #{tpu_custom_call.1} parent=1 // pred_fallthru
      _
    // Predicated region
    $region10: #{tpu_custom_call.1} parent=1 // pred_check
      _
    $region11: #{tpu_custom_call.1} parent=1 // pred_check_branch
      %44 = sbr.rel (0) target = $region13
    $region12: #{tpu_custom_call.1} parent=1 // pred_region
      %s46 = ssub.s32 1024, 1024
      %47 = vsyncadd [#allocation8], %s46
      %s48 = sshll.u32 [#allocation9], 4
      %s49 = int_to_ptr.vmem [resolvable:$true] %s48
      %54 = dma.hbm_to_vmem [thread:$0]  %s2, 1024, %s49, [#allocation8], 64, 64, 4
    $region13: #{tpu_custom_call.1} parent=1 // pred_fallthru
      _
    // Predicated region
    $region14: #{tpu_custom_call.1} parent=1 // pred_check
      _
    $region15: #{tpu_custom_call.1} parent=1 // pred_check_branch
      %56 = sbr.rel (0) target = $region17
    $region16: #{tpu_custom_call.1} parent=1 // pred_region
      _
    $region17: #{tpu_custom_call.1} parent=1 // pred_fallthru
      _
    // Predicated region
    $region18: #{tpu_custom_call.1} parent=1 // pred_check
      _
    $region19: #{tpu_custom_call.1} parent=1 // pred_check_branch
      %58 = sbr.rel (0) target = $region21
    $region20: #{tpu_custom_call.1} parent=1 // pred_region
      %s60 = ssub.s32 1024, 1024
      %61 = vsyncadd [#allocation11], %s60
      %s62 = sshll.u32 [#allocation10], 4
      %s63 = int_to_ptr.vmem [resolvable:$true] %s62
      %68 = dma.hbm_to_vmem [thread:$0]  %s4, 1024, %s63, [#allocation11], 64, 64, 4
    $region21: #{tpu_custom_call.1} parent=1 // pred_fallthru
      _
    // Predicated region
    $region22: #{tpu_custom_call.1} parent=1 // pred_check
      _
    $region23: #{tpu_custom_call.1} parent=1 // pred_check_branch
      %70 = sbr.rel (0) target = $region25
    $region24: #{tpu_custom_call.1} parent=1 // pred_region
      %s72 = ssub.s32 1024, 1024
      %73 = vsyncadd [#allocation11], %s72
      %s74 = sshll.u32 [#allocation12], 4
      %s75 = int_to_ptr.vmem [resolvable:$true] %s74
      %80 = dma.hbm_to_vmem [thread:$0]  %s5, 1024, %s75, [#allocation11], 64, 64, 4
    $region25: #{tpu_custom_call.1} parent=1 // pred_fallthru
      _
    // Predicated region
    $region26: #{tpu_custom_call.1} parent=1 // pred_check
      _
    $region27: #{tpu_custom_call.1} parent=1 // pred_check_branch
      %82 = sbr.rel (0) target = $region29
    $region28: #{tpu_custom_call.1} parent=1 // pred_region
      _
    $region29: #{tpu_custom_call.1} parent=1 // pred_fallthru
      _
    // Predicated region
    $region30: #{tpu_custom_call.1} parent=1 // pred_check
      _
    $region31: #{tpu_custom_call.1} parent=1 // pred_check_branch
      %84 = sbr.rel (0) target = $region33
    $region32: #{tpu_custom_call.1} parent=1 // pred_region
      %s86 = ssub.s32 1024, 1024
      %87 = vsyncadd [#allocation14], %s86
      %s88 = sshll.u32 [#allocation13], 4
      %s89 = int_to_ptr.vmem [resolvable:$true] %s88
      %94 = dma.hbm_to_vmem [thread:$0]  %s7, 1024, %s89, [#allocation14], 64, 64, 4
    $region33: #{tpu_custom_call.1} parent=1 // pred_fallthru
      _
    // Predicated region
    $region34: #{tpu_custom_call.1} parent=1 // pred_check
      _
    $region35: #{tpu_custom_call.1} parent=1 // pred_check_branch
      %96 = sbr.rel (0) target = $region37
    $region36: #{tpu_custom_call.1} parent=1 // pred_region
      _
    $region37: #{tpu_custom_call.1} parent=1 // pred_fallthru
      _
    // Predicated region
    $region38: #{tpu_custom_call.1} parent=1 // pred_check
      _
    $region39: #{tpu_custom_call.1} parent=1 // pred_check_branch
      %98 = sbr.rel (0) target = $region41
    $region40: #{tpu_custom_call.1} parent=1 // pred_region
      %99 = dma.done [#allocation5], 1024
    $region41: #{tpu_custom_call.1} parent=1 // pred_fallthru
      _
    // Predicated region
    $region42: #{tpu_custom_call.1} parent=1 // pred_check
      _
    $region43: #{tpu_custom_call.1} parent=1 // pred_check_branch
      %101 = sbr.rel (0) target = $region45
    $region44: #{tpu_custom_call.1} parent=1 // pred_region
      %102 = dma.done [#allocation8], 1024
    $region45: #{tpu_custom_call.1} parent=1 // pred_fallthru
      _
    // Predicated region
    $region46: #{tpu_custom_call.1} parent=1 // pred_check
      _
    $region47: #{tpu_custom_call.1} parent=1 // pred_check_branch
      %104 = sbr.rel (0) target = $region49
    $region48: #{tpu_custom_call.1} parent=1 // pred_region
      %105 = dma.done [#allocation8], 1024
    $region49: #{tpu_custom_call.1} parent=1 // pred_fallthru
      _
    // Predicated region
    $region50: #{tpu_custom_call.1} parent=1 // pred_check
      _
    $region51: #{tpu_custom_call.1} parent=1 // pred_check_branch
      %107 = sbr.rel (0) target = $region53
    $region52: #{tpu_custom_call.1} parent=1 // pred_region
      %108 = dma.done [#allocation11], 1024
    $region53: #{tpu_custom_call.1} parent=1 // pred_fallthru
      _
    // Predicated region
    $region54: #{tpu_custom_call.1} parent=1 // pred_check
      _
    $region55: #{tpu_custom_call.1} parent=1 // pred_check_branch
      %110 = sbr.rel (0) target = $region57
    $region56: #{tpu_custom_call.1} parent=1 // pred_region
      %111 = dma.done [#allocation11], 1024
    $region57: #{tpu_custom_call.1} parent=1 // pred_fallthru
      _
    // Predicated region
    $region58: #{tpu_custom_call.1} parent=1 // pred_check
      _
    $region59: #{tpu_custom_call.1} parent=1 // pred_check_branch
      %113 = sbr.rel (0) target = $region61
    $region60: #{tpu_custom_call.1} parent=1 // pred_region
      %114 = dma.done [#allocation14], 1024
    $region61: #{tpu_custom_call.1} parent=1 // pred_fallthru
      _
    %v116 = vld [vmem:[#allocation4] sm:$0xf]
    %v117 = vld [vmem:[#allocation4 + $0x4] sm:$0xf]
    %v118 = vld [vmem:[#allocation4 + $0x8] sm:$0xf]
    %v119 = vld [vmem:[#allocation4 + $0xc] sm:$0xf]
    %v120 = vld [vmem:[#allocation4 + $0x10] sm:$0xf]
    %v121 = vld [vmem:[#allocation4 + $0x14] sm:$0xf]
    %v122 = vld [vmem:[#allocation4 + $0x18] sm:$0xf]
    %v123 = vld [vmem:[#allocation4 + $0x1c] sm:$0xf]
    %v124 = vld [vmem:[#allocation4 + $0x20] sm:$0xf]
    %v125 = vld [vmem:[#allocation4 + $0x24] sm:$0xf]
    %v126 = vld [vmem:[#allocation4 + $0x28] sm:$0xf]
    %v127 = vld [vmem:[#allocation4 + $0x2c] sm:$0xf]
    %v128 = vld [vmem:[#allocation4 + $0x30] sm:$0xf]
    %v129 = vld [vmem:[#allocation4 + $0x34] sm:$0xf]
    %v130 = vld [vmem:[#allocation4 + $0x38] sm:$0xf]
    %v131 = vld [vmem:[#allocation4 + $0x3c] sm:$0xf]
    %v132 = vld [vmem:[#allocation7] sm:$0xf]
    %v133 = vld [vmem:[#allocation7 + $0x4] sm:$0xf]
    %v134 = vld [vmem:[#allocation7 + $0x8] sm:$0xf]
    %v135 = vld [vmem:[#allocation7 + $0xc] sm:$0xf]
    %v136 = vld [vmem:[#allocation7 + $0x10] sm:$0xf]
    %v137 = vld [vmem:[#allocation7 + $0x14] sm:$0xf]
    %v138 = vld [vmem:[#allocation7 + $0x18] sm:$0xf]
    %v139 = vld [vmem:[#allocation7 + $0x1c] sm:$0xf]
    %v140 = vld [vmem:[#allocation7 + $0x20] sm:$0xf]
    %v141 = vld [vmem:[#allocation7 + $0x24] sm:$0xf]
    %v142 = vld [vmem:[#allocation7 + $0x28] sm:$0xf]
    %v143 = vld [vmem:[#allocation7 + $0x2c] sm:$0xf]
    %v144 = vld [vmem:[#allocation7 + $0x30] sm:$0xf]
    %v145 = vld [vmem:[#allocation7 + $0x34] sm:$0xf]
    %v146 = vld [vmem:[#allocation7 + $0x38] sm:$0xf]
    %v147 = vld [vmem:[#allocation7 + $0x3c] sm:$0xf]
    %v148 = vld [vmem:[%s3] sm:$0x1]
    %v150 = vlaneseq
    %v151 = vshrl.u32 %v150, 7
    %v152 = vsub.s32 0, %v151
    %v153 = vrot.slane %v148, %v152
    %v171 = vunpack.c.l.b16 %v116
    %v172 = vunpack.c.l.b16 %v117
    %v173 = vunpack.c.l.b16 %v118
    %v174 = vunpack.c.l.b16 %v119
    %v175 = vunpack.c.l.b16 %v120
    %v176 = vunpack.c.l.b16 %v121
    %v177 = vunpack.c.l.b16 %v122
    %v178 = vunpack.c.l.b16 %v123
    %v179 = vunpack.c.l.b16 %v124
    %v180 = vunpack.c.l.b16 %v125
    %v181 = vunpack.c.l.b16 %v126
    %v182 = vunpack.c.l.b16 %v127
    %v183 = vunpack.c.l.b16 %v128
    %v184 = vunpack.c.l.b16 %v129
    %v185 = vunpack.c.l.b16 %v130
    %v186 = vunpack.c.l.b16 %v131
    %v187 = vpack.c.b16 %v172, %v171
    %v188 = vpack.c.b16 %v174, %v173
    %v189 = vpack.c.b16 %v176, %v175
    %v190 = vpack.c.b16 %v178, %v177
    %v191 = vpack.c.b16 %v180, %v179
    %v192 = vpack.c.b16 %v182, %v181
    %v193 = vpack.c.b16 %v184, %v183
    %v194 = vpack.c.b16 %v186, %v185
    %v219 = vunpack.c.l.b16 %v132
    %v220 = vunpack.c.l.b16 %v133
    %v221 = vunpack.c.l.b16 %v134
    %v222 = vunpack.c.l.b16 %v135
    %v223 = vunpack.c.l.b16 %v136
    %v224 = vunpack.c.l.b16 %v137
    %v225 = vunpack.c.l.b16 %v138
    %v226 = vunpack.c.l.b16 %v139
    %v227 = vunpack.c.l.b16 %v140
    %v228 = vunpack.c.l.b16 %v141
    %v229 = vunpack.c.l.b16 %v142
    %v230 = vunpack.c.l.b16 %v143
    %v231 = vunpack.c.l.b16 %v144
    %v232 = vunpack.c.l.b16 %v145
    %v233 = vunpack.c.l.b16 %v146
    %v234 = vunpack.c.l.b16 %v147
    %v235 = vpack.c.b16 %v220, %v219
    %v236 = vpack.c.b16 %v222, %v221
    %v237 = vpack.c.b16 %v224, %v223
    %v238 = vpack.c.b16 %v226, %v225
    %v239 = vpack.c.b16 %v228, %v227
    %v240 = vpack.c.b16 %v230, %v229
    %v241 = vpack.c.b16 %v232, %v231
    %v242 = vpack.c.b16 %v234, %v233
    %251 = vmatprep.subr.bf16.mxu0 0
    %252 = vmatpush1.bf16.msra.mxu0 %v242
    %253 = vmatprep.subr.bf16.mxu0 0
    %254 = vmatpush1.bf16.msra.mxu0 %v241
    %255 = vmatprep.subr.bf16.mxu0 0
    %256 = vmatpush1.bf16.msra.mxu0 %v240
    %257 = vmatprep.subr.bf16.mxu0 0
    %258 = vmatpush1.bf16.msra.mxu0 %v239
    %259 = vmatprep.subr.bf16.mxu0 0
    %260 = vmatpush1.bf16.msra.mxu0 %v238
    %261 = vmatprep.subr.bf16.mxu0 0
    %262 = vmatpush1.bf16.msra.mxu0 %v237
    %263 = vmatprep.subr.bf16.mxu0 0
    %264 = vmatpush1.bf16.msra.mxu0 %v236
    %265 = vmatprep.subr.bf16.mxu0 0
    %266 = vmatpush1.bf16.msra.mxu0 %v235
    %267 = vmatprep.subr.bf16.mxu0 0
    %268 = vmatpush2.bf16.msra.mxu0 0
    %269 = vmatprep.subr.bf16.mxu0 0
    %270 = vmatpush2.bf16.msra.mxu0 0
    %271 = vmatprep.subr.bf16.mxu0 0
    %272 = vmatpush2.bf16.msra.mxu0 0
    %273 = vmatprep.subr.bf16.mxu0 0
    %274 = vmatpush2.bf16.msra.mxu0 0
    %275 = vmatprep.subr.bf16.mxu0 0
    %276 = vmatpush2.bf16.msra.mxu0 0
    %277 = vmatprep.subr.bf16.mxu0 0
    %278 = vmatpush2.bf16.msra.mxu0 0
    %279 = vmatprep.subr.bf16.mxu0 0
    %280 = vmatpush2.bf16.msra.mxu0 0
    %281 = vmatprep.subr.bf16.mxu0 0
    %282 = vmatpush2.bf16.msra.mxu0 0
    %283 = vmatprep.mubr.bf16.mxu0 0
    %284 = vmatmul.mubr.bf16.gmra.mxu0 %v187
    %v285 = vpop.f32.mrf.mxu0
    %v286 = vadd.f32 %v153, %v285
    %v287 = vpop.f32.mrf.mxu0
    %v288 = vpop.f32.mrf.mxu0
    %v289 = vadd.f32 %v153, %v288
    %v290 = vpop.f32.mrf.mxu0
    %291 = vmatprep.mubr.bf16.mxu0 0
    %292 = vmatmul.mubr.bf16.gmra.mxu0 %v188
    %v293 = vpop.f32.mrf.mxu0
    %v294 = vadd.f32 %v153, %v293
    %v295 = vpop.f32.mrf.mxu0
    %v296 = vpop.f32.mrf.mxu0
    %v297 = vadd.f32 %v153, %v296
    %v298 = vpop.f32.mrf.mxu0
    %299 = vmatprep.mubr.bf16.mxu0 0
    %300 = vmatmul.mubr.bf16.gmra.mxu0 %v189
    %v301 = vpop.f32.mrf.mxu0
    %v302 = vadd.f32 %v153, %v301
    %v303 = vpop.f32.mrf.mxu0
    %v304 = vpop.f32.mrf.mxu0
    %v305 = vadd.f32 %v153, %v304
    %v306 = vpop.f32.mrf.mxu0
    %307 = vmatprep.mubr.bf16.mxu0 0
    %308 = vmatmul.mubr.bf16.gmra.mxu0 %v190
    %v309 = vpop.f32.mrf.mxu0
    %v310 = vadd.f32 %v153, %v309
    %v311 = vpop.f32.mrf.mxu0
    %v312 = vpop.f32.mrf.mxu0
    %v313 = vadd.f32 %v153, %v312
    %v314 = vpop.f32.mrf.mxu0
    %315 = vmatprep.mubr.bf16.mxu0 0
    %316 = vmatmul.mubr.bf16.gmra.mxu0 %v191
    %v317 = vpop.f32.mrf.mxu0
    %v318 = vadd.f32 %v153, %v317
    %v319 = vpop.f32.mrf.mxu0
    %v320 = vpop.f32.mrf.mxu0
    %v321 = vadd.f32 %v153, %v320
    %v322 = vpop.f32.mrf.mxu0
    %323 = vmatprep.mubr.bf16.mxu0 0
    %324 = vmatmul.mubr.bf16.gmra.mxu0 %v192
    %v325 = vpop.f32.mrf.mxu0
    %v326 = vadd.f32 %v153, %v325
    %v327 = vpop.f32.mrf.mxu0
    %v328 = vpop.f32.mrf.mxu0
    %v329 = vadd.f32 %v153, %v328
    %v330 = vpop.f32.mrf.mxu0
    %331 = vmatprep.mubr.bf16.mxu0 0
    %332 = vmatmul.mubr.bf16.gmra.mxu0 %v193
    %v333 = vpop.f32.mrf.mxu0
    %v334 = vadd.f32 %v153, %v333
    %v335 = vpop.f32.mrf.mxu0
    %v336 = vpop.f32.mrf.mxu0
    %v337 = vadd.f32 %v153, %v336
    %v338 = vpop.f32.mrf.mxu0
    %339 = vmatprep.mubr.bf16.mxu0 0
    %340 = vmatmul.mubr.bf16.gmra.mxu0 %v194
    %v341 = vpop.f32.mrf.mxu0
    %v342 = vadd.f32 %v153, %v341
    %v343 = vpop.f32.mrf.mxu0
    %v344 = vpop.f32.mrf.mxu0
    %v345 = vadd.f32 %v153, %v344
    %v346 = vpop.f32.mrf.mxu0
    %347 = vdwg.mxu0
    %348 = vst [vmem:[#allocation2] sm:$0xff] %v286
    %349 = vst [vmem:[#allocation2 + $0x8] sm:$0xff] %v289
    %350 = vst [vmem:[#allocation2 + $0x10] sm:$0xff] %v294
    %351 = vst [vmem:[#allocation2 + $0x18] sm:$0xff] %v297
    %352 = vst [vmem:[#allocation2 + $0x20] sm:$0xff] %v302
    %353 = vst [vmem:[#allocation2 + $0x28] sm:$0xff] %v305
    %354 = vst [vmem:[#allocation2 + $0x30] sm:$0xff] %v310
    %355 = vst [vmem:[#allocation2 + $0x38] sm:$0xff] %v313
    %356 = vst [vmem:[#allocation2 + $0x40] sm:$0xff] %v318
    %357 = vst [vmem:[#allocation2 + $0x48] sm:$0xff] %v321
    %358 = vst [vmem:[#allocation2 + $0x50] sm:$0xff] %v326
    %359 = vst [vmem:[#allocation2 + $0x58] sm:$0xff] %v329
    %360 = vst [vmem:[#allocation2 + $0x60] sm:$0xff] %v334
    %361 = vst [vmem:[#allocation2 + $0x68] sm:$0xff] %v337
    %362 = vst [vmem:[#allocation2 + $0x70] sm:$0xff] %v342
    %363 = vst [vmem:[#allocation2 + $0x78] sm:$0xff] %v345
    %v364 = vld [vmem:[#allocation9] sm:$0xf]
    %v365 = vld [vmem:[#allocation9 + $0x4] sm:$0xf]
    %v366 = vld [vmem:[#allocation9 + $0x8] sm:$0xf]
    %v367 = vld [vmem:[#allocation9 + $0xc] sm:$0xf]
    %v368 = vld [vmem:[#allocation9 + $0x10] sm:$0xf]
    %v369 = vld [vmem:[#allocation9 + $0x14] sm:$0xf]
    %v370 = vld [vmem:[#allocation9 + $0x18] sm:$0xf]
    %v371 = vld [vmem:[#allocation9 + $0x1c] sm:$0xf]
    %v372 = vld [vmem:[#allocation9 + $0x20] sm:$0xf]
    %v373 = vld [vmem:[#allocation9 + $0x24] sm:$0xf]
    %v374 = vld [vmem:[#allocation9 + $0x28] sm:$0xf]
    %v375 = vld [vmem:[#allocation9 + $0x2c] sm:$0xf]
    %v376 = vld [vmem:[#allocation9 + $0x30] sm:$0xf]
    %v377 = vld [vmem:[#allocation9 + $0x34] sm:$0xf]
    %v378 = vld [vmem:[#allocation9 + $0x38] sm:$0xf]
    %v379 = vld [vmem:[#allocation9 + $0x3c] sm:$0xf]
    %v380 = vld [vmem:[#allocation2] sm:$0xff]
    %v397 = vunpack.c.l.b16 %v364
    %v398 = vunpack.c.l.b16 %v365
    %v399 = vunpack.c.l.b16 %v366
    %v400 = vunpack.c.l.b16 %v367
    %v401 = vunpack.c.l.b16 %v368
    %v402 = vunpack.c.l.b16 %v369
    %v403 = vunpack.c.l.b16 %v370
    %v404 = vunpack.c.l.b16 %v371
    %v405 = vunpack.c.l.b16 %v372
    %v406 = vunpack.c.l.b16 %v373
    %v407 = vunpack.c.l.b16 %v374
    %v408 = vunpack.c.l.b16 %v375
    %v409 = vunpack.c.l.b16 %v376
    %v410 = vunpack.c.l.b16 %v377
    %v411 = vunpack.c.l.b16 %v378
    %v412 = vunpack.c.l.b16 %v379
    %v413 = vpack.c.b16 %v398, %v397
    %v414 = vpack.c.b16 %v400, %v399
    %v415 = vpack.c.b16 %v402, %v401
    %v416 = vpack.c.b16 %v404, %v403
    %v417 = vpack.c.b16 %v406, %v405
    %v418 = vpack.c.b16 %v408, %v407
    %v419 = vpack.c.b16 %v410, %v409
    %v420 = vpack.c.b16 %v412, %v411
    %429 = vmatprep.subr.bf16.mxu0 0
    %430 = vmatpush1.bf16.msra.mxu0 %v420
    %431 = vmatprep.subr.bf16.mxu0 0
    %432 = vmatpush1.bf16.msra.mxu0 %v419
    %433 = vmatprep.subr.bf16.mxu0 0
    %434 = vmatpush1.bf16.msra.mxu0 %v418
    %435 = vmatprep.subr.bf16.mxu0 0
    %436 = vmatpush1.bf16.msra.mxu0 %v417
    %437 = vmatprep.subr.bf16.mxu0 0
    %438 = vmatpush1.bf16.msra.mxu0 %v416
    %439 = vmatprep.subr.bf16.mxu0 0
    %440 = vmatpush1.bf16.msra.mxu0 %v415
    %441 = vmatprep.subr.bf16.mxu0 0
    %442 = vmatpush1.bf16.msra.mxu0 %v414
    %443 = vmatprep.subr.bf16.mxu0 0
    %444 = vmatpush1.bf16.msra.mxu0 %v413
    %445 = vmatprep.subr.bf16.mxu0 0
    %446 = vmatpush2.bf16.msra.mxu0 0
    %447 = vmatprep.subr.bf16.mxu0 0
    %448 = vmatpush2.bf16.msra.mxu0 0
    %449 = vmatprep.subr.bf16.mxu0 0
    %450 = vmatpush2.bf16.msra.mxu0 0
    %451 = vmatprep.subr.bf16.mxu0 0
    %452 = vmatpush2.bf16.msra.mxu0 0
    %453 = vmatprep.subr.bf16.mxu0 0
    %454 = vmatpush2.bf16.msra.mxu0 0
    %455 = vmatprep.subr.bf16.mxu0 0
    %456 = vmatpush2.bf16.msra.mxu0 0
    %457 = vmatprep.subr.bf16.mxu0 0
    %458 = vmatpush2.bf16.msra.mxu0 0
    %459 = vmatprep.subr.bf16.mxu0 0
    %460 = vmatpush2.bf16.msra.mxu0 0
    %461 = vmatprep.mubr.bf16.mxu0 0
    %462 = vmatmul.mubr.bf16.gmra.mxu0 0
    %v463 = vpop.f32.mrf.mxu0
    %v464 = vadd.f32 0.0, %v463
    %v465 = vpop.f32.mrf.mxu0
    %v466 = vpop.f32.mrf.mxu0
    %v467 = vpop.f32.mrf.mxu0
    %468 = vdwg.mxu0
    %v469 = vadd.f32 %v380, %v464
    %s470 = scalar_lea.vmem [#allocation2], 8
    %v471 = vld [vmem:[%s470] sm:$0xff]
    %v472 = vadd.f32 %v471, %v464
    %v473 = vtanh.pop %v469
    %v474 = vtanh.pop %v472
    %v475 = vpack.c.bf16 %v473, %v473
    %476 = vst [vmem:[#allocation3] sm:$0xf] %v475
    %v477 = vpack.c.bf16 %v474, %v474
    %s478 = scalar_lea.vmem [#allocation3], 4
    %479 = vst [vmem:[%s478] sm:$0xf] %v477
    %s480 = scalar_lea.vmem [#allocation2], 16
    %v481 = vld [vmem:[%s480] sm:$0xff]
    %482 = vmatprep.subr.bf16.mxu0 0
    %483 = vmatpush1.bf16.msra.mxu0 %v420
    %484 = vmatprep.subr.bf16.mxu0 0
    %485 = vmatpush1.bf16.msra.mxu0 %v419
    %486 = vmatprep.subr.bf16.mxu0 0
    %487 = vmatpush1.bf16.msra.mxu0 %v418
    %488 = vmatprep.subr.bf16.mxu0 0
    %489 = vmatpush1.bf16.msra.mxu0 %v417
    %490 = vmatprep.subr.bf16.mxu0 0
    %491 = vmatpush1.bf16.msra.mxu0 %v416
    %492 = vmatprep.subr.bf16.mxu0 0
    %493 = vmatpush1.bf16.msra.mxu0 %v415
    %494 = vmatprep.subr.bf16.mxu0 0
    %495 = vmatpush1.bf16.msra.mxu0 %v414
    %496 = vmatprep.subr.bf16.mxu0 0
    %497 = vmatpush1.bf16.msra.mxu0 %v413
    %498 = vmatprep.subr.bf16.mxu0 0
    %499 = vmatpush2.bf16.msra.mxu0 0
    %500 = vmatprep.subr.bf16.mxu0 0
    %501 = vmatpush2.bf16.msra.mxu0 0
    %502 = vmatprep.subr.bf16.mxu0 0
    %503 = vmatpush2.bf16.msra.mxu0 0
    %504 = vmatprep.subr.bf16.mxu0 0
    %505 = vmatpush2.bf16.msra.mxu0 0
    %506 = vmatprep.subr.bf16.mxu0 0
    %507 = vmatpush2.bf16.msra.mxu0 0
    %508 = vmatprep.subr.bf16.mxu0 0
    %509 = vmatpush2.bf16.msra.mxu0 0
    %510 = vmatprep.subr.bf16.mxu0 0
    %511 = vmatpush2.bf16.msra.mxu0 0
    %512 = vmatprep.subr.bf16.mxu0 0
    %513 = vmatpush2.bf16.msra.mxu0 0
    %514 = vmatprep.mubr.bf16.mxu0 0
    %515 = vmatmul.mubr.bf16.gmra.mxu0 %v475
    %v516 = vpop.f32.mrf.mxu0
    %v517 = vadd.f32 0.0, %v516
    %v518 = vpop.f32.mrf.mxu0
    %v519 = vpop.f32.mrf.mxu0
    %v520 = vpop.f32.mrf.mxu0
    %521 = vdwg.mxu0
    %v522 = vadd.f32 %v481, %v517
    %s523 = scalar_lea.vmem [#allocation2], 24
    %v524 = vld [vmem:[%s523] sm:$0xff]
    %525 = vmatprep.subr.bf16.mxu0 0
    %526 = vmatpush1.bf16.msra.mxu0 %v420
    %527 = vmatprep.subr.bf16.mxu0 0
    %528 = vmatpush1.bf16.msra.mxu0 %v419
    %529 = vmatprep.subr.bf16.mxu0 0
    %530 = vmatpush1.bf16.msra.mxu0 %v418
    %531 = vmatprep.subr.bf16.mxu0 0
    %532 = vmatpush1.bf16.msra.mxu0 %v417
    %533 = vmatprep.subr.bf16.mxu0 0
    %534 = vmatpush1.bf16.msra.mxu0 %v416
    %535 = vmatprep.subr.bf16.mxu0 0
    %536 = vmatpush1.bf16.msra.mxu0 %v415
    %537 = vmatprep.subr.bf16.mxu0 0
    %538 = vmatpush1.bf16.msra.mxu0 %v414
    %539 = vmatprep.subr.bf16.mxu0 0
    %540 = vmatpush1.bf16.msra.mxu0 %v413
    %541 = vmatprep.subr.bf16.mxu0 0
    %542 = vmatpush2.bf16.msra.mxu0 0
    %543 = vmatprep.subr.bf16.mxu0 0
    %544 = vmatpush2.bf16.msra.mxu0 0
    %545 = vmatprep.subr.bf16.mxu0 0
    %546 = vmatpush2.bf16.msra.mxu0 0
    %547 = vmatprep.subr.bf16.mxu0 0
    %548 = vmatpush2.bf16.msra.mxu0 0
    %549 = vmatprep.subr.bf16.mxu0 0
    %550 = vmatpush2.bf16.msra.mxu0 0
    %551 = vmatprep.subr.bf16.mxu0 0
    %552 = vmatpush2.bf16.msra.mxu0 0
    %553 = vmatprep.subr.bf16.mxu0 0
    %554 = vmatpush2.bf16.msra.mxu0 0
    %555 = vmatprep.subr.bf16.mxu0 0
    %556 = vmatpush2.bf16.msra.mxu0 0
    %557 = vmatprep.mubr.bf16.mxu0 0
    %558 = vmatmul.mubr.bf16.gmra.mxu0 %v477
    %v559 = vpop.f32.mrf.mxu0
    %v560 = vadd.f32 0.0, %v559
    %v561 = vpop.f32.mrf.mxu0
    %v562 = vpop.f32.mrf.mxu0
    %v563 = vpop.f32.mrf.mxu0
    %564 = vdwg.mxu0
    %v565 = vadd.f32 %v524, %v560
    %v566 = vtanh.pop %v522
    %v567 = vtanh.pop %v565
    %v568 = vpack.c.bf16 %v566, %v566
    %s569 = scalar_lea.vmem [#allocation3], 8
    %570 = vst [vmem:[%s569] sm:$0xf] %v568
    %v571 = vpack.c.bf16 %v567, %v567
    %s572 = scalar_lea.vmem [#allocation3], 12
    %573 = vst [vmem:[%s572] sm:$0xf] %v571
    %s574 = scalar_lea.vmem [#allocation2], 32
    %v575 = vld [vmem:[%s574] sm:$0xff]
    %576 = vmatprep.subr.bf16.mxu0 0
    %577 = vmatpush1.bf16.msra.mxu0 %v420
    %578 = vmatprep.subr.bf16.mxu0 0
    %579 = vmatpush1.bf16.msra.mxu0 %v419
    %580 = vmatprep.subr.bf16.mxu0 0
    %581 = vmatpush1.bf16.msra.mxu0 %v418
    %582 = vmatprep.subr.bf16.mxu0 0
    %583 = vmatpush1.bf16.msra.mxu0 %v417
    %584 = vmatprep.subr.bf16.mxu0 0
    %585 = vmatpush1.bf16.msra.mxu0 %v416
    %586 = vmatprep.subr.bf16.mxu0 0
    %587 = vmatpush1.bf16.msra.mxu0 %v415
    %588 = vmatprep.subr.bf16.mxu0 0
    %589 = vmatpush1.bf16.msra.mxu0 %v414
    %590 = vmatprep.subr.bf16.mxu0 0
    %591 = vmatpush1.bf16.msra.mxu0 %v413
    %592 = vmatprep.subr.bf16.mxu0 0
    %593 = vmatpush2.bf16.msra.mxu0 0
    %594 = vmatprep.subr.bf16.mxu0 0
    %595 = vmatpush2.bf16.msra.mxu0 0
    %596 = vmatprep.subr.bf16.mxu0 0
    %597 = vmatpush2.bf16.msra.mxu0 0
    %598 = vmatprep.subr.bf16.mxu0 0
    %599 = vmatpush2.bf16.msra.mxu0 0
    %600 = vmatprep.subr.bf16.mxu0 0
    %601 = vmatpush2.bf16.msra.mxu0 0
    %602 = vmatprep.subr.bf16.mxu0 0
    %603 = vmatpush2.bf16.msra.mxu0 0
    %604 = vmatprep.subr.bf16.mxu0 0
    %605 = vmatpush2.bf16.msra.mxu0 0
    %606 = vmatprep.subr.bf16.mxu0 0
    %607 = vmatpush2.bf16.msra.mxu0 0
    %608 = vmatprep.mubr.bf16.mxu0 0
    %609 = vmatmul.mubr.bf16.gmra.mxu0 %v568
    %v610 = vpop.f32.mrf.mxu0
    %v611 = vadd.f32 0.0, %v610
    %v612 = vpop.f32.mrf.mxu0
    %v613 = vpop.f32.mrf.mxu0
    %v614 = vpop.f32.mrf.mxu0
    %615 = vdwg.mxu0
    %v616 = vadd.f32 %v575, %v611
    %s617 = scalar_lea.vmem [#allocation2], 40
    %v618 = vld [vmem:[%s617] sm:$0xff]
    %619 = vmatprep.subr.bf16.mxu0 0
    %620 = vmatpush1.bf16.msra.mxu0 %v420
    %621 = vmatprep.subr.bf16.mxu0 0
    %622 = vmatpush1.bf16.msra.mxu0 %v419
    %623 = vmatprep.subr.bf16.mxu0 0
    %624 = vmatpush1.bf16.msra.mxu0 %v418
    %625 = vmatprep.subr.bf16.mxu0 0
    %626 = vmatpush1.bf16.msra.mxu0 %v417
    %627 = vmatprep.subr.bf16.mxu0 0
    %628 = vmatpush1.bf16.msra.mxu0 %v416
    %629 = vmatprep.subr.bf16.mxu0 0
    %630 = vmatpush1.bf16.msra.mxu0 %v415
    %631 = vmatprep.subr.bf16.mxu0 0
    %632 = vmatpush1.bf16.msra.mxu0 %v414
    %633 = vmatprep.subr.bf16.mxu0 0
    %634 = vmatpush1.bf16.msra.mxu0 %v413
    %635 = vmatprep.subr.bf16.mxu0 0
    %636 = vmatpush2.bf16.msra.mxu0 0
    %637 = vmatprep.subr.bf16.mxu0 0
    %638 = vmatpush2.bf16.msra.mxu0 0
    %639 = vmatprep.subr.bf16.mxu0 0
    %640 = vmatpush2.bf16.msra.mxu0 0
    %641 = vmatprep.subr.bf16.mxu0 0
    %642 = vmatpush2.bf16.msra.mxu0 0
    %643 = vmatprep.subr.bf16.mxu0 0
    %644 = vmatpush2.bf16.msra.mxu0 0
    %645 = vmatprep.subr.bf16.mxu0 0
    %646 = vmatpush2.bf16.msra.mxu0 0
    %647 = vmatprep.subr.bf16.mxu0 0
    %648 = vmatpush2.bf16.msra.mxu0 0
    %649 = vmatprep.subr.bf16.mxu0 0
    %650 = vmatpush2.bf16.msra.mxu0 0
    %651 = vmatprep.mubr.bf16.mxu0 0
    %652 = vmatmul.mubr.bf16.gmra.mxu0 %v571
    %v653 = vpop.f32.mrf.mxu0
    %v654 = vadd.f32 0.0, %v653
    %v655 = vpop.f32.mrf.mxu0
    %v656 = vpop.f32.mrf.mxu0
    %v657 = vpop.f32.mrf.mxu0
    %658 = vdwg.mxu0
    %v659 = vadd.f32 %v618, %v654
    %v660 = vtanh.pop %v616
    %v661 = vtanh.pop %v659
    %v662 = vpack.c.bf16 %v660, %v660
    %s663 = scalar_lea.vmem [#allocation3], 16
    %664 = vst [vmem:[%s663] sm:$0xf] %v662
    %v665 = vpack.c.bf16 %v661, %v661
    %s666 = scalar_lea.vmem [#allocation3], 20
    %667 = vst [vmem:[%s666] sm:$0xf] %v665
    %s668 = scalar_lea.vmem [#allocation2], 48
    %v669 = vld [vmem:[%s668] sm:$0xff]
    %670 = vmatprep.subr.bf16.mxu0 0
    %671 = vmatpush1.bf16.msra.mxu0 %v420
    %672 = vmatprep.subr.bf16.mxu0 0
    %673 = vmatpush1.bf16.msra.mxu0 %v419
    %674 = vmatprep.subr.bf16.mxu0 0
    %675 = vmatpush1.bf16.msra.mxu0 %v418
    %676 = vmatprep.subr.bf16.mxu0 0
    %677 = vmatpush1.bf16.msra.mxu0 %v417
    %678 = vmatprep.subr.bf16.mxu0 0
    %679 = vmatpush1.bf16.msra.mxu0 %v416
    %680 = vmatprep.subr.bf16.mxu0 0
    %681 = vmatpush1.bf16.msra.mxu0 %v415
    %682 = vmatprep.subr.bf16.mxu0 0
    %683 = vmatpush1.bf16.msra.mxu0 %v414
    %684 = vmatprep.subr.bf16.mxu0 0
    %685 = vmatpush1.bf16.msra.mxu0 %v413
    %686 = vmatprep.subr.bf16.mxu0 0
    %687 = vmatpush2.bf16.msra.mxu0 0
    %688 = vmatprep.subr.bf16.mxu0 0
    %689 = vmatpush2.bf16.msra.mxu0 0
    %690 = vmatprep.subr.bf16.mxu0 0
    %691 = vmatpush2.bf16.msra.mxu0 0
    %692 = vmatprep.subr.bf16.mxu0 0
    %693 = vmatpush2.bf16.msra.mxu0 0
    %694 = vmatprep.subr.bf16.mxu0 0
    %695 = vmatpush2.bf16.msra.mxu0 0
    %696 = vmatprep.subr.bf16.mxu0 0
    %697 = vmatpush2.bf16.msra.mxu0 0
    %698 = vmatprep.subr.bf16.mxu0 0
    %699 = vmatpush2.bf16.msra.mxu0 0
    %700 = vmatprep.subr.bf16.mxu0 0
    %701 = vmatpush2.bf16.msra.mxu0 0
    %702 = vmatprep.mubr.bf16.mxu0 0
    %703 = vmatmul.mubr.bf16.gmra.mxu0 %v662
    %v704 = vpop.f32.mrf.mxu0
    %v705 = vadd.f32 0.0, %v704
    %v706 = vpop.f32.mrf.mxu0
    %v707 = vpop.f32.mrf.mxu0
    %v708 = vpop.f32.mrf.mxu0
    %709 = vdwg.mxu0
    %v710 = vadd.f32 %v669, %v705
    %s711 = scalar_lea.vmem [#allocation2], 56
    %v712 = vld [vmem:[%s711] sm:$0xff]
    %713 = vmatprep.subr.bf16.mxu0 0
    %714 = vmatpush1.bf16.msra.mxu0 %v420
    %715 = vmatprep.subr.bf16.mxu0 0
    %716 = vmatpush1.bf16.msra.mxu0 %v419
    %717 = vmatprep.subr.bf16.mxu0 0
    %718 = vmatpush1.bf16.msra.mxu0 %v418
    %719 = vmatprep.subr.bf16.mxu0 0
    %720 = vmatpush1.bf16.msra.mxu0 %v417
    %721 = vmatprep.subr.bf16.mxu0 0
    %722 = vmatpush1.bf16.msra.mxu0 %v416
    %723 = vmatprep.subr.bf16.mxu0 0
    %724 = vmatpush1.bf16.msra.mxu0 %v415
    %725 = vmatprep.subr.bf16.mxu0 0
    %726 = vmatpush1.bf16.msra.mxu0 %v414
    %727 = vmatprep.subr.bf16.mxu0 0
    %728 = vmatpush1.bf16.msra.mxu0 %v413
    %729 = vmatprep.subr.bf16.mxu0 0
    %730 = vmatpush2.bf16.msra.mxu0 0
    %731 = vmatprep.subr.bf16.mxu0 0
    %732 = vmatpush2.bf16.msra.mxu0 0
    %733 = vmatprep.subr.bf16.mxu0 0
    %734 = vmatpush2.bf16.msra.mxu0 0
    %735 = vmatprep.subr.bf16.mxu0 0
    %736 = vmatpush2.bf16.msra.mxu0 0
    %737 = vmatprep.subr.bf16.mxu0 0
    %738 = vmatpush2.bf16.msra.mxu0 0
    %739 = vmatprep.subr.bf16.mxu0 0
    %740 = vmatpush2.bf16.msra.mxu0 0
    %741 = vmatprep.subr.bf16.mxu0 0
    %742 = vmatpush2.bf16.msra.mxu0 0
    %743 = vmatprep.subr.bf16.mxu0 0
    %744 = vmatpush2.bf16.msra.mxu0 0
    %745 = vmatprep.mubr.bf16.mxu0 0
    %746 = vmatmul.mubr.bf16.gmra.mxu0 %v665
    %v747 = vpop.f32.mrf.mxu0
    %v748 = vadd.f32 0.0, %v747
    %v749 = vpop.f32.mrf.mxu0
    %v750 = vpop.f32.mrf.mxu0
    %v751 = vpop.f32.mrf.mxu0
    %752 = vdwg.mxu0
    %v753 = vadd.f32 %v712, %v748
    %v754 = vtanh.pop %v710
    %v755 = vtanh.pop %v753
    %v756 = vpack.c.bf16 %v754, %v754
    %s757 = scalar_lea.vmem [#allocation3], 24
    %758 = vst [vmem:[%s757] sm:$0xf] %v756
    %v759 = vpack.c.bf16 %v755, %v755
    %s760 = scalar_lea.vmem [#allocation3], 28
    %761 = vst [vmem:[%s760] sm:$0xf] %v759
    %s762 = scalar_lea.vmem [#allocation2], 64
    %v763 = vld [vmem:[%s762] sm:$0xff]
    %764 = vmatprep.subr.bf16.mxu0 0
    %765 = vmatpush1.bf16.msra.mxu0 %v420
    %766 = vmatprep.subr.bf16.mxu0 0
    %767 = vmatpush1.bf16.msra.mxu0 %v419
    %768 = vmatprep.subr.bf16.mxu0 0
    %769 = vmatpush1.bf16.msra.mxu0 %v418
    %770 = vmatprep.subr.bf16.mxu0 0
    %771 = vmatpush1.bf16.msra.mxu0 %v417
    %772 = vmatprep.subr.bf16.mxu0 0
    %773 = vmatpush1.bf16.msra.mxu0 %v416
    %774 = vmatprep.subr.bf16.mxu0 0
    %775 = vmatpush1.bf16.msra.mxu0 %v415
    %776 = vmatprep.subr.bf16.mxu0 0
    %777 = vmatpush1.bf16.msra.mxu0 %v414
    %778 = vmatprep.subr.bf16.mxu0 0
    %779 = vmatpush1.bf16.msra.mxu0 %v413
    %780 = vmatprep.subr.bf16.mxu0 0
    %781 = vmatpush2.bf16.msra.mxu0 0
    %782 = vmatprep.subr.bf16.mxu0 0
    %783 = vmatpush2.bf16.msra.mxu0 0
    %784 = vmatprep.subr.bf16.mxu0 0
    %785 = vmatpush2.bf16.msra.mxu0 0
    %786 = vmatprep.subr.bf16.mxu0 0
    %787 = vmatpush2.bf16.msra.mxu0 0
    %788 = vmatprep.subr.bf16.mxu0 0
    %789 = vmatpush2.bf16.msra.mxu0 0
    %790 = vmatprep.subr.bf16.mxu0 0
    %791 = vmatpush2.bf16.msra.mxu0 0
    %792 = vmatprep.subr.bf16.mxu0 0
    %793 = vmatpush2.bf16.msra.mxu0 0
    %794 = vmatprep.subr.bf16.mxu0 0
    %795 = vmatpush2.bf16.msra.mxu0 0
    %796 = vmatprep.mubr.bf16.mxu0 0
    %797 = vmatmul.mubr.bf16.gmra.mxu0 %v756
    %v798 = vpop.f32.mrf.mxu0
    %v799 = vadd.f32 0.0, %v798
    %v800 = vpop.f32.mrf.mxu0
    %v801 = vpop.f32.mrf.mxu0
    %v802 = vpop.f32.mrf.mxu0
    %803 = vdwg.mxu0
    %v804 = vadd.f32 %v763, %v799
    %s805 = scalar_lea.vmem [#allocation2], 72
    %v806 = vld [vmem:[%s805] sm:$0xff]
    %807 = vmatprep.subr.bf16.mxu0 0
    %808 = vmatpush1.bf16.msra.mxu0 %v420
    %809 = vmatprep.subr.bf16.mxu0 0
    %810 = vmatpush1.bf16.msra.mxu0 %v419
    %811 = vmatprep.subr.bf16.mxu0 0
    %812 = vmatpush1.bf16.msra.mxu0 %v418
    %813 = vmatprep.subr.bf16.mxu0 0
    %814 = vmatpush1.bf16.msra.mxu0 %v417
    %815 = vmatprep.subr.bf16.mxu0 0
    %816 = vmatpush1.bf16.msra.mxu0 %v416
    %817 = vmatprep.subr.bf16.mxu0 0
    %818 = vmatpush1.bf16.msra.mxu0 %v415
    %819 = vmatprep.subr.bf16.mxu0 0
    %820 = vmatpush1.bf16.msra.mxu0 %v414
    %821 = vmatprep.subr.bf16.mxu0 0
    %822 = vmatpush1.bf16.msra.mxu0 %v413
    %823 = vmatprep.subr.bf16.mxu0 0
    %824 = vmatpush2.bf16.msra.mxu0 0
    %825 = vmatprep.subr.bf16.mxu0 0
    %826 = vmatpush2.bf16.msra.mxu0 0
    %827 = vmatprep.subr.bf16.mxu0 0
    %828 = vmatpush2.bf16.msra.mxu0 0
    %829 = vmatprep.subr.bf16.mxu0 0
    %830 = vmatpush2.bf16.msra.mxu0 0
    %831 = vmatprep.subr.bf16.mxu0 0
    %832 = vmatpush2.bf16.msra.mxu0 0
    %833 = vmatprep.subr.bf16.mxu0 0
    %834 = vmatpush2.bf16.msra.mxu0 0
    %835 = vmatprep.subr.bf16.mxu0 0
    %836 = vmatpush2.bf16.msra.mxu0 0
    %837 = vmatprep.subr.bf16.mxu0 0
    %838 = vmatpush2.bf16.msra.mxu0 0
    %839 = vmatprep.mubr.bf16.mxu0 0
    %840 = vmatmul.mubr.bf16.gmra.mxu0 %v759
    %v841 = vpop.f32.mrf.mxu0
    %v842 = vadd.f32 0.0, %v841
    %v843 = vpop.f32.mrf.mxu0
    %v844 = vpop.f32.mrf.mxu0
    %v845 = vpop.f32.mrf.mxu0
    %846 = vdwg.mxu0
    %v847 = vadd.f32 %v806, %v842
    %v848 = vtanh.pop %v804
    %v849 = vtanh.pop %v847
    %v850 = vpack.c.bf16 %v848, %v848
    %s851 = scalar_lea.vmem [#allocation3], 32
    %852 = vst [vmem:[%s851] sm:$0xf] %v850
    %v853 = vpack.c.bf16 %v849, %v849
    %s854 = scalar_lea.vmem [#allocation3], 36
    %855 = vst [vmem:[%s854] sm:$0xf] %v853
    %s856 = scalar_lea.vmem [#allocation2], 80
    %v857 = vld [vmem:[%s856] sm:$0xff]
    %858 = vmatprep.subr.bf16.mxu0 0
    %859 = vmatpush1.bf16.msra.mxu0 %v420
    %860 = vmatprep.subr.bf16.mxu0 0
    %861 = vmatpush1.bf16.msra.mxu0 %v419
    %862 = vmatprep.subr.bf16.mxu0 0
    %863 = vmatpush1.bf16.msra.mxu0 %v418
    %864 = vmatprep.subr.bf16.mxu0 0
    %865 = vmatpush1.bf16.msra.mxu0 %v417
    %866 = vmatprep.subr.bf16.mxu0 0
    %867 = vmatpush1.bf16.msra.mxu0 %v416
    %868 = vmatprep.subr.bf16.mxu0 0
    %869 = vmatpush1.bf16.msra.mxu0 %v415
    %870 = vmatprep.subr.bf16.mxu0 0
    %871 = vmatpush1.bf16.msra.mxu0 %v414
    %872 = vmatprep.subr.bf16.mxu0 0
    %873 = vmatpush1.bf16.msra.mxu0 %v413
    %874 = vmatprep.subr.bf16.mxu0 0
    %875 = vmatpush2.bf16.msra.mxu0 0
    %876 = vmatprep.subr.bf16.mxu0 0
    %877 = vmatpush2.bf16.msra.mxu0 0
    %878 = vmatprep.subr.bf16.mxu0 0
    %879 = vmatpush2.bf16.msra.mxu0 0
    %880 = vmatprep.subr.bf16.mxu0 0
    %881 = vmatpush2.bf16.msra.mxu0 0
    %882 = vmatprep.subr.bf16.mxu0 0
    %883 = vmatpush2.bf16.msra.mxu0 0
    %884 = vmatprep.subr.bf16.mxu0 0
    %885 = vmatpush2.bf16.msra.mxu0 0
    %886 = vmatprep.subr.bf16.mxu0 0
    %887 = vmatpush2.bf16.msra.mxu0 0
    %888 = vmatprep.subr.bf16.mxu0 0
    %889 = vmatpush2.bf16.msra.mxu0 0
    %890 = vmatprep.mubr.bf16.mxu0 0
    %891 = vmatmul.mubr.bf16.gmra.mxu0 %v850
    %v892 = vpop.f32.mrf.mxu0
    %v893 = vadd.f32 0.0, %v892
    %v894 = vpop.f32.mrf.mxu0
    %v895 = vpop.f32.mrf.mxu0
    %v896 = vpop.f32.mrf.mxu0
    %897 = vdwg.mxu0
    %v898 = vadd.f32 %v857, %v893
    %s899 = scalar_lea.vmem [#allocation2], 88
    %v900 = vld [vmem:[%s899] sm:$0xff]
    %901 = vmatprep.subr.bf16.mxu0 0
    %902 = vmatpush1.bf16.msra.mxu0 %v420
    %903 = vmatprep.subr.bf16.mxu0 0
    %904 = vmatpush1.bf16.msra.mxu0 %v419
    %905 = vmatprep.subr.bf16.mxu0 0
    %906 = vmatpush1.bf16.msra.mxu0 %v418
    %907 = vmatprep.subr.bf16.mxu0 0
    %908 = vmatpush1.bf16.msra.mxu0 %v417
    %909 = vmatprep.subr.bf16.mxu0 0
    %910 = vmatpush1.bf16.msra.mxu0 %v416
    %911 = vmatprep.subr.bf16.mxu0 0
    %912 = vmatpush1.bf16.msra.mxu0 %v415
    %913 = vmatprep.subr.bf16.mxu0 0
    %914 = vmatpush1.bf16.msra.mxu0 %v414
    %915 = vmatprep.subr.bf16.mxu0 0
    %916 = vmatpush1.bf16.msra.mxu0 %v413
    %917 = vmatprep.subr.bf16.mxu0 0
    %918 = vmatpush2.bf16.msra.mxu0 0
    %919 = vmatprep.subr.bf16.mxu0 0
    %920 = vmatpush2.bf16.msra.mxu0 0
    %921 = vmatprep.subr.bf16.mxu0 0
    %922 = vmatpush2.bf16.msra.mxu0 0
    %923 = vmatprep.subr.bf16.mxu0 0
    %924 = vmatpush2.bf16.msra.mxu0 0
    %925 = vmatprep.subr.bf16.mxu0 0
    %926 = vmatpush2.bf16.msra.mxu0 0
    %927 = vmatprep.subr.bf16.mxu0 0
    %928 = vmatpush2.bf16.msra.mxu0 0
    %929 = vmatprep.subr.bf16.mxu0 0
    %930 = vmatpush2.bf16.msra.mxu0 0
    %931 = vmatprep.subr.bf16.mxu0 0
    %932 = vmatpush2.bf16.msra.mxu0 0
    %933 = vmatprep.mubr.bf16.mxu0 0
    %934 = vmatmul.mubr.bf16.gmra.mxu0 %v853
    %v935 = vpop.f32.mrf.mxu0
    %v936 = vadd.f32 0.0, %v935
    %v937 = vpop.f32.mrf.mxu0
    %v938 = vpop.f32.mrf.mxu0
    %v939 = vpop.f32.mrf.mxu0
    %940 = vdwg.mxu0
    %v941 = vadd.f32 %v900, %v936
    %v942 = vtanh.pop %v898
    %v943 = vtanh.pop %v941
    %v944 = vpack.c.bf16 %v942, %v942
    %s945 = scalar_lea.vmem [#allocation3], 40
    %946 = vst [vmem:[%s945] sm:$0xf] %v944
    %v947 = vpack.c.bf16 %v943, %v943
    %s948 = scalar_lea.vmem [#allocation3], 44
    %949 = vst [vmem:[%s948] sm:$0xf] %v947
    %s950 = scalar_lea.vmem [#allocation2], 96
    %v951 = vld [vmem:[%s950] sm:$0xff]
    %952 = vmatprep.subr.bf16.mxu0 0
    %953 = vmatpush1.bf16.msra.mxu0 %v420
    %954 = vmatprep.subr.bf16.mxu0 0
    %955 = vmatpush1.bf16.msra.mxu0 %v419
    %956 = vmatprep.subr.bf16.mxu0 0
    %957 = vmatpush1.bf16.msra.mxu0 %v418
    %958 = vmatprep.subr.bf16.mxu0 0
    %959 = vmatpush1.bf16.msra.mxu0 %v417
    %960 = vmatprep.subr.bf16.mxu0 0
    %961 = vmatpush1.bf16.msra.mxu0 %v416
    %962 = vmatprep.subr.bf16.mxu0 0
    %963 = vmatpush1.bf16.msra.mxu0 %v415
    %964 = vmatprep.subr.bf16.mxu0 0
    %965 = vmatpush1.bf16.msra.mxu0 %v414
    %966 = vmatprep.subr.bf16.mxu0 0
    %967 = vmatpush1.bf16.msra.mxu0 %v413
    %968 = vmatprep.subr.bf16.mxu0 0
    %969 = vmatpush2.bf16.msra.mxu0 0
    %970 = vmatprep.subr.bf16.mxu0 0
    %971 = vmatpush2.bf16.msra.mxu0 0
    %972 = vmatprep.subr.bf16.mxu0 0
    %973 = vmatpush2.bf16.msra.mxu0 0
    %974 = vmatprep.subr.bf16.mxu0 0
    %975 = vmatpush2.bf16.msra.mxu0 0
    %976 = vmatprep.subr.bf16.mxu0 0
    %977 = vmatpush2.bf16.msra.mxu0 0
    %978 = vmatprep.subr.bf16.mxu0 0
    %979 = vmatpush2.bf16.msra.mxu0 0
    %980 = vmatprep.subr.bf16.mxu0 0
    %981 = vmatpush2.bf16.msra.mxu0 0
    %982 = vmatprep.subr.bf16.mxu0 0
    %983 = vmatpush2.bf16.msra.mxu0 0
    %984 = vmatprep.mubr.bf16.mxu0 0
    %985 = vmatmul.mubr.bf16.gmra.mxu0 %v944
    %v986 = vpop.f32.mrf.mxu0
    %v987 = vadd.f32 0.0, %v986
    %v988 = vpop.f32.mrf.mxu0
    %v989 = vpop.f32.mrf.mxu0
    %v990 = vpop.f32.mrf.mxu0
    %991 = vdwg.mxu0
    %v992 = vadd.f32 %v951, %v987
    %s993 = scalar_lea.vmem [#allocation2], 104
    %v994 = vld [vmem:[%s993] sm:$0xff]
    %995 = vmatprep.subr.bf16.mxu0 0
    %996 = vmatpush1.bf16.msra.mxu0 %v420
    %997 = vmatprep.subr.bf16.mxu0 0
    %998 = vmatpush1.bf16.msra.mxu0 %v419
    %999 = vmatprep.subr.bf16.mxu0 0
    %1000 = vmatpush1.bf16.msra.mxu0 %v418
    %1001 = vmatprep.subr.bf16.mxu0 0
    %1002 = vmatpush1.bf16.msra.mxu0 %v417
    %1003 = vmatprep.subr.bf16.mxu0 0
    %1004 = vmatpush1.bf16.msra.mxu0 %v416
    %1005 = vmatprep.subr.bf16.mxu0 0
    %1006 = vmatpush1.bf16.msra.mxu0 %v415
    %1007 = vmatprep.subr.bf16.mxu0 0
    %1008 = vmatpush1.bf16.msra.mxu0 %v414
    %1009 = vmatprep.subr.bf16.mxu0 0
    %1010 = vmatpush1.bf16.msra.mxu0 %v413
    %1011 = vmatprep.subr.bf16.mxu0 0
    %1012 = vmatpush2.bf16.msra.mxu0 0
    %1013 = vmatprep.subr.bf16.mxu0 0
    %1014 = vmatpush2.bf16.msra.mxu0 0
    %1015 = vmatprep.subr.bf16.mxu0 0
    %1016 = vmatpush2.bf16.msra.mxu0 0
    %1017 = vmatprep.subr.bf16.mxu0 0
    %1018 = vmatpush2.bf16.msra.mxu0 0
    %1019 = vmatprep.subr.bf16.mxu0 0
    %1020 = vmatpush2.bf16.msra.mxu0 0
    %1021 = vmatprep.subr.bf16.mxu0 0
    %1022 = vmatpush2.bf16.msra.mxu0 0
    %1023 = vmatprep.subr.bf16.mxu0 0
    %1024 = vmatpush2.bf16.msra.mxu0 0
    %1025 = vmatprep.subr.bf16.mxu0 0
    %1026 = vmatpush2.bf16.msra.mxu0 0
    %1027 = vmatprep.mubr.bf16.mxu0 0
    %1028 = vmatmul.mubr.bf16.gmra.mxu0 %v947
    %v1029 = vpop.f32.mrf.mxu0
    %v1030 = vadd.f32 0.0, %v1029
    %v1031 = vpop.f32.mrf.mxu0
    %v1032 = vpop.f32.mrf.mxu0
    %v1033 = vpop.f32.mrf.mxu0
    %1034 = vdwg.mxu0
    %v1035 = vadd.f32 %v994, %v1030
    %v1036 = vtanh.pop %v992
    %v1037 = vtanh.pop %v1035
    %v1038 = vpack.c.bf16 %v1036, %v1036
    %s1039 = scalar_lea.vmem [#allocation3], 48
    %1040 = vst [vmem:[%s1039] sm:$0xf] %v1038
    %v1041 = vpack.c.bf16 %v1037, %v1037
    %s1042 = scalar_lea.vmem [#allocation3], 52
    %1043 = vst [vmem:[%s1042] sm:$0xf] %v1041
    %s1044 = scalar_lea.vmem [#allocation2], 112
    %v1045 = vld [vmem:[%s1044] sm:$0xff]
    %1046 = vmatprep.subr.bf16.mxu0 0
    %1047 = vmatpush1.bf16.msra.mxu0 %v420
    %1048 = vmatprep.subr.bf16.mxu0 0
    %1049 = vmatpush1.bf16.msra.mxu0 %v419
    %1050 = vmatprep.subr.bf16.mxu0 0
    %1051 = vmatpush1.bf16.msra.mxu0 %v418
    %1052 = vmatprep.subr.bf16.mxu0 0
    %1053 = vmatpush1.bf16.msra.mxu0 %v417
    %1054 = vmatprep.subr.bf16.mxu0 0
    %1055 = vmatpush1.bf16.msra.mxu0 %v416
    %1056 = vmatprep.subr.bf16.mxu0 0
    %1057 = vmatpush1.bf16.msra.mxu0 %v415
    %1058 = vmatprep.subr.bf16.mxu0 0
    %1059 = vmatpush1.bf16.msra.mxu0 %v414
    %1060 = vmatprep.subr.bf16.mxu0 0
    %1061 = vmatpush1.bf16.msra.mxu0 %v413
    %1062 = vmatprep.subr.bf16.mxu0 0
    %1063 = vmatpush2.bf16.msra.mxu0 0
    %1064 = vmatprep.subr.bf16.mxu0 0
    %1065 = vmatpush2.bf16.msra.mxu0 0
    %1066 = vmatprep.subr.bf16.mxu0 0
    %1067 = vmatpush2.bf16.msra.mxu0 0
    %1068 = vmatprep.subr.bf16.mxu0 0
    %1069 = vmatpush2.bf16.msra.mxu0 0
    %1070 = vmatprep.subr.bf16.mxu0 0
    %1071 = vmatpush2.bf16.msra.mxu0 0
    %1072 = vmatprep.subr.bf16.mxu0 0
    %1073 = vmatpush2.bf16.msra.mxu0 0
    %1074 = vmatprep.subr.bf16.mxu0 0
    %1075 = vmatpush2.bf16.msra.mxu0 0
    %1076 = vmatprep.subr.bf16.mxu0 0
    %1077 = vmatpush2.bf16.msra.mxu0 0
    %1078 = vmatprep.mubr.bf16.mxu0 0
    %1079 = vmatmul.mubr.bf16.gmra.mxu0 %v1038
    %v1080 = vpop.f32.mrf.mxu0
    %v1081 = vadd.f32 0.0, %v1080
    %v1082 = vpop.f32.mrf.mxu0
    %v1083 = vpop.f32.mrf.mxu0
    %v1084 = vpop.f32.mrf.mxu0
    %1085 = vdwg.mxu0
    %v1086 = vadd.f32 %v1045, %v1081
    %s1087 = scalar_lea.vmem [#allocation2], 120
    %v1088 = vld [vmem:[%s1087] sm:$0xff]
    %1089 = vmatprep.subr.bf16.mxu0 0
    %1090 = vmatpush1.bf16.msra.mxu0 %v420
    %1091 = vmatprep.subr.bf16.mxu0 0
    %1092 = vmatpush1.bf16.msra.mxu0 %v419
    %1093 = vmatprep.subr.bf16.mxu0 0
    %1094 = vmatpush1.bf16.msra.mxu0 %v418
    %1095 = vmatprep.subr.bf16.mxu0 0
    %1096 = vmatpush1.bf16.msra.mxu0 %v417
    %1097 = vmatprep.subr.bf16.mxu0 0
    %1098 = vmatpush1.bf16.msra.mxu0 %v416
    %1099 = vmatprep.subr.bf16.mxu0 0
    %1100 = vmatpush1.bf16.msra.mxu0 %v415
    %1101 = vmatprep.subr.bf16.mxu0 0
    %1102 = vmatpush1.bf16.msra.mxu0 %v414
    %1103 = vmatprep.subr.bf16.mxu0 0
    %1104 = vmatpush1.bf16.msra.mxu0 %v413
    %1105 = vmatprep.subr.bf16.mxu0 0
    %1106 = vmatpush2.bf16.msra.mxu0 0
    %1107 = vmatprep.subr.bf16.mxu0 0
    %1108 = vmatpush2.bf16.msra.mxu0 0
    %1109 = vmatprep.subr.bf16.mxu0 0
    %1110 = vmatpush2.bf16.msra.mxu0 0
    %1111 = vmatprep.subr.bf16.mxu0 0
    %1112 = vmatpush2.bf16.msra.mxu0 0
    %1113 = vmatprep.subr.bf16.mxu0 0
    %1114 = vmatpush2.bf16.msra.mxu0 0
    %1115 = vmatprep.subr.bf16.mxu0 0
    %1116 = vmatpush2.bf16.msra.mxu0 0
    %1117 = vmatprep.subr.bf16.mxu0 0
    %1118 = vmatpush2.bf16.msra.mxu0 0
    %1119 = vmatprep.subr.bf16.mxu0 0
    %1120 = vmatpush2.bf16.msra.mxu0 0
    %1121 = vmatprep.mubr.bf16.mxu0 0
    %1122 = vmatmul.mubr.bf16.gmra.mxu0 %v1041
    %v1123 = vpop.f32.mrf.mxu0
    %v1124 = vadd.f32 0.0, %v1123
    %v1125 = vpop.f32.mrf.mxu0
    %v1126 = vpop.f32.mrf.mxu0
    %v1127 = vpop.f32.mrf.mxu0
    %1128 = vdwg.mxu0
    %v1129 = vadd.f32 %v1088, %v1124
    %v1130 = vtanh.pop %v1086
    %v1131 = vtanh.pop %v1129
    %v1132 = vpack.c.bf16 %v1130, %v1130
    %s1133 = scalar_lea.vmem [#allocation3], 56
    %1134 = vst [vmem:[%s1133] sm:$0xf] %v1132
    %v1135 = vpack.c.bf16 %v1131, %v1131
    %s1136 = scalar_lea.vmem [#allocation3], 60
    %1137 = vst [vmem:[%s1136] sm:$0xf] %v1135
    %v1138 = vld [vmem:[#allocation3] sm:$0xf]
    %v1139 = vld [vmem:[#allocation3 + $0x4] sm:$0xf]
    %v1140 = vld [vmem:[#allocation3 + $0x8] sm:$0xf]
    %v1141 = vld [vmem:[#allocation3 + $0xc] sm:$0xf]
    %v1142 = vld [vmem:[#allocation3 + $0x10] sm:$0xf]
    %v1143 = vld [vmem:[#allocation3 + $0x14] sm:$0xf]
    %v1144 = vld [vmem:[#allocation3 + $0x18] sm:$0xf]
    %v1145 = vld [vmem:[#allocation3 + $0x1c] sm:$0xf]
    %v1146 = vld [vmem:[#allocation3 + $0x20] sm:$0xf]
    %v1147 = vld [vmem:[#allocation3 + $0x24] sm:$0xf]
    %v1148 = vld [vmem:[#allocation3 + $0x28] sm:$0xf]
    %v1149 = vld [vmem:[#allocation3 + $0x2c] sm:$0xf]
    %v1150 = vld [vmem:[#allocation3 + $0x30] sm:$0xf]
    %v1151 = vld [vmem:[#allocation3 + $0x34] sm:$0xf]
    %v1152 = vld [vmem:[#allocation3 + $0x38] sm:$0xf]
    %v1153 = vld [vmem:[#allocation3 + $0x3c] sm:$0xf]
    %v1154 = vld [vmem:[#allocation10] sm:$0xf]
    %v1155 = vld [vmem:[#allocation10 + $0x4] sm:$0xf]
    %v1156 = vld [vmem:[#allocation10 + $0x8] sm:$0xf]
    %v1157 = vld [vmem:[#allocation10 + $0xc] sm:$0xf]
    %v1158 = vld [vmem:[#allocation10 + $0x10] sm:$0xf]
    %v1159 = vld [vmem:[#allocation10 + $0x14] sm:$0xf]
    %v1160 = vld [vmem:[#allocation10 + $0x18] sm:$0xf]
    %v1161 = vld [vmem:[#allocation10 + $0x1c] sm:$0xf]
    %v1162 = vld [vmem:[#allocation10 + $0x20] sm:$0xf]
    %v1163 = vld [vmem:[#allocation10 + $0x24] sm:$0xf]
    %v1164 = vld [vmem:[#allocation10 + $0x28] sm:$0xf]
    %v1165 = vld [vmem:[#allocation10 + $0x2c] sm:$0xf]
    %v1166 = vld [vmem:[#allocation10 + $0x30] sm:$0xf]
    %v1167 = vld [vmem:[#allocation10 + $0x34] sm:$0xf]
    %v1168 = vld [vmem:[#allocation10 + $0x38] sm:$0xf]
    %v1169 = vld [vmem:[#allocation10 + $0x3c] sm:$0xf]
    %v1170 = vld [vmem:[%s6] sm:$0x1]
    %v1172 = vlaneseq
    %v1173 = vshrl.u32 %v1172, 7
    %v1174 = vsub.s32 0, %v1173
    %v1175 = vrot.slane %v1170, %v1174
    %v1193 = vunpack.c.l.b16 %v1138
    %v1194 = vunpack.c.l.b16 %v1139
    %v1195 = vunpack.c.l.b16 %v1140
    %v1196 = vunpack.c.l.b16 %v1141
    %v1197 = vunpack.c.l.b16 %v1142
    %v1198 = vunpack.c.l.b16 %v1143
    %v1199 = vunpack.c.l.b16 %v1144
    %v1200 = vunpack.c.l.b16 %v1145
    %v1201 = vunpack.c.l.b16 %v1146
    %v1202 = vunpack.c.l.b16 %v1147
    %v1203 = vunpack.c.l.b16 %v1148
    %v1204 = vunpack.c.l.b16 %v1149
    %v1205 = vunpack.c.l.b16 %v1150
    %v1206 = vunpack.c.l.b16 %v1151
    %v1207 = vunpack.c.l.b16 %v1152
    %v1208 = vunpack.c.l.b16 %v1153
    %v1209 = vpack.c.b16 %v1194, %v1193
    %v1210 = vpack.c.b16 %v1196, %v1195
    %v1211 = vpack.c.b16 %v1198, %v1197
    %v1212 = vpack.c.b16 %v1200, %v1199
    %v1213 = vpack.c.b16 %v1202, %v1201
    %v1214 = vpack.c.b16 %v1204, %v1203
    %v1215 = vpack.c.b16 %v1206, %v1205
    %v1216 = vpack.c.b16 %v1208, %v1207
    %v1241 = vunpack.c.l.b16 %v1154
    %v1242 = vunpack.c.l.b16 %v1155
    %v1243 = vunpack.c.l.b16 %v1156
    %v1244 = vunpack.c.l.b16 %v1157
    %v1245 = vunpack.c.l.b16 %v1158
    %v1246 = vunpack.c.l.b16 %v1159
    %v1247 = vunpack.c.l.b16 %v1160
    %v1248 = vunpack.c.l.b16 %v1161
    %v1249 = vunpack.c.l.b16 %v1162
    %v1250 = vunpack.c.l.b16 %v1163
    %v1251 = vunpack.c.l.b16 %v1164
    %v1252 = vunpack.c.l.b16 %v1165
    %v1253 = vunpack.c.l.b16 %v1166
    %v1254 = vunpack.c.l.b16 %v1167
    %v1255 = vunpack.c.l.b16 %v1168
    %v1256 = vunpack.c.l.b16 %v1169
    %v1257 = vpack.c.b16 %v1242, %v1241
    %v1258 = vpack.c.b16 %v1244, %v1243
    %v1259 = vpack.c.b16 %v1246, %v1245
    %v1260 = vpack.c.b16 %v1248, %v1247
    %v1261 = vpack.c.b16 %v1250, %v1249
    %v1262 = vpack.c.b16 %v1252, %v1251
    %v1263 = vpack.c.b16 %v1254, %v1253
    %v1264 = vpack.c.b16 %v1256, %v1255
    %1273 = vmatprep.subr.bf16.mxu0 0
    %1274 = vmatpush1.bf16.msra.mxu0 %v1264
    %1275 = vmatprep.subr.bf16.mxu0 0
    %1276 = vmatpush1.bf16.msra.mxu0 %v1263
    %1277 = vmatprep.subr.bf16.mxu0 0
    %1278 = vmatpush1.bf16.msra.mxu0 %v1262
    %1279 = vmatprep.subr.bf16.mxu0 0
    %1280 = vmatpush1.bf16.msra.mxu0 %v1261
    %1281 = vmatprep.subr.bf16.mxu0 0
    %1282 = vmatpush1.bf16.msra.mxu0 %v1260
    %1283 = vmatprep.subr.bf16.mxu0 0
    %1284 = vmatpush1.bf16.msra.mxu0 %v1259
    %1285 = vmatprep.subr.bf16.mxu0 0
    %1286 = vmatpush1.bf16.msra.mxu0 %v1258
    %1287 = vmatprep.subr.bf16.mxu0 0
    %1288 = vmatpush1.bf16.msra.mxu0 %v1257
    %1289 = vmatprep.subr.bf16.mxu0 0
    %1290 = vmatpush2.bf16.msra.mxu0 0
    %1291 = vmatprep.subr.bf16.mxu0 0
    %1292 = vmatpush2.bf16.msra.mxu0 0
    %1293 = vmatprep.subr.bf16.mxu0 0
    %1294 = vmatpush2.bf16.msra.mxu0 0
    %1295 = vmatprep.subr.bf16.mxu0 0
    %1296 = vmatpush2.bf16.msra.mxu0 0
    %1297 = vmatprep.subr.bf16.mxu0 0
    %1298 = vmatpush2.bf16.msra.mxu0 0
    %1299 = vmatprep.subr.bf16.mxu0 0
    %1300 = vmatpush2.bf16.msra.mxu0 0
    %1301 = vmatprep.subr.bf16.mxu0 0
    %1302 = vmatpush2.bf16.msra.mxu0 0
    %1303 = vmatprep.subr.bf16.mxu0 0
    %1304 = vmatpush2.bf16.msra.mxu0 0
    %1305 = vmatprep.mubr.bf16.mxu0 0
    %1306 = vmatmul.mubr.bf16.gmra.mxu0 %v1209
    %v1307 = vpop.f32.mrf.mxu0
    %v1308 = vadd.f32 %v1175, %v1307
    %v1309 = vpop.f32.mrf.mxu0
    %v1310 = vpop.f32.mrf.mxu0
    %v1311 = vadd.f32 %v1175, %v1310
    %v1312 = vpop.f32.mrf.mxu0
    %1313 = vmatprep.mubr.bf16.mxu0 0
    %1314 = vmatmul.mubr.bf16.gmra.mxu0 %v1210
    %v1315 = vpop.f32.mrf.mxu0
    %v1316 = vadd.f32 %v1175, %v1315
    %v1317 = vpop.f32.mrf.mxu0
    %v1318 = vpop.f32.mrf.mxu0
    %v1319 = vadd.f32 %v1175, %v1318
    %v1320 = vpop.f32.mrf.mxu0
    %1321 = vmatprep.mubr.bf16.mxu0 0
    %1322 = vmatmul.mubr.bf16.gmra.mxu0 %v1211
    %v1323 = vpop.f32.mrf.mxu0
    %v1324 = vadd.f32 %v1175, %v1323
    %v1325 = vpop.f32.mrf.mxu0
    %v1326 = vpop.f32.mrf.mxu0
    %v1327 = vadd.f32 %v1175, %v1326
    %v1328 = vpop.f32.mrf.mxu0
    %1329 = vmatprep.mubr.bf16.mxu0 0
    %1330 = vmatmul.mubr.bf16.gmra.mxu0 %v1212
    %v1331 = vpop.f32.mrf.mxu0
    %v1332 = vadd.f32 %v1175, %v1331
    %v1333 = vpop.f32.mrf.mxu0
    %v1334 = vpop.f32.mrf.mxu0
    %v1335 = vadd.f32 %v1175, %v1334
    %v1336 = vpop.f32.mrf.mxu0
    %1337 = vmatprep.mubr.bf16.mxu0 0
    %1338 = vmatmul.mubr.bf16.gmra.mxu0 %v1213
    %v1339 = vpop.f32.mrf.mxu0
    %v1340 = vadd.f32 %v1175, %v1339
    %v1341 = vpop.f32.mrf.mxu0
    %v1342 = vpop.f32.mrf.mxu0
    %v1343 = vadd.f32 %v1175, %v1342
    %v1344 = vpop.f32.mrf.mxu0
    %1345 = vmatprep.mubr.bf16.mxu0 0
    %1346 = vmatmul.mubr.bf16.gmra.mxu0 %v1214
    %v1347 = vpop.f32.mrf.mxu0
    %v1348 = vadd.f32 %v1175, %v1347
    %v1349 = vpop.f32.mrf.mxu0
    %v1350 = vpop.f32.mrf.mxu0
    %v1351 = vadd.f32 %v1175, %v1350
    %v1352 = vpop.f32.mrf.mxu0
    %1353 = vmatprep.mubr.bf16.mxu0 0
    %1354 = vmatmul.mubr.bf16.gmra.mxu0 %v1215
    %v1355 = vpop.f32.mrf.mxu0
    %v1356 = vadd.f32 %v1175, %v1355
    %v1357 = vpop.f32.mrf.mxu0
    %v1358 = vpop.f32.mrf.mxu0
    %v1359 = vadd.f32 %v1175, %v1358
    %v1360 = vpop.f32.mrf.mxu0
    %1361 = vmatprep.mubr.bf16.mxu0 0
    %1362 = vmatmul.mubr.bf16.gmra.mxu0 %v1216
    %v1363 = vpop.f32.mrf.mxu0
    %v1364 = vadd.f32 %v1175, %v1363
    %v1365 = vpop.f32.mrf.mxu0
    %v1366 = vpop.f32.mrf.mxu0
    %v1367 = vadd.f32 %v1175, %v1366
    %v1368 = vpop.f32.mrf.mxu0
    %1369 = vdwg.mxu0
    %1370 = vst [vmem:[#allocation2] sm:$0xff] %v1308
    %1371 = vst [vmem:[#allocation2 + $0x8] sm:$0xff] %v1311
    %1372 = vst [vmem:[#allocation2 + $0x10] sm:$0xff] %v1316
    %1373 = vst [vmem:[#allocation2 + $0x18] sm:$0xff] %v1319
    %1374 = vst [vmem:[#allocation2 + $0x20] sm:$0xff] %v1324
    %1375 = vst [vmem:[#allocation2 + $0x28] sm:$0xff] %v1327
    %1376 = vst [vmem:[#allocation2 + $0x30] sm:$0xff] %v1332
    %1377 = vst [vmem:[#allocation2 + $0x38] sm:$0xff] %v1335
    %1378 = vst [vmem:[#allocation2 + $0x40] sm:$0xff] %v1340
    %1379 = vst [vmem:[#allocation2 + $0x48] sm:$0xff] %v1343
    %1380 = vst [vmem:[#allocation2 + $0x50] sm:$0xff] %v1348
    %1381 = vst [vmem:[#allocation2 + $0x58] sm:$0xff] %v1351
    %1382 = vst [vmem:[#allocation2 + $0x60] sm:$0xff] %v1356
    %1383 = vst [vmem:[#allocation2 + $0x68] sm:$0xff] %v1359
    %1384 = vst [vmem:[#allocation2 + $0x70] sm:$0xff] %v1364
    %1385 = vst [vmem:[#allocation2 + $0x78] sm:$0xff] %v1367
    %v1386 = vld [vmem:[#allocation12] sm:$0xf]
    %v1387 = vld [vmem:[#allocation12 + $0x4] sm:$0xf]
    %v1388 = vld [vmem:[#allocation12 + $0x8] sm:$0xf]
    %v1389 = vld [vmem:[#allocation12 + $0xc] sm:$0xf]
    %v1390 = vld [vmem:[#allocation12 + $0x10] sm:$0xf]
    %v1391 = vld [vmem:[#allocation12 + $0x14] sm:$0xf]
    %v1392 = vld [vmem:[#allocation12 + $0x18] sm:$0xf]
    %v1393 = vld [vmem:[#allocation12 + $0x1c] sm:$0xf]
    %v1394 = vld [vmem:[#allocation12 + $0x20] sm:$0xf]
    %v1395 = vld [vmem:[#allocation12 + $0x24] sm:$0xf]
    %v1396 = vld [vmem:[#allocation12 + $0x28] sm:$0xf]
    %v1397 = vld [vmem:[#allocation12 + $0x2c] sm:$0xf]
    %v1398 = vld [vmem:[#allocation12 + $0x30] sm:$0xf]
    %v1399 = vld [vmem:[#allocation12 + $0x34] sm:$0xf]
    %v1400 = vld [vmem:[#allocation12 + $0x38] sm:$0xf]
    %v1401 = vld [vmem:[#allocation12 + $0x3c] sm:$0xf]
    %v1402 = vld [vmem:[#allocation2] sm:$0xff]
    %v1419 = vunpack.c.l.b16 %v1386
    %v1420 = vunpack.c.l.b16 %v1387
    %v1421 = vunpack.c.l.b16 %v1388
    %v1422 = vunpack.c.l.b16 %v1389
    %v1423 = vunpack.c.l.b16 %v1390
    %v1424 = vunpack.c.l.b16 %v1391
    %v1425 = vunpack.c.l.b16 %v1392
    %v1426 = vunpack.c.l.b16 %v1393
    %v1427 = vunpack.c.l.b16 %v1394
    %v1428 = vunpack.c.l.b16 %v1395
    %v1429 = vunpack.c.l.b16 %v1396
    %v1430 = vunpack.c.l.b16 %v1397
    %v1431 = vunpack.c.l.b16 %v1398
    %v1432 = vunpack.c.l.b16 %v1399
    %v1433 = vunpack.c.l.b16 %v1400
    %v1434 = vunpack.c.l.b16 %v1401
    %v1435 = vpack.c.b16 %v1420, %v1419
    %v1436 = vpack.c.b16 %v1422, %v1421
    %v1437 = vpack.c.b16 %v1424, %v1423
    %v1438 = vpack.c.b16 %v1426, %v1425
    %v1439 = vpack.c.b16 %v1428, %v1427
    %v1440 = vpack.c.b16 %v1430, %v1429
    %v1441 = vpack.c.b16 %v1432, %v1431
    %v1442 = vpack.c.b16 %v1434, %v1433
    %1451 = vmatprep.subr.bf16.mxu0 0
    %1452 = vmatpush1.bf16.msra.mxu0 %v1442
    %1453 = vmatprep.subr.bf16.mxu0 0
    %1454 = vmatpush1.bf16.msra.mxu0 %v1441
    %1455 = vmatprep.subr.bf16.mxu0 0
    %1456 = vmatpush1.bf16.msra.mxu0 %v1440
    %1457 = vmatprep.subr.bf16.mxu0 0
    %1458 = vmatpush1.bf16.msra.mxu0 %v1439
    %1459 = vmatprep.subr.bf16.mxu0 0
    %1460 = vmatpush1.bf16.msra.mxu0 %v1438
    %1461 = vmatprep.subr.bf16.mxu0 0
    %1462 = vmatpush1.bf16.msra.mxu0 %v1437
    %1463 = vmatprep.subr.bf16.mxu0 0
    %1464 = vmatpush1.bf16.msra.mxu0 %v1436
    %1465 = vmatprep.subr.bf16.mxu0 0
    %1466 = vmatpush1.bf16.msra.mxu0 %v1435
    %1467 = vmatprep.subr.bf16.mxu0 0
    %1468 = vmatpush2.bf16.msra.mxu0 0
    %1469 = vmatprep.subr.bf16.mxu0 0
    %1470 = vmatpush2.bf16.msra.mxu0 0
    %1471 = vmatprep.subr.bf16.mxu0 0
    %1472 = vmatpush2.bf16.msra.mxu0 0
    %1473 = vmatprep.subr.bf16.mxu0 0
    %1474 = vmatpush2.bf16.msra.mxu0 0
    %1475 = vmatprep.subr.bf16.mxu0 0
    %1476 = vmatpush2.bf16.msra.mxu0 0
    %1477 = vmatprep.subr.bf16.mxu0 0
    %1478 = vmatpush2.bf16.msra.mxu0 0
    %1479 = vmatprep.subr.bf16.mxu0 0
    %1480 = vmatpush2.bf16.msra.mxu0 0
    %1481 = vmatprep.subr.bf16.mxu0 0
    %1482 = vmatpush2.bf16.msra.mxu0 0
    %1483 = vmatprep.mubr.bf16.mxu0 0
    %1484 = vmatmul.mubr.bf16.gmra.mxu0 0
    %v1485 = vpop.f32.mrf.mxu0
    %v1486 = vadd.f32 0.0, %v1485
    %v1487 = vpop.f32.mrf.mxu0
    %v1488 = vpop.f32.mrf.mxu0
    %v1489 = vpop.f32.mrf.mxu0
    %1490 = vdwg.mxu0
    %v1491 = vadd.f32 %v1402, %v1486
    %v1492 = vld [vmem:[%s470] sm:$0xff]
    %v1493 = vadd.f32 %v1492, %v1486
    %v1494 = vtanh.pop %v1491
    %v1495 = vtanh.pop %v1493
    %v1496 = vpack.c.bf16 %v1494, %v1494
    %1497 = vst [vmem:[#allocation3] sm:$0xf] %v1496
    %v1498 = vpack.c.bf16 %v1495, %v1495
    %1499 = vst [vmem:[%s478] sm:$0xf] %v1498
    %v1500 = vld [vmem:[%s480] sm:$0xff]
    %1501 = vmatprep.subr.bf16.mxu0 0
    %1502 = vmatpush1.bf16.msra.mxu0 %v1442
    %1503 = vmatprep.subr.bf16.mxu0 0
    %1504 = vmatpush1.bf16.msra.mxu0 %v1441
    %1505 = vmatprep.subr.bf16.mxu0 0
    %1506 = vmatpush1.bf16.msra.mxu0 %v1440
    %1507 = vmatprep.subr.bf16.mxu0 0
    %1508 = vmatpush1.bf16.msra.mxu0 %v1439
    %1509 = vmatprep.subr.bf16.mxu0 0
    %1510 = vmatpush1.bf16.msra.mxu0 %v1438
    %1511 = vmatprep.subr.bf16.mxu0 0
    %1512 = vmatpush1.bf16.msra.mxu0 %v1437
    %1513 = vmatprep.subr.bf16.mxu0 0
    %1514 = vmatpush1.bf16.msra.mxu0 %v1436
    %1515 = vmatprep.subr.bf16.mxu0 0
    %1516 = vmatpush1.bf16.msra.mxu0 %v1435
    %1517 = vmatprep.subr.bf16.mxu0 0
    %1518 = vmatpush2.bf16.msra.mxu0 0
    %1519 = vmatprep.subr.bf16.mxu0 0
    %1520 = vmatpush2.bf16.msra.mxu0 0
    %1521 = vmatprep.subr.bf16.mxu0 0
    %1522 = vmatpush2.bf16.msra.mxu0 0
    %1523 = vmatprep.subr.bf16.mxu0 0
    %1524 = vmatpush2.bf16.msra.mxu0 0
    %1525 = vmatprep.subr.bf16.mxu0 0
    %1526 = vmatpush2.bf16.msra.mxu0 0
    %1527 = vmatprep.subr.bf16.mxu0 0
    %1528 = vmatpush2.bf16.msra.mxu0 0
    %1529 = vmatprep.subr.bf16.mxu0 0
    %1530 = vmatpush2.bf16.msra.mxu0 0
    %1531 = vmatprep.subr.bf16.mxu0 0
    %1532 = vmatpush2.bf16.msra.mxu0 0
    %1533 = vmatprep.mubr.bf16.mxu0 0
    %1534 = vmatmul.mubr.bf16.gmra.mxu0 %v1496
    %v1535 = vpop.f32.mrf.mxu0
    %v1536 = vadd.f32 0.0, %v1535
    %v1537 = vpop.f32.mrf.mxu0
    %v1538 = vpop.f32.mrf.mxu0
    %v1539 = vpop.f32.mrf.mxu0
    %1540 = vdwg.mxu0
    %v1541 = vadd.f32 %v1500, %v1536
    %v1542 = vld [vmem:[%s523] sm:$0xff]
    %1543 = vmatprep.subr.bf16.mxu0 0
    %1544 = vmatpush1.bf16.msra.mxu0 %v1442
    %1545 = vmatprep.subr.bf16.mxu0 0
    %1546 = vmatpush1.bf16.msra.mxu0 %v1441
    %1547 = vmatprep.subr.bf16.mxu0 0
    %1548 = vmatpush1.bf16.msra.mxu0 %v1440
    %1549 = vmatprep.subr.bf16.mxu0 0
    %1550 = vmatpush1.bf16.msra.mxu0 %v1439
    %1551 = vmatprep.subr.bf16.mxu0 0
    %1552 = vmatpush1.bf16.msra.mxu0 %v1438
    %1553 = vmatprep.subr.bf16.mxu0 0
    %1554 = vmatpush1.bf16.msra.mxu0 %v1437
    %1555 = vmatprep.subr.bf16.mxu0 0
    %1556 = vmatpush1.bf16.msra.mxu0 %v1436
    %1557 = vmatprep.subr.bf16.mxu0 0
    %1558 = vmatpush1.bf16.msra.mxu0 %v1435
    %1559 = vmatprep.subr.bf16.mxu0 0
    %1560 = vmatpush2.bf16.msra.mxu0 0
    %1561 = vmatprep.subr.bf16.mxu0 0
    %1562 = vmatpush2.bf16.msra.mxu0 0
    %1563 = vmatprep.subr.bf16.mxu0 0
    %1564 = vmatpush2.bf16.msra.mxu0 0
    %1565 = vmatprep.subr.bf16.mxu0 0
    %1566 = vmatpush2.bf16.msra.mxu0 0
    %1567 = vmatprep.subr.bf16.mxu0 0
    %1568 = vmatpush2.bf16.msra.mxu0 0
    %1569 = vmatprep.subr.bf16.mxu0 0
    %1570 = vmatpush2.bf16.msra.mxu0 0
    %1571 = vmatprep.subr.bf16.mxu0 0
    %1572 = vmatpush2.bf16.msra.mxu0 0
    %1573 = vmatprep.subr.bf16.mxu0 0
    %1574 = vmatpush2.bf16.msra.mxu0 0
    %1575 = vmatprep.mubr.bf16.mxu0 0
    %1576 = vmatmul.mubr.bf16.gmra.mxu0 %v1498
    %v1577 = vpop.f32.mrf.mxu0
    %v1578 = vadd.f32 0.0, %v1577
    %v1579 = vpop.f32.mrf.mxu0
    %v1580 = vpop.f32.mrf.mxu0
    %v1581 = vpop.f32.mrf.mxu0
    %1582 = vdwg.mxu0
    %v1583 = vadd.f32 %v1542, %v1578
    %v1584 = vtanh.pop %v1541
    %v1585 = vtanh.pop %v1583
    %v1586 = vpack.c.bf16 %v1584, %v1584
    %1587 = vst [vmem:[%s569] sm:$0xf] %v1586
    %v1588 = vpack.c.bf16 %v1585, %v1585
    %1589 = vst [vmem:[%s572] sm:$0xf] %v1588
    %v1590 = vld [vmem:[%s574] sm:$0xff]
    %1591 = vmatprep.subr.bf16.mxu0 0
    %1592 = vmatpush1.bf16.msra.mxu0 %v1442
    %1593 = vmatprep.subr.bf16.mxu0 0
    %1594 = vmatpush1.bf16.msra.mxu0 %v1441
    %1595 = vmatprep.subr.bf16.mxu0 0
    %1596 = vmatpush1.bf16.msra.mxu0 %v1440
    %1597 = vmatprep.subr.bf16.mxu0 0
    %1598 = vmatpush1.bf16.msra.mxu0 %v1439
    %1599 = vmatprep.subr.bf16.mxu0 0
    %1600 = vmatpush1.bf16.msra.mxu0 %v1438
    %1601 = vmatprep.subr.bf16.mxu0 0
    %1602 = vmatpush1.bf16.msra.mxu0 %v1437
    %1603 = vmatprep.subr.bf16.mxu0 0
    %1604 = vmatpush1.bf16.msra.mxu0 %v1436
    %1605 = vmatprep.subr.bf16.mxu0 0
    %1606 = vmatpush1.bf16.msra.mxu0 %v1435
    %1607 = vmatprep.subr.bf16.mxu0 0
    %1608 = vmatpush2.bf16.msra.mxu0 0
    %1609 = vmatprep.subr.bf16.mxu0 0
    %1610 = vmatpush2.bf16.msra.mxu0 0
    %1611 = vmatprep.subr.bf16.mxu0 0
    %1612 = vmatpush2.bf16.msra.mxu0 0
    %1613 = vmatprep.subr.bf16.mxu0 0
    %1614 = vmatpush2.bf16.msra.mxu0 0
    %1615 = vmatprep.subr.bf16.mxu0 0
    %1616 = vmatpush2.bf16.msra.mxu0 0
    %1617 = vmatprep.subr.bf16.mxu0 0
    %1618 = vmatpush2.bf16.msra.mxu0 0
    %1619 = vmatprep.subr.bf16.mxu0 0
    %1620 = vmatpush2.bf16.msra.mxu0 0
    %1621 = vmatprep.subr.bf16.mxu0 0
    %1622 = vmatpush2.bf16.msra.mxu0 0
    %1623 = vmatprep.mubr.bf16.mxu0 0
    %1624 = vmatmul.mubr.bf16.gmra.mxu0 %v1586
    %v1625 = vpop.f32.mrf.mxu0
    %v1626 = vadd.f32 0.0, %v1625
    %v1627 = vpop.f32.mrf.mxu0
    %v1628 = vpop.f32.mrf.mxu0
    %v1629 = vpop.f32.mrf.mxu0
    %1630 = vdwg.mxu0
    %v1631 = vadd.f32 %v1590, %v1626
    %v1632 = vld [vmem:[%s617] sm:$0xff]
    %1633 = vmatprep.subr.bf16.mxu0 0
    %1634 = vmatpush1.bf16.msra.mxu0 %v1442
    %1635 = vmatprep.subr.bf16.mxu0 0
    %1636 = vmatpush1.bf16.msra.mxu0 %v1441
    %1637 = vmatprep.subr.bf16.mxu0 0
    %1638 = vmatpush1.bf16.msra.mxu0 %v1440
    %1639 = vmatprep.subr.bf16.mxu0 0
    %1640 = vmatpush1.bf16.msra.mxu0 %v1439
    %1641 = vmatprep.subr.bf16.mxu0 0
    %1642 = vmatpush1.bf16.msra.mxu0 %v1438
    %1643 = vmatprep.subr.bf16.mxu0 0
    %1644 = vmatpush1.bf16.msra.mxu0 %v1437
    %1645 = vmatprep.subr.bf16.mxu0 0
    %1646 = vmatpush1.bf16.msra.mxu0 %v1436
    %1647 = vmatprep.subr.bf16.mxu0 0
    %1648 = vmatpush1.bf16.msra.mxu0 %v1435
    %1649 = vmatprep.subr.bf16.mxu0 0
    %1650 = vmatpush2.bf16.msra.mxu0 0
    %1651 = vmatprep.subr.bf16.mxu0 0
    %1652 = vmatpush2.bf16.msra.mxu0 0
    %1653 = vmatprep.subr.bf16.mxu0 0
    %1654 = vmatpush2.bf16.msra.mxu0 0
    %1655 = vmatprep.subr.bf16.mxu0 0
    %1656 = vmatpush2.bf16.msra.mxu0 0
    %1657 = vmatprep.subr.bf16.mxu0 0
    %1658 = vmatpush2.bf16.msra.mxu0 0
    %1659 = vmatprep.subr.bf16.mxu0 0
    %1660 = vmatpush2.bf16.msra.mxu0 0
    %1661 = vmatprep.subr.bf16.mxu0 0
    %1662 = vmatpush2.bf16.msra.mxu0 0
    %1663 = vmatprep.subr.bf16.mxu0 0
    %1664 = vmatpush2.bf16.msra.mxu0 0
    %1665 = vmatprep.mubr.bf16.mxu0 0
    %1666 = vmatmul.mubr.bf16.gmra.mxu0 %v1588
    %v1667 = vpop.f32.mrf.mxu0
    %v1668 = vadd.f32 0.0, %v1667
    %v1669 = vpop.f32.mrf.mxu0
    %v1670 = vpop.f32.mrf.mxu0
    %v1671 = vpop.f32.mrf.mxu0
    %1672 = vdwg.mxu0
    %v1673 = vadd.f32 %v1632, %v1668
    %v1674 = vtanh.pop %v1631
    %v1675 = vtanh.pop %v1673
    %v1676 = vpack.c.bf16 %v1674, %v1674
    %1677 = vst [vmem:[%s663] sm:$0xf] %v1676
    %v1678 = vpack.c.bf16 %v1675, %v1675
    %1679 = vst [vmem:[%s666] sm:$0xf] %v1678
    %v1680 = vld [vmem:[%s668] sm:$0xff]
    %1681 = vmatprep.subr.bf16.mxu0 0
    %1682 = vmatpush1.bf16.msra.mxu0 %v1442
    %1683 = vmatprep.subr.bf16.mxu0 0
    %1684 = vmatpush1.bf16.msra.mxu0 %v1441
    %1685 = vmatprep.subr.bf16.mxu0 0
    %1686 = vmatpush1.bf16.msra.mxu0 %v1440
    %1687 = vmatprep.subr.bf16.mxu0 0
    %1688 = vmatpush1.bf16.msra.mxu0 %v1439
    %1689 = vmatprep.subr.bf16.mxu0 0
    %1690 = vmatpush1.bf16.msra.mxu0 %v1438
    %1691 = vmatprep.subr.bf16.mxu0 0
    %1692 = vmatpush1.bf16.msra.mxu0 %v1437
    %1693 = vmatprep.subr.bf16.mxu0 0
    %1694 = vmatpush1.bf16.msra.mxu0 %v1436
    %1695 = vmatprep.subr.bf16.mxu0 0
    %1696 = vmatpush1.bf16.msra.mxu0 %v1435
    %1697 = vmatprep.subr.bf16.mxu0 0
    %1698 = vmatpush2.bf16.msra.mxu0 0
    %1699 = vmatprep.subr.bf16.mxu0 0
    %1700 = vmatpush2.bf16.msra.mxu0 0
    %1701 = vmatprep.subr.bf16.mxu0 0
    %1702 = vmatpush2.bf16.msra.mxu0 0
    %1703 = vmatprep.subr.bf16.mxu0 0
    %1704 = vmatpush2.bf16.msra.mxu0 0
    %1705 = vmatprep.subr.bf16.mxu0 0
    %1706 = vmatpush2.bf16.msra.mxu0 0
    %1707 = vmatprep.subr.bf16.mxu0 0
    %1708 = vmatpush2.bf16.msra.mxu0 0
    %1709 = vmatprep.subr.bf16.mxu0 0
    %1710 = vmatpush2.bf16.msra.mxu0 0
    %1711 = vmatprep.subr.bf16.mxu0 0
    %1712 = vmatpush2.bf16.msra.mxu0 0
    %1713 = vmatprep.mubr.bf16.mxu0 0
    %1714 = vmatmul.mubr.bf16.gmra.mxu0 %v1676
    %v1715 = vpop.f32.mrf.mxu0
    %v1716 = vadd.f32 0.0, %v1715
    %v1717 = vpop.f32.mrf.mxu0
    %v1718 = vpop.f32.mrf.mxu0
    %v1719 = vpop.f32.mrf.mxu0
    %1720 = vdwg.mxu0
    %v1721 = vadd.f32 %v1680, %v1716
    %v1722 = vld [vmem:[%s711] sm:$0xff]
    %1723 = vmatprep.subr.bf16.mxu0 0
    %1724 = vmatpush1.bf16.msra.mxu0 %v1442
    %1725 = vmatprep.subr.bf16.mxu0 0
    %1726 = vmatpush1.bf16.msra.mxu0 %v1441
    %1727 = vmatprep.subr.bf16.mxu0 0
    %1728 = vmatpush1.bf16.msra.mxu0 %v1440
    %1729 = vmatprep.subr.bf16.mxu0 0
    %1730 = vmatpush1.bf16.msra.mxu0 %v1439
    %1731 = vmatprep.subr.bf16.mxu0 0
    %1732 = vmatpush1.bf16.msra.mxu0 %v1438
    %1733 = vmatprep.subr.bf16.mxu0 0
    %1734 = vmatpush1.bf16.msra.mxu0 %v1437
    %1735 = vmatprep.subr.bf16.mxu0 0
    %1736 = vmatpush1.bf16.msra.mxu0 %v1436
    %1737 = vmatprep.subr.bf16.mxu0 0
    %1738 = vmatpush1.bf16.msra.mxu0 %v1435
    %1739 = vmatprep.subr.bf16.mxu0 0
    %1740 = vmatpush2.bf16.msra.mxu0 0
    %1741 = vmatprep.subr.bf16.mxu0 0
    %1742 = vmatpush2.bf16.msra.mxu0 0
    %1743 = vmatprep.subr.bf16.mxu0 0
    %1744 = vmatpush2.bf16.msra.mxu0 0
    %1745 = vmatprep.subr.bf16.mxu0 0
    %1746 = vmatpush2.bf16.msra.mxu0 0
    %1747 = vmatprep.subr.bf16.mxu0 0
    %1748 = vmatpush2.bf16.msra.mxu0 0
    %1749 = vmatprep.subr.bf16.mxu0 0
    %1750 = vmatpush2.bf16.msra.mxu0 0
    %1751 = vmatprep.subr.bf16.mxu0 0
    %1752 = vmatpush2.bf16.msra.mxu0 0
    %1753 = vmatprep.subr.bf16.mxu0 0
    %1754 = vmatpush2.bf16.msra.mxu0 0
    %1755 = vmatprep.mubr.bf16.mxu0 0
    %1756 = vmatmul.mubr.bf16.gmra.mxu0 %v1678
    %v1757 = vpop.f32.mrf.mxu0
    %v1758 = vadd.f32 0.0, %v1757
    %v1759 = vpop.f32.mrf.mxu0
    %v1760 = vpop.f32.mrf.mxu0
    %v1761 = vpop.f32.mrf.mxu0
    %1762 = vdwg.mxu0
    %v1763 = vadd.f32 %v1722, %v1758
    %v1764 = vtanh.pop %v1721
    %v1765 = vtanh.pop %v1763
    %v1766 = vpack.c.bf16 %v1764, %v1764
    %1767 = vst [vmem:[%s757] sm:$0xf] %v1766
    %v1768 = vpack.c.bf16 %v1765, %v1765
    %1769 = vst [vmem:[%s760] sm:$0xf] %v1768
    %v1770 = vld [vmem:[%s762] sm:$0xff]
    %1771 = vmatprep.subr.bf16.mxu0 0
    %1772 = vmatpush1.bf16.msra.mxu0 %v1442
    %1773 = vmatprep.subr.bf16.mxu0 0
    %1774 = vmatpush1.bf16.msra.mxu0 %v1441
    %1775 = vmatprep.subr.bf16.mxu0 0
    %1776 = vmatpush1.bf16.msra.mxu0 %v1440
    %1777 = vmatprep.subr.bf16.mxu0 0
    %1778 = vmatpush1.bf16.msra.mxu0 %v1439
    %1779 = vmatprep.subr.bf16.mxu0 0
    %1780 = vmatpush1.bf16.msra.mxu0 %v1438
    %1781 = vmatprep.subr.bf16.mxu0 0
    %1782 = vmatpush1.bf16.msra.mxu0 %v1437
    %1783 = vmatprep.subr.bf16.mxu0 0
    %1784 = vmatpush1.bf16.msra.mxu0 %v1436
    %1785 = vmatprep.subr.bf16.mxu0 0
    %1786 = vmatpush1.bf16.msra.mxu0 %v1435
    %1787 = vmatprep.subr.bf16.mxu0 0
    %1788 = vmatpush2.bf16.msra.mxu0 0
    %1789 = vmatprep.subr.bf16.mxu0 0
    %1790 = vmatpush2.bf16.msra.mxu0 0
    %1791 = vmatprep.subr.bf16.mxu0 0
    %1792 = vmatpush2.bf16.msra.mxu0 0
    %1793 = vmatprep.subr.bf16.mxu0 0
    %1794 = vmatpush2.bf16.msra.mxu0 0
    %1795 = vmatprep.subr.bf16.mxu0 0
    %1796 = vmatpush2.bf16.msra.mxu0 0
    %1797 = vmatprep.subr.bf16.mxu0 0
    %1798 = vmatpush2.bf16.msra.mxu0 0
    %1799 = vmatprep.subr.bf16.mxu0 0
    %1800 = vmatpush2.bf16.msra.mxu0 0
    %1801 = vmatprep.subr.bf16.mxu0 0
    %1802 = vmatpush2.bf16.msra.mxu0 0
    %1803 = vmatprep.mubr.bf16.mxu0 0
    %1804 = vmatmul.mubr.bf16.gmra.mxu0 %v1766
    %v1805 = vpop.f32.mrf.mxu0
    %v1806 = vadd.f32 0.0, %v1805
    %v1807 = vpop.f32.mrf.mxu0
    %v1808 = vpop.f32.mrf.mxu0
    %v1809 = vpop.f32.mrf.mxu0
    %1810 = vdwg.mxu0
    %v1811 = vadd.f32 %v1770, %v1806
    %v1812 = vld [vmem:[%s805] sm:$0xff]
    %1813 = vmatprep.subr.bf16.mxu0 0
    %1814 = vmatpush1.bf16.msra.mxu0 %v1442
    %1815 = vmatprep.subr.bf16.mxu0 0
    %1816 = vmatpush1.bf16.msra.mxu0 %v1441
    %1817 = vmatprep.subr.bf16.mxu0 0
    %1818 = vmatpush1.bf16.msra.mxu0 %v1440
    %1819 = vmatprep.subr.bf16.mxu0 0
    %1820 = vmatpush1.bf16.msra.mxu0 %v1439
    %1821 = vmatprep.subr.bf16.mxu0 0
    %1822 = vmatpush1.bf16.msra.mxu0 %v1438
    %1823 = vmatprep.subr.bf16.mxu0 0
    %1824 = vmatpush1.bf16.msra.mxu0 %v1437
    %1825 = vmatprep.subr.bf16.mxu0 0
    %1826 = vmatpush1.bf16.msra.mxu0 %v1436
    %1827 = vmatprep.subr.bf16.mxu0 0
    %1828 = vmatpush1.bf16.msra.mxu0 %v1435
    %1829 = vmatprep.subr.bf16.mxu0 0
    %1830 = vmatpush2.bf16.msra.mxu0 0
    %1831 = vmatprep.subr.bf16.mxu0 0
    %1832 = vmatpush2.bf16.msra.mxu0 0
    %1833 = vmatprep.subr.bf16.mxu0 0
    %1834 = vmatpush2.bf16.msra.mxu0 0
    %1835 = vmatprep.subr.bf16.mxu0 0
    %1836 = vmatpush2.bf16.msra.mxu0 0
    %1837 = vmatprep.subr.bf16.mxu0 0
    %1838 = vmatpush2.bf16.msra.mxu0 0
    %1839 = vmatprep.subr.bf16.mxu0 0
    %1840 = vmatpush2.bf16.msra.mxu0 0
    %1841 = vmatprep.subr.bf16.mxu0 0
    %1842 = vmatpush2.bf16.msra.mxu0 0
    %1843 = vmatprep.subr.bf16.mxu0 0
    %1844 = vmatpush2.bf16.msra.mxu0 0
    %1845 = vmatprep.mubr.bf16.mxu0 0
    %1846 = vmatmul.mubr.bf16.gmra.mxu0 %v1768
    %v1847 = vpop.f32.mrf.mxu0
    %v1848 = vadd.f32 0.0, %v1847
    %v1849 = vpop.f32.mrf.mxu0
    %v1850 = vpop.f32.mrf.mxu0
    %v1851 = vpop.f32.mrf.mxu0
    %1852 = vdwg.mxu0
    %v1853 = vadd.f32 %v1812, %v1848
    %v1854 = vtanh.pop %v1811
    %v1855 = vtanh.pop %v1853
    %v1856 = vpack.c.bf16 %v1854, %v1854
    %1857 = vst [vmem:[%s851] sm:$0xf] %v1856
    %v1858 = vpack.c.bf16 %v1855, %v1855
    %1859 = vst [vmem:[%s854] sm:$0xf] %v1858
    %v1860 = vld [vmem:[%s856] sm:$0xff]
    %1861 = vmatprep.subr.bf16.mxu0 0
    %1862 = vmatpush1.bf16.msra.mxu0 %v1442
    %1863 = vmatprep.subr.bf16.mxu0 0
    %1864 = vmatpush1.bf16.msra.mxu0 %v1441
    %1865 = vmatprep.subr.bf16.mxu0 0
    %1866 = vmatpush1.bf16.msra.mxu0 %v1440
    %1867 = vmatprep.subr.bf16.mxu0 0
    %1868 = vmatpush1.bf16.msra.mxu0 %v1439
    %1869 = vmatprep.subr.bf16.mxu0 0
    %1870 = vmatpush1.bf16.msra.mxu0 %v1438
    %1871 = vmatprep.subr.bf16.mxu0 0
    %1872 = vmatpush1.bf16.msra.mxu0 %v1437
    %1873 = vmatprep.subr.bf16.mxu0 0
    %1874 = vmatpush1.bf16.msra.mxu0 %v1436
    %1875 = vmatprep.subr.bf16.mxu0 0
    %1876 = vmatpush1.bf16.msra.mxu0 %v1435
    %1877 = vmatprep.subr.bf16.mxu0 0
    %1878 = vmatpush2.bf16.msra.mxu0 0
    %1879 = vmatprep.subr.bf16.mxu0 0
    %1880 = vmatpush2.bf16.msra.mxu0 0
    %1881 = vmatprep.subr.bf16.mxu0 0
    %1882 = vmatpush2.bf16.msra.mxu0 0
    %1883 = vmatprep.subr.bf16.mxu0 0
    %1884 = vmatpush2.bf16.msra.mxu0 0
    %1885 = vmatprep.subr.bf16.mxu0 0
    %1886 = vmatpush2.bf16.msra.mxu0 0
    %1887 = vmatprep.subr.bf16.mxu0 0
    %1888 = vmatpush2.bf16.msra.mxu0 0
    %1889 = vmatprep.subr.bf16.mxu0 0
    %1890 = vmatpush2.bf16.msra.mxu0 0
    %1891 = vmatprep.subr.bf16.mxu0 0
    %1892 = vmatpush2.bf16.msra.mxu0 0
    %1893 = vmatprep.mubr.bf16.mxu0 0
    %1894 = vmatmul.mubr.bf16.gmra.mxu0 %v1856
    %v1895 = vpop.f32.mrf.mxu0
    %v1896 = vadd.f32 0.0, %v1895
    %v1897 = vpop.f32.mrf.mxu0
    %v1898 = vpop.f32.mrf.mxu0
    %v1899 = vpop.f32.mrf.mxu0
    %1900 = vdwg.mxu0
    %v1901 = vadd.f32 %v1860, %v1896
    %v1902 = vld [vmem:[%s899] sm:$0xff]
    %1903 = vmatprep.subr.bf16.mxu0 0
    %1904 = vmatpush1.bf16.msra.mxu0 %v1442
    %1905 = vmatprep.subr.bf16.mxu0 0
    %1906 = vmatpush1.bf16.msra.mxu0 %v1441
    %1907 = vmatprep.subr.bf16.mxu0 0
    %1908 = vmatpush1.bf16.msra.mxu0 %v1440
    %1909 = vmatprep.subr.bf16.mxu0 0
    %1910 = vmatpush1.bf16.msra.mxu0 %v1439
    %1911 = vmatprep.subr.bf16.mxu0 0
    %1912 = vmatpush1.bf16.msra.mxu0 %v1438
    %1913 = vmatprep.subr.bf16.mxu0 0
    %1914 = vmatpush1.bf16.msra.mxu0 %v1437
    %1915 = vmatprep.subr.bf16.mxu0 0
    %1916 = vmatpush1.bf16.msra.mxu0 %v1436
    %1917 = vmatprep.subr.bf16.mxu0 0
    %1918 = vmatpush1.bf16.msra.mxu0 %v1435
    %1919 = vmatprep.subr.bf16.mxu0 0
    %1920 = vmatpush2.bf16.msra.mxu0 0
    %1921 = vmatprep.subr.bf16.mxu0 0
    %1922 = vmatpush2.bf16.msra.mxu0 0
    %1923 = vmatprep.subr.bf16.mxu0 0
    %1924 = vmatpush2.bf16.msra.mxu0 0
    %1925 = vmatprep.subr.bf16.mxu0 0
    %1926 = vmatpush2.bf16.msra.mxu0 0
    %1927 = vmatprep.subr.bf16.mxu0 0
    %1928 = vmatpush2.bf16.msra.mxu0 0
    %1929 = vmatprep.subr.bf16.mxu0 0
    %1930 = vmatpush2.bf16.msra.mxu0 0
    %1931 = vmatprep.subr.bf16.mxu0 0
    %1932 = vmatpush2.bf16.msra.mxu0 0
    %1933 = vmatprep.subr.bf16.mxu0 0
    %1934 = vmatpush2.bf16.msra.mxu0 0
    %1935 = vmatprep.mubr.bf16.mxu0 0
    %1936 = vmatmul.mubr.bf16.gmra.mxu0 %v1858
    %v1937 = vpop.f32.mrf.mxu0
    %v1938 = vadd.f32 0.0, %v1937
    %v1939 = vpop.f32.mrf.mxu0
    %v1940 = vpop.f32.mrf.mxu0
    %v1941 = vpop.f32.mrf.mxu0
    %1942 = vdwg.mxu0
    %v1943 = vadd.f32 %v1902, %v1938
    %v1944 = vtanh.pop %v1901
    %v1945 = vtanh.pop %v1943
    %v1946 = vpack.c.bf16 %v1944, %v1944
    %1947 = vst [vmem:[%s945] sm:$0xf] %v1946
    %v1948 = vpack.c.bf16 %v1945, %v1945
    %1949 = vst [vmem:[%s948] sm:$0xf] %v1948
    %v1950 = vld [vmem:[%s950] sm:$0xff]
    %1951 = vmatprep.subr.bf16.mxu0 0
    %1952 = vmatpush1.bf16.msra.mxu0 %v1442
    %1953 = vmatprep.subr.bf16.mxu0 0
    %1954 = vmatpush1.bf16.msra.mxu0 %v1441
    %1955 = vmatprep.subr.bf16.mxu0 0
    %1956 = vmatpush1.bf16.msra.mxu0 %v1440
    %1957 = vmatprep.subr.bf16.mxu0 0
    %1958 = vmatpush1.bf16.msra.mxu0 %v1439
    %1959 = vmatprep.subr.bf16.mxu0 0
    %1960 = vmatpush1.bf16.msra.mxu0 %v1438
    %1961 = vmatprep.subr.bf16.mxu0 0
    %1962 = vmatpush1.bf16.msra.mxu0 %v1437
    %1963 = vmatprep.subr.bf16.mxu0 0
    %1964 = vmatpush1.bf16.msra.mxu0 %v1436
    %1965 = vmatprep.subr.bf16.mxu0 0
    %1966 = vmatpush1.bf16.msra.mxu0 %v1435
    %1967 = vmatprep.subr.bf16.mxu0 0
    %1968 = vmatpush2.bf16.msra.mxu0 0
    %1969 = vmatprep.subr.bf16.mxu0 0
    %1970 = vmatpush2.bf16.msra.mxu0 0
    %1971 = vmatprep.subr.bf16.mxu0 0
    %1972 = vmatpush2.bf16.msra.mxu0 0
    %1973 = vmatprep.subr.bf16.mxu0 0
    %1974 = vmatpush2.bf16.msra.mxu0 0
    %1975 = vmatprep.subr.bf16.mxu0 0
    %1976 = vmatpush2.bf16.msra.mxu0 0
    %1977 = vmatprep.subr.bf16.mxu0 0
    %1978 = vmatpush2.bf16.msra.mxu0 0
    %1979 = vmatprep.subr.bf16.mxu0 0
    %1980 = vmatpush2.bf16.msra.mxu0 0
    %1981 = vmatprep.subr.bf16.mxu0 0
    %1982 = vmatpush2.bf16.msra.mxu0 0
    %1983 = vmatprep.mubr.bf16.mxu0 0
    %1984 = vmatmul.mubr.bf16.gmra.mxu0 %v1946
    %v1985 = vpop.f32.mrf.mxu0
    %v1986 = vadd.f32 0.0, %v1985
    %v1987 = vpop.f32.mrf.mxu0
    %v1988 = vpop.f32.mrf.mxu0
    %v1989 = vpop.f32.mrf.mxu0
    %1990 = vdwg.mxu0
    %v1991 = vadd.f32 %v1950, %v1986
    %v1992 = vld [vmem:[%s993] sm:$0xff]
    %1993 = vmatprep.subr.bf16.mxu0 0
    %1994 = vmatpush1.bf16.msra.mxu0 %v1442
    %1995 = vmatprep.subr.bf16.mxu0 0
    %1996 = vmatpush1.bf16.msra.mxu0 %v1441
    %1997 = vmatprep.subr.bf16.mxu0 0
    %1998 = vmatpush1.bf16.msra.mxu0 %v1440
    %1999 = vmatprep.subr.bf16.mxu0 0
    %2000 = vmatpush1.bf16.msra.mxu0 %v1439
    %2001 = vmatprep.subr.bf16.mxu0 0
    %2002 = vmatpush1.bf16.msra.mxu0 %v1438
    %2003 = vmatprep.subr.bf16.mxu0 0
    %2004 = vmatpush1.bf16.msra.mxu0 %v1437
    %2005 = vmatprep.subr.bf16.mxu0 0
    %2006 = vmatpush1.bf16.msra.mxu0 %v1436
    %2007 = vmatprep.subr.bf16.mxu0 0
    %2008 = vmatpush1.bf16.msra.mxu0 %v1435
    %2009 = vmatprep.subr.bf16.mxu0 0
    %2010 = vmatpush2.bf16.msra.mxu0 0
    %2011 = vmatprep.subr.bf16.mxu0 0
    %2012 = vmatpush2.bf16.msra.mxu0 0
    %2013 = vmatprep.subr.bf16.mxu0 0
    %2014 = vmatpush2.bf16.msra.mxu0 0
    %2015 = vmatprep.subr.bf16.mxu0 0
    %2016 = vmatpush2.bf16.msra.mxu0 0
    %2017 = vmatprep.subr.bf16.mxu0 0
    %2018 = vmatpush2.bf16.msra.mxu0 0
    %2019 = vmatprep.subr.bf16.mxu0 0
    %2020 = vmatpush2.bf16.msra.mxu0 0
    %2021 = vmatprep.subr.bf16.mxu0 0
    %2022 = vmatpush2.bf16.msra.mxu0 0
    %2023 = vmatprep.subr.bf16.mxu0 0
    %2024 = vmatpush2.bf16.msra.mxu0 0
    %2025 = vmatprep.mubr.bf16.mxu0 0
    %2026 = vmatmul.mubr.bf16.gmra.mxu0 %v1948
    %v2027 = vpop.f32.mrf.mxu0
    %v2028 = vadd.f32 0.0, %v2027
    %v2029 = vpop.f32.mrf.mxu0
    %v2030 = vpop.f32.mrf.mxu0
    %v2031 = vpop.f32.mrf.mxu0
    %2032 = vdwg.mxu0
    %v2033 = vadd.f32 %v1992, %v2028
    %v2034 = vtanh.pop %v1991
    %v2035 = vtanh.pop %v2033
    %v2036 = vpack.c.bf16 %v2034, %v2034
    %2037 = vst [vmem:[%s1039] sm:$0xf] %v2036
    %v2038 = vpack.c.bf16 %v2035, %v2035
    %2039 = vst [vmem:[%s1042] sm:$0xf] %v2038
    %v2040 = vld [vmem:[%s1044] sm:$0xff]
    %2041 = vmatprep.subr.bf16.mxu0 0
    %2042 = vmatpush1.bf16.msra.mxu0 %v1442
    %2043 = vmatprep.subr.bf16.mxu0 0
    %2044 = vmatpush1.bf16.msra.mxu0 %v1441
    %2045 = vmatprep.subr.bf16.mxu0 0
    %2046 = vmatpush1.bf16.msra.mxu0 %v1440
    %2047 = vmatprep.subr.bf16.mxu0 0
    %2048 = vmatpush1.bf16.msra.mxu0 %v1439
    %2049 = vmatprep.subr.bf16.mxu0 0
    %2050 = vmatpush1.bf16.msra.mxu0 %v1438
    %2051 = vmatprep.subr.bf16.mxu0 0
    %2052 = vmatpush1.bf16.msra.mxu0 %v1437
    %2053 = vmatprep.subr.bf16.mxu0 0
    %2054 = vmatpush1.bf16.msra.mxu0 %v1436
    %2055 = vmatprep.subr.bf16.mxu0 0
    %2056 = vmatpush1.bf16.msra.mxu0 %v1435
    %2057 = vmatprep.subr.bf16.mxu0 0
    %2058 = vmatpush2.bf16.msra.mxu0 0
    %2059 = vmatprep.subr.bf16.mxu0 0
    %2060 = vmatpush2.bf16.msra.mxu0 0
    %2061 = vmatprep.subr.bf16.mxu0 0
    %2062 = vmatpush2.bf16.msra.mxu0 0
    %2063 = vmatprep.subr.bf16.mxu0 0
    %2064 = vmatpush2.bf16.msra.mxu0 0
    %2065 = vmatprep.subr.bf16.mxu0 0
    %2066 = vmatpush2.bf16.msra.mxu0 0
    %2067 = vmatprep.subr.bf16.mxu0 0
    %2068 = vmatpush2.bf16.msra.mxu0 0
    %2069 = vmatprep.subr.bf16.mxu0 0
    %2070 = vmatpush2.bf16.msra.mxu0 0
    %2071 = vmatprep.subr.bf16.mxu0 0
    %2072 = vmatpush2.bf16.msra.mxu0 0
    %2073 = vmatprep.mubr.bf16.mxu0 0
    %2074 = vmatmul.mubr.bf16.gmra.mxu0 %v2036
    %v2075 = vpop.f32.mrf.mxu0
    %v2076 = vadd.f32 0.0, %v2075
    %v2077 = vpop.f32.mrf.mxu0
    %v2078 = vpop.f32.mrf.mxu0
    %v2079 = vpop.f32.mrf.mxu0
    %2080 = vdwg.mxu0
    %v2081 = vadd.f32 %v2040, %v2076
    %v2082 = vld [vmem:[%s1087] sm:$0xff]
    %2083 = vmatprep.subr.bf16.mxu0 0
    %2084 = vmatpush1.bf16.msra.mxu0 %v1442
    %2085 = vmatprep.subr.bf16.mxu0 0
    %2086 = vmatpush1.bf16.msra.mxu0 %v1441
    %2087 = vmatprep.subr.bf16.mxu0 0
    %2088 = vmatpush1.bf16.msra.mxu0 %v1440
    %2089 = vmatprep.subr.bf16.mxu0 0
    %2090 = vmatpush1.bf16.msra.mxu0 %v1439
    %2091 = vmatprep.subr.bf16.mxu0 0
    %2092 = vmatpush1.bf16.msra.mxu0 %v1438
    %2093 = vmatprep.subr.bf16.mxu0 0
    %2094 = vmatpush1.bf16.msra.mxu0 %v1437
    %2095 = vmatprep.subr.bf16.mxu0 0
    %2096 = vmatpush1.bf16.msra.mxu0 %v1436
    %2097 = vmatprep.subr.bf16.mxu0 0
    %2098 = vmatpush1.bf16.msra.mxu0 %v1435
    %2099 = vmatprep.subr.bf16.mxu0 0
    %2100 = vmatpush2.bf16.msra.mxu0 0
    %2101 = vmatprep.subr.bf16.mxu0 0
    %2102 = vmatpush2.bf16.msra.mxu0 0
    %2103 = vmatprep.subr.bf16.mxu0 0
    %2104 = vmatpush2.bf16.msra.mxu0 0
    %2105 = vmatprep.subr.bf16.mxu0 0
    %2106 = vmatpush2.bf16.msra.mxu0 0
    %2107 = vmatprep.subr.bf16.mxu0 0
    %2108 = vmatpush2.bf16.msra.mxu0 0
    %2109 = vmatprep.subr.bf16.mxu0 0
    %2110 = vmatpush2.bf16.msra.mxu0 0
    %2111 = vmatprep.subr.bf16.mxu0 0
    %2112 = vmatpush2.bf16.msra.mxu0 0
    %2113 = vmatprep.subr.bf16.mxu0 0
    %2114 = vmatpush2.bf16.msra.mxu0 0
    %2115 = vmatprep.mubr.bf16.mxu0 0
    %2116 = vmatmul.mubr.bf16.gmra.mxu0 %v2038
    %v2117 = vpop.f32.mrf.mxu0
    %v2118 = vadd.f32 0.0, %v2117
    %v2119 = vpop.f32.mrf.mxu0
    %v2120 = vpop.f32.mrf.mxu0
    %v2121 = vpop.f32.mrf.mxu0
    %2122 = vdwg.mxu0
    %v2123 = vadd.f32 %v2082, %v2118
    %v2124 = vtanh.pop %v2081
    %v2125 = vtanh.pop %v2123
    %v2126 = vpack.c.bf16 %v2124, %v2124
    %2127 = vst [vmem:[%s1133] sm:$0xf] %v2126
    %v2128 = vpack.c.bf16 %v2125, %v2125
    %2129 = vst [vmem:[%s1136] sm:$0xf] %v2128
    %v2130 = vld [vmem:[#allocation3] sm:$0xf]
    %v2131 = vld [vmem:[#allocation3 + $0x4] sm:$0xf]
    %v2132 = vld [vmem:[#allocation3 + $0x8] sm:$0xf]
    %v2133 = vld [vmem:[#allocation3 + $0xc] sm:$0xf]
    %v2134 = vld [vmem:[#allocation3 + $0x10] sm:$0xf]
    %v2135 = vld [vmem:[#allocation3 + $0x14] sm:$0xf]
    %v2136 = vld [vmem:[#allocation3 + $0x18] sm:$0xf]
    %v2137 = vld [vmem:[#allocation3 + $0x1c] sm:$0xf]
    %v2138 = vld [vmem:[#allocation3 + $0x20] sm:$0xf]
    %v2139 = vld [vmem:[#allocation3 + $0x24] sm:$0xf]
    %v2140 = vld [vmem:[#allocation3 + $0x28] sm:$0xf]
    %v2141 = vld [vmem:[#allocation3 + $0x2c] sm:$0xf]
    %v2142 = vld [vmem:[#allocation3 + $0x30] sm:$0xf]
    %v2143 = vld [vmem:[#allocation3 + $0x34] sm:$0xf]
    %v2144 = vld [vmem:[#allocation3 + $0x38] sm:$0xf]
    %v2145 = vld [vmem:[#allocation3 + $0x3c] sm:$0xf]
    %v2146 = vld [vmem:[#allocation13] sm:$0xf]
    %v2147 = vld [vmem:[#allocation13 + $0x4] sm:$0xf]
    %v2148 = vld [vmem:[#allocation13 + $0x8] sm:$0xf]
    %v2149 = vld [vmem:[#allocation13 + $0xc] sm:$0xf]
    %v2150 = vld [vmem:[#allocation13 + $0x10] sm:$0xf]
    %v2151 = vld [vmem:[#allocation13 + $0x14] sm:$0xf]
    %v2152 = vld [vmem:[#allocation13 + $0x18] sm:$0xf]
    %v2153 = vld [vmem:[#allocation13 + $0x1c] sm:$0xf]
    %v2154 = vld [vmem:[#allocation13 + $0x20] sm:$0xf]
    %v2155 = vld [vmem:[#allocation13 + $0x24] sm:$0xf]
    %v2156 = vld [vmem:[#allocation13 + $0x28] sm:$0xf]
    %v2157 = vld [vmem:[#allocation13 + $0x2c] sm:$0xf]
    %v2158 = vld [vmem:[#allocation13 + $0x30] sm:$0xf]
    %v2159 = vld [vmem:[#allocation13 + $0x34] sm:$0xf]
    %v2160 = vld [vmem:[#allocation13 + $0x38] sm:$0xf]
    %v2161 = vld [vmem:[#allocation13 + $0x3c] sm:$0xf]
    %v2162 = vld [vmem:[%s8] sm:$0x1]
    %v2164 = vlaneseq
    %v2165 = vshrl.u32 %v2164, 7
    %v2166 = vsub.s32 0, %v2165
    %v2167 = vrot.slane %v2162, %v2166
    %v2185 = vunpack.c.l.b16 %v2130
    %v2186 = vunpack.c.l.b16 %v2131
    %v2187 = vunpack.c.l.b16 %v2132
    %v2188 = vunpack.c.l.b16 %v2133
    %v2189 = vunpack.c.l.b16 %v2134
    %v2190 = vunpack.c.l.b16 %v2135
    %v2191 = vunpack.c.l.b16 %v2136
    %v2192 = vunpack.c.l.b16 %v2137
    %v2193 = vunpack.c.l.b16 %v2138
    %v2194 = vunpack.c.l.b16 %v2139
    %v2195 = vunpack.c.l.b16 %v2140
    %v2196 = vunpack.c.l.b16 %v2141
    %v2197 = vunpack.c.l.b16 %v2142
    %v2198 = vunpack.c.l.b16 %v2143
    %v2199 = vunpack.c.l.b16 %v2144
    %v2200 = vunpack.c.l.b16 %v2145
    %v2201 = vpack.c.b16 %v2186, %v2185
    %v2202 = vpack.c.b16 %v2188, %v2187
    %v2203 = vpack.c.b16 %v2190, %v2189
    %v2204 = vpack.c.b16 %v2192, %v2191
    %v2205 = vpack.c.b16 %v2194, %v2193
    %v2206 = vpack.c.b16 %v2196, %v2195
    %v2207 = vpack.c.b16 %v2198, %v2197
    %v2208 = vpack.c.b16 %v2200, %v2199
    %v2233 = vunpack.c.l.b16 %v2146
    %v2234 = vunpack.c.l.b16 %v2147
    %v2235 = vunpack.c.l.b16 %v2148
    %v2236 = vunpack.c.l.b16 %v2149
    %v2237 = vunpack.c.l.b16 %v2150
    %v2238 = vunpack.c.l.b16 %v2151
    %v2239 = vunpack.c.l.b16 %v2152
    %v2240 = vunpack.c.l.b16 %v2153
    %v2241 = vunpack.c.l.b16 %v2154
    %v2242 = vunpack.c.l.b16 %v2155
    %v2243 = vunpack.c.l.b16 %v2156
    %v2244 = vunpack.c.l.b16 %v2157
    %v2245 = vunpack.c.l.b16 %v2158
    %v2246 = vunpack.c.l.b16 %v2159
    %v2247 = vunpack.c.l.b16 %v2160
    %v2248 = vunpack.c.l.b16 %v2161
    %v2249 = vpack.c.b16 %v2234, %v2233
    %v2250 = vpack.c.b16 %v2236, %v2235
    %v2251 = vpack.c.b16 %v2238, %v2237
    %v2252 = vpack.c.b16 %v2240, %v2239
    %v2253 = vpack.c.b16 %v2242, %v2241
    %v2254 = vpack.c.b16 %v2244, %v2243
    %v2255 = vpack.c.b16 %v2246, %v2245
    %v2256 = vpack.c.b16 %v2248, %v2247
    %2265 = vmatprep.subr.bf16.mxu0 0
    %2266 = vmatpush1.bf16.msra.mxu0 %v2256
    %2267 = vmatprep.subr.bf16.mxu0 0
    %2268 = vmatpush1.bf16.msra.mxu0 %v2255
    %2269 = vmatprep.subr.bf16.mxu0 0
    %2270 = vmatpush1.bf16.msra.mxu0 %v2254
    %2271 = vmatprep.subr.bf16.mxu0 0
    %2272 = vmatpush1.bf16.msra.mxu0 %v2253
    %2273 = vmatprep.subr.bf16.mxu0 0
    %2274 = vmatpush1.bf16.msra.mxu0 %v2252
    %2275 = vmatprep.subr.bf16.mxu0 0
    %2276 = vmatpush1.bf16.msra.mxu0 %v2251
    %2277 = vmatprep.subr.bf16.mxu0 0
    %2278 = vmatpush1.bf16.msra.mxu0 %v2250
    %2279 = vmatprep.subr.bf16.mxu0 0
    %2280 = vmatpush1.bf16.msra.mxu0 %v2249
    %2281 = vmatprep.subr.bf16.mxu0 0
    %2282 = vmatpush2.bf16.msra.mxu0 0
    %2283 = vmatprep.subr.bf16.mxu0 0
    %2284 = vmatpush2.bf16.msra.mxu0 0
    %2285 = vmatprep.subr.bf16.mxu0 0
    %2286 = vmatpush2.bf16.msra.mxu0 0
    %2287 = vmatprep.subr.bf16.mxu0 0
    %2288 = vmatpush2.bf16.msra.mxu0 0
    %2289 = vmatprep.subr.bf16.mxu0 0
    %2290 = vmatpush2.bf16.msra.mxu0 0
    %2291 = vmatprep.subr.bf16.mxu0 0
    %2292 = vmatpush2.bf16.msra.mxu0 0
    %2293 = vmatprep.subr.bf16.mxu0 0
    %2294 = vmatpush2.bf16.msra.mxu0 0
    %2295 = vmatprep.subr.bf16.mxu0 0
    %2296 = vmatpush2.bf16.msra.mxu0 0
    %2297 = vmatprep.mubr.bf16.mxu0 0
    %2298 = vmatmul.mubr.bf16.gmra.mxu0 %v2201
    %v2299 = vpop.f32.mrf.mxu0
    %v2300 = vadd.f32 %v2167, %v2299
    %v2301 = vpop.f32.mrf.mxu0
    %v2302 = vpop.f32.mrf.mxu0
    %v2303 = vadd.f32 %v2167, %v2302
    %v2304 = vpop.f32.mrf.mxu0
    %2305 = vmatprep.mubr.bf16.mxu0 0
    %2306 = vmatmul.mubr.bf16.gmra.mxu0 %v2202
    %v2307 = vpop.f32.mrf.mxu0
    %v2308 = vadd.f32 %v2167, %v2307
    %v2309 = vpop.f32.mrf.mxu0
    %v2310 = vpop.f32.mrf.mxu0
    %v2311 = vadd.f32 %v2167, %v2310
    %v2312 = vpop.f32.mrf.mxu0
    %2313 = vmatprep.mubr.bf16.mxu0 0
    %2314 = vmatmul.mubr.bf16.gmra.mxu0 %v2203
    %v2315 = vpop.f32.mrf.mxu0
    %v2316 = vadd.f32 %v2167, %v2315
    %v2317 = vpop.f32.mrf.mxu0
    %v2318 = vpop.f32.mrf.mxu0
    %v2319 = vadd.f32 %v2167, %v2318
    %v2320 = vpop.f32.mrf.mxu0
    %2321 = vmatprep.mubr.bf16.mxu0 0
    %2322 = vmatmul.mubr.bf16.gmra.mxu0 %v2204
    %v2323 = vpop.f32.mrf.mxu0
    %v2324 = vadd.f32 %v2167, %v2323
    %v2325 = vpop.f32.mrf.mxu0
    %v2326 = vpop.f32.mrf.mxu0
    %v2327 = vadd.f32 %v2167, %v2326
    %v2328 = vpop.f32.mrf.mxu0
    %2329 = vmatprep.mubr.bf16.mxu0 0
    %2330 = vmatmul.mubr.bf16.gmra.mxu0 %v2205
    %v2331 = vpop.f32.mrf.mxu0
    %v2332 = vadd.f32 %v2167, %v2331
    %v2333 = vpop.f32.mrf.mxu0
    %v2334 = vpop.f32.mrf.mxu0
    %v2335 = vadd.f32 %v2167, %v2334
    %v2336 = vpop.f32.mrf.mxu0
    %2337 = vmatprep.mubr.bf16.mxu0 0
    %2338 = vmatmul.mubr.bf16.gmra.mxu0 %v2206
    %v2339 = vpop.f32.mrf.mxu0
    %v2340 = vadd.f32 %v2167, %v2339
    %v2341 = vpop.f32.mrf.mxu0
    %v2342 = vpop.f32.mrf.mxu0
    %v2343 = vadd.f32 %v2167, %v2342
    %v2344 = vpop.f32.mrf.mxu0
    %2345 = vmatprep.mubr.bf16.mxu0 0
    %2346 = vmatmul.mubr.bf16.gmra.mxu0 %v2207
    %v2347 = vpop.f32.mrf.mxu0
    %v2348 = vadd.f32 %v2167, %v2347
    %v2349 = vpop.f32.mrf.mxu0
    %v2350 = vpop.f32.mrf.mxu0
    %v2351 = vadd.f32 %v2167, %v2350
    %v2352 = vpop.f32.mrf.mxu0
    %2353 = vmatprep.mubr.bf16.mxu0 0
    %2354 = vmatmul.mubr.bf16.gmra.mxu0 %v2208
    %v2355 = vpop.f32.mrf.mxu0
    %v2356 = vadd.f32 %v2167, %v2355
    %v2357 = vpop.f32.mrf.mxu0
    %v2358 = vpop.f32.mrf.mxu0
    %v2359 = vadd.f32 %v2167, %v2358
    %v2360 = vpop.f32.mrf.mxu0
    %2361 = vdwg.mxu0
    %2362 = vst [vmem:[#allocation15] sm:$0xff] %v2300
    %2363 = vst [vmem:[#allocation15 + $0x8] sm:$0xff] %v2303
    %2364 = vst [vmem:[#allocation15 + $0x10] sm:$0xff] %v2308
    %2365 = vst [vmem:[#allocation15 + $0x18] sm:$0xff] %v2311
    %2366 = vst [vmem:[#allocation15 + $0x20] sm:$0xff] %v2316
    %2367 = vst [vmem:[#allocation15 + $0x28] sm:$0xff] %v2319
    %2368 = vst [vmem:[#allocation15 + $0x30] sm:$0xff] %v2324
    %2369 = vst [vmem:[#allocation15 + $0x38] sm:$0xff] %v2327
    %2370 = vst [vmem:[#allocation15 + $0x40] sm:$0xff] %v2332
    %2371 = vst [vmem:[#allocation15 + $0x48] sm:$0xff] %v2335
    %2372 = vst [vmem:[#allocation15 + $0x50] sm:$0xff] %v2340
    %2373 = vst [vmem:[#allocation15 + $0x58] sm:$0xff] %v2343
    %2374 = vst [vmem:[#allocation15 + $0x60] sm:$0xff] %v2348
    %2375 = vst [vmem:[#allocation15 + $0x68] sm:$0xff] %v2351
    %2376 = vst [vmem:[#allocation15 + $0x70] sm:$0xff] %v2356
    %2377 = vst [vmem:[#allocation15 + $0x78] sm:$0xff] %v2359
    // Predicated region
    $region62: #{tpu_custom_call.1} parent=1 // pred_check
      _
    $region63: #{tpu_custom_call.1} parent=1 // pred_check_branch
      %2379 = sbr.rel (0) target = $region65
    $region64: #{tpu_custom_call.1} parent=1 // pred_region
      %s2381 = ssub.s32 2048, 2048
      %2382 = vsyncadd [#allocation6], %s2381
      %s2383 = sshll.u32 [#allocation15], 4
      %s2384 = int_to_ptr.vmem [resolvable:$true] %s2383
      %2389 = dma.vmem_to_hbm [thread:$0]  %s2384, 2048, %s9, [#allocation6], 128, 128, 8
    $region65: #{tpu_custom_call.1} parent=1 // pred_fallthru
      _
    // Predicated region
    $region66: #{tpu_custom_call.1} parent=1 // pred_check
      _
    $region67: #{tpu_custom_call.1} parent=1 // pred_check_branch
      %2391 = sbr.rel (0) target = $region69
    $region68: #{tpu_custom_call.1} parent=1 // pred_region
      %2392 = dma.done [#allocation6], 2048
    $region69: #{tpu_custom_call.1} parent=1 // pred_fallthru
      _
    %2393 = vsyncpa [#allocation5], 1
    %2394 = vsyncpa [#allocation8], 1
    %2395 = vsyncpa [#allocation11], 1
    %2396 = vsyncpa [#allocation14], 1
    %2397 = vsyncpa [#allocation6], 1

</llo_original>
